<compile_context>
chip_gen: v5e
topology: v5e:2x2
jax: 0.10.0
libtpu: 0.0.40
codegen_flags: <defaults>
</compile_context>

<pallas_src>
import functools

import jax
import jax.numpy as jnp
from jax import lax
from jax.experimental import pallas as pl
from jax.experimental.pallas import tpu as pltpu

LANES = 128   # TPU lane width: every channel dim is zero-padded to this.
S2D = 4       # conv1 stride -> space-to-depth block size.


def _pad_axis(a, axis, target):
    pad = [(0, 0)] * a.ndim
    pad[axis] = (0, target - a.shape[axis])
    return jnp.pad(a, pad)


# ---------------------------------------------------------------------------
# Fused kernel: conv1 -> conv2 -> conv3 -> fc1 -> fc2, single grid point.
#
# Activation layout (2D, MXU friendly): rows = (spatial..., batch) with batch
# innermost, lanes = channels zero-padded to 128.  Each conv is computed as
# one jnp.dot per kernel tap over a contiguous row window of the input rows;
# window rows whose column index would wrap belong to unused output positions
# and are simply never extracted (cheap junk rows instead of gathers).
# ---------------------------------------------------------------------------
def _qnet_kernel(x_ref, w1_ref, b1_ref, w2_ref, b2_ref, w3_ref, b3_ref,
                 fw1_ref, fb1_ref, fw2_ref, fb2_ref,
                 o_ref, a1_ref, a2_ref,
                 *, batch, grid_w, oh1, ow1, oh2, ow2):
    f32 = jnp.float32
    bf16 = jnp.bfloat16
    B = batch

    # ---- conv1: k=8, s=4, expressed as a 2x2-tap stride-1 conv on the
    # space-to-depth(4) input.  x rows ordered (P, Q, b); lanes = 4*4*Cin.
    r1 = ((oh1 - 1) * grid_w + ow1) * B
    acc1 = jnp.zeros((r1, LANES), f32)
    for ti in range(2):
        for tj in range(2):
            lhs = x_ref[pl.ds((ti * grid_w + tj) * B, r1), :]
            acc1 = acc1 + jnp.dot(lhs, w1_ref[ti * 2 + tj],
                                  preferred_element_type=f32)
    for oh in range(oh1):                      # drop the wrapped junk column
        start = oh * grid_w * B
        blk = acc1[start:start + ow1 * B, :]
        a1_ref[pl.ds(oh * ow1 * B, ow1 * B), :] = (
            jnp.maximum(blk + b1_ref[...], 0.0).astype(bf16))

    # ---- conv2: k=4, s=2 on the (oh1, ow1) map.  Window covers all stride-1
    # positions; valid stride-2 outputs are extracted afterwards.
    r2 = (2 * (oh2 - 1) * ow1 + 2 * (ow2 - 1) + 1) * B
    acc2 = jnp.zeros((r2, LANES), f32)
    for i in range(4):
        for j in range(4):
            lhs = a1_ref[pl.ds((i * ow1 + j) * B, r2), :]
            acc2 = acc2 + jnp.dot(lhs, w2_ref[i * 4 + j],
                                  preferred_element_type=f32)
    for oi in range(oh2):
        for oj in range(ow2):
            start = (2 * oi * ow1 + 2 * oj) * B
            blk = acc2[start:start + B, :]
            a2_ref[pl.ds((oi * ow2 + oj) * B, B), :] = (
                jnp.maximum(blk + b2_ref[...], 0.0).astype(bf16))

    # ---- conv3: k=3, s=1, output 1x1 -> plain tap accumulation.
    acc3 = jnp.zeros((B, LANES), f32)
    for i in range(3):
        for j in range(3):
            acc3 = acc3 + jnp.dot(a2_ref[pl.ds((i * ow2 + j) * B, B), :],
                                  w3_ref[i * 3 + j],
                                  preferred_element_type=f32)
    a3 = jnp.maximum(acc3 + b3_ref[...], 0.0)            # (B, 128) f32

    # ---- fc1 + ReLU (features = conv3 channels; conv3 output is 1x1) ----
    h = jnp.dot(a3.astype(bf16), fw1_ref[...], preferred_element_type=f32)
    h = jnp.maximum(h + fb1_ref[...], 0.0)               # (B, 512) f32

    # ---- fc2 (output lanes padded to 128; caller slices [:, :output_dim]) --
    q = jnp.dot(h.astype(bf16), fw2_ref[...], preferred_element_type=f32)
    o_ref[...] = q + fb2_ref[...]


# ---------------------------------------------------------------------------
# Parameter init (deterministic synthetic weights, PyTorch layouts transposed
# to (kh, kw, Cin, Cout) / (in, out)).
# ---------------------------------------------------------------------------
def init_params(key, input_channels, output_dim, feature_size=64):
    ks = jax.random.split(key, 10)

    def w(k, shape, fan_in):
        return jax.random.normal(k, shape, jnp.float32) / jnp.sqrt(fan_in)

    return {
        "conv1_w": w(ks[0], (8, 8, input_channels, 32), 8 * 8 * input_channels),
        "conv1_b": w(ks[1], (32,), 8 * 8 * input_channels),
        "conv2_w": w(ks[2], (4, 4, 32, 64), 4 * 4 * 32),
        "conv2_b": w(ks[3], (64,), 4 * 4 * 32),
        "conv3_w": w(ks[4], (3, 3, 64, 64), 3 * 3 * 64),
        "conv3_b": w(ks[5], (64,), 3 * 3 * 64),
        "fc1_w": w(ks[6], (feature_size, 512), feature_size),
        "fc1_b": w(ks[7], (512,), feature_size),
        "fc2_w": w(ks[8], (512, output_dim), 512),
        "fc2_b": w(ks[9], (output_dim,), 512),
    }


def prepare_params(params):
    """One-time packing: fold layout, 128-lane padding and bf16 casts out of
    the hot path (feedback: no per-call reshape/cast XLA ops)."""
    f32, bf16 = jnp.float32, jnp.bfloat16

    # conv1: (8, 8, cin, 32) -> 2x2 space-to-depth taps of shape (16*cin, 128)
    w1 = params["conv1_w"].astype(f32)
    cin, c1 = w1.shape[2], w1.shape[3]
    w1t = w1.reshape(2, S2D, 2, S2D, cin, c1).transpose(0, 2, 1, 3, 4, 5)
    w1t = w1t.reshape(4, S2D * S2D * cin, c1)
    w1t = _pad_axis(w1t, 2, LANES).astype(bf16)                  # (4, 64, 128)

    # conv2: (4, 4, 32, 64) -> 16 taps of (128, 128); K rows beyond 32 are
    # zero so the zero-padded conv1 channels contribute nothing.
    w2 = params["conv2_w"].astype(f32)
    w2t = w2.reshape(16, w2.shape[2], w2.shape[3])
    w2t = _pad_axis(_pad_axis(w2t, 1, LANES), 2, LANES).astype(bf16)

    # conv3: (3, 3, 64, 64) -> 9 taps of (128, 128)
    w3 = params["conv3_w"].astype(f32)
    w3t = w3.reshape(9, w3.shape[2], w3.shape[3])
    w3t = _pad_axis(_pad_axis(w3t, 1, LANES), 2, LANES).astype(bf16)

    # fc1 rows are indexed by conv3 channel (conv3 output is 1x1 spatial, so
    # PyTorch's NCHW flatten is a numerical no-op here).
    # TODO(synk): for inputs whose conv3 output is larger than 1x1, fold the
    # NCHW flatten permutation into the fc1_w row order here.
    assert params["fc1_w"].shape[0] == params["conv3_w"].shape[3]
    fw1 = _pad_axis(params["fc1_w"].astype(f32), 0, LANES).astype(bf16)
    fw2 = _pad_axis(params["fc2_w"].astype(f32), 1, LANES).astype(bf16)

    def bias_pad(b):
        return _pad_axis(b.astype(f32).reshape(1, -1), 1, LANES)

    return {
        "w1": w1t, "b1": bias_pad(params["conv1_b"]),
        "w2": w2t, "b2": bias_pad(params["conv2_b"]),
        "w3": w3t, "b3": bias_pad(params["conv3_b"]),
        "fw1": fw1, "fb1": params["fc1_b"].astype(f32).reshape(1, -1),
        "fw2": fw2, "fb2": bias_pad(params["fc2_b"]),
    }


def _space_to_depth_rows(x_nchw):
    """NCHW -> 2D (H/4 * W/4 * B, 16*C) bf16.  Rows ordered (P, Q, b), lanes
    ordered (p, q, c) to match the conv1 tap weights.  Same total size as the
    input (no im2col duplication); done once per forward, outside the kernel."""
    B, C, H, W = x_nchw.shape
    gh, gw = H // S2D, W // S2D
    x = jnp.transpose(x_nchw, (2, 3, 0, 1))                  # (H, W, B, C)
    x = x.reshape(gh, S2D, gw, S2D, B, C)
    x = x.transpose(0, 2, 4, 1, 3, 5)                        # (P, Q, b, p, q, c)
    return x.reshape(gh * gw * B, S2D * S2D * C).astype(jnp.bfloat16)


def qnetwork_forward(prepped, x_nchw, output_dim):
    """Full QNetwork forward as a single fused Pallas kernel call."""
    B, C, H, W = x_nchw.shape
    assert H % S2D == 0 and W % S2D == 0, "input spatial must be a multiple of 4"
    oh1, ow1 = (H - 8) // 4 + 1, (W - 8) // 4 + 1
    oh2, ow2 = (oh1 - 4) // 2 + 1, (ow1 - 4) // 2 + 1
    assert oh2 - 2 == 1 and ow2 - 2 == 1, "fc head packing assumes 1x1 conv3 out"

    x2d = _space_to_depth_rows(x_nchw)

    kernel = functools.partial(
        _qnet_kernel, batch=B, grid_w=W // S2D,
        oh1=oh1, ow1=ow1, oh2=oh2, ow2=ow2)

    vmem = pl.BlockSpec(memory_space=pltpu.MemorySpace.VMEM)
    # Single grid point: weights + activations (~1.5 MB) fit trivially in VMEM.
    # TODO(synk): for large batches / 84x84 Atari frames, grid over the
    # (B*OH*OW) row dim with "parallel" dimension_semantics instead of keeping
    # everything resident (v7x has only 64 MiB VMEM and 2 TensorCores).
    out = pl.pallas_call(
        kernel,
        out_shape=jax.ShapeDtypeStruct((B, LANES), jnp.float32),
        in_specs=[vmem] * 11,
        out_specs=vmem,
        scratch_shapes=[
            pltpu.VMEM((oh1 * ow1 * B, LANES), jnp.bfloat16),   # conv1 act
            pltpu.VMEM((oh2 * ow2 * B, LANES), jnp.bfloat16),   # conv2 act
        ],
    )(x2d, prepped["w1"], prepped["b1"], prepped["w2"], prepped["b2"],
      prepped["w3"], prepped["b3"], prepped["fw1"], prepped["fb1"],
      prepped["fw2"], prepped["fb2"])
    return out[:, :output_dim]


# ---------------------------------------------------------------------------
# Plain-JAX f32 reference (conv + relu + NCHW flatten + linears), for a
# correctness check of the bf16/f32-accumulation kernel.
# ---------------------------------------------------------------------------
def reference_forward(params, x_nchw):
    x = jnp.transpose(x_nchw, (0, 2, 3, 1)).astype(jnp.float32)
    dn = ("NHWC", "HWIO", "NHWC")

    def conv(y, w, b, s):
        y = lax.conv_general_dilated(y, w, (s, s), "VALID", dimension_numbers=dn)
        return jax.nn.relu(y + b)

    x = conv(x, params["conv1_w"], params["conv1_b"], 4)
    x = conv(x, params["conv2_w"], params["conv2_b"], 2)
    x = conv(x, params["conv3_w"], params["conv3_b"], 1)
    B = x.shape[0]
    x = jnp.transpose(x, (0, 3, 1, 2)).reshape(B, -1)     # PyTorch NCHW flatten
    x = jax.nn.relu(x @ params["fc1_w"] + params["fc1_b"])
    return x @ params["fc2_w"] + params["fc2_b"]


if __name__ == "__main__":
    # Smallest spatial size the conv stack admits: 36 -> 8 -> 3 -> 1.
    B, C, H, W = 2, 4, 36, 36
    OUTPUT_DIM = 6

    key = jax.random.PRNGKey(0)
    k_params, k_x = jax.random.split(key)
    params = init_params(k_params, C, OUTPUT_DIM)
    x = jax.random.normal(k_x, (B, C, H, W), jnp.float32)

    prepped = prepare_params(params)
    forward = jax.jit(functools.partial(qnetwork_forward, output_dim=OUTPUT_DIM))
    out = forward(prepped, x)
    jax.block_until_ready(out)
    assert out.shape == (B, OUTPUT_DIM), out.shape

    # bf16-MXU / f32-accumulation kernel vs. full-f32 XLA reference.
    ref = reference_forward(params, x)
    err = float(jnp.max(jnp.abs(out - ref)))
    scale = float(jnp.max(jnp.abs(ref)))
    assert err <= 0.1 * scale + 0.05, ("numerics mismatch", err, scale)
    print("KERNEL_OK")
</pallas_src>

<mosaic_0001>
module attributes {stable_mosaic.version = 11 : i64} {
  func.func @_qnet_kernel(%arg0: memref<162x64xbf16, #tpu.memory_space<vmem>>, %arg1: memref<4x64x128xbf16, #tpu.memory_space<vmem>>, %arg2: memref<1x128xf32, #tpu.memory_space<vmem>>, %arg3: memref<16x128x128xbf16, #tpu.memory_space<vmem>>, %arg4: memref<1x128xf32, #tpu.memory_space<vmem>>, %arg5: memref<9x128x128xbf16, #tpu.memory_space<vmem>>, %arg6: memref<1x128xf32, #tpu.memory_space<vmem>>, %arg7: memref<128x512xbf16, #tpu.memory_space<vmem>>, %arg8: memref<1x512xf32, #tpu.memory_space<vmem>>, %arg9: memref<512x128xbf16, #tpu.memory_space<vmem>>, %arg10: memref<1x128xf32, #tpu.memory_space<vmem>>, %arg11: memref<2x128xf32, #tpu.memory_space<vmem>>, %arg12: memref<128x128xbf16, #tpu.memory_space<vmem>>, %arg13: memref<18x128xbf16, #tpu.memory_space<vmem>>) attributes {dimension_semantics = [], scalar_prefetch = 0 : i64, scratch_operands = 2 : i64, tpu.core_type = #tpu.core_type<tc>} {
    %cst = arith.constant 0.000000e+00 : f32
    %0 = vector.broadcast %cst : f32 to vector<142x128xf32>
    %c0 = arith.constant 0 : index
    %c0_0 = arith.constant 0 : index
    %1 = vector.load %arg0[%c0, %c0_0] : memref<162x64xbf16, #tpu.memory_space<vmem>>, vector<142x64xbf16>
    %c0_1 = arith.constant 0 : index
    %c0_2 = arith.constant 0 : index
    %c0_3 = arith.constant 0 : index
    %2 = vector.load %arg1[%c0_1, %c0_2, %c0_3] : memref<4x64x128xbf16, #tpu.memory_space<vmem>>, vector<1x64x128xbf16>
    %3 = vector.shape_cast %2 : vector<1x64x128xbf16> to vector<64x128xbf16>
    %cst_4 = arith.constant dense<0.000000e+00> : vector<142x128xf32>
    %4 = tpu.matmul %1, %3, %cst_4 {dimension_numbers = #tpu.dot_dimension_numbers<[1], [0], [0], [1], [0, 0, 1, 1], [], []>} : vector<142x64xbf16>, vector<64x128xbf16>, vector<142x128xf32> -> vector<142x128xf32>
    %5 = arith.addf %0, %4 : vector<142x128xf32>
    %c2 = arith.constant 2 : index
    %c0_5 = arith.constant 0 : index
    %6 = vector.load %arg0[%c2, %c0_5] : memref<162x64xbf16, #tpu.memory_space<vmem>>, vector<142x64xbf16>
    %c1 = arith.constant 1 : index
    %c0_6 = arith.constant 0 : index
    %c0_7 = arith.constant 0 : index
    %7 = vector.load %arg1[%c1, %c0_6, %c0_7] : memref<4x64x128xbf16, #tpu.memory_space<vmem>>, vector<1x64x128xbf16>
    %8 = vector.shape_cast %7 : vector<1x64x128xbf16> to vector<64x128xbf16>
    %cst_8 = arith.constant dense<0.000000e+00> : vector<142x128xf32>
    %9 = tpu.matmul %6, %8, %cst_8 {dimension_numbers = #tpu.dot_dimension_numbers<[1], [0], [0], [1], [0, 0, 1, 1], [], []>} : vector<142x64xbf16>, vector<64x128xbf16>, vector<142x128xf32> -> vector<142x128xf32>
    %10 = arith.addf %5, %9 : vector<142x128xf32>
    %c18 = arith.constant 18 : index
    %c0_9 = arith.constant 0 : index
    %11 = vector.load %arg0[%c18, %c0_9] : memref<162x64xbf16, #tpu.memory_space<vmem>>, vector<142x64xbf16>
    %c2_10 = arith.constant 2 : index
    %c0_11 = arith.constant 0 : index
    %c0_12 = arith.constant 0 : index
    %12 = vector.load %arg1[%c2_10, %c0_11, %c0_12] : memref<4x64x128xbf16, #tpu.memory_space<vmem>>, vector<1x64x128xbf16>
    %13 = vector.shape_cast %12 : vector<1x64x128xbf16> to vector<64x128xbf16>
    %cst_13 = arith.constant dense<0.000000e+00> : vector<142x128xf32>
    %14 = tpu.matmul %11, %13, %cst_13 {dimension_numbers = #tpu.dot_dimension_numbers<[1], [0], [0], [1], [0, 0, 1, 1], [], []>} : vector<142x64xbf16>, vector<64x128xbf16>, vector<142x128xf32> -> vector<142x128xf32>
    %15 = arith.addf %10, %14 : vector<142x128xf32>
    %c20 = arith.constant 20 : index
    %c0_14 = arith.constant 0 : index
    %16 = vector.load %arg0[%c20, %c0_14] : memref<162x64xbf16, #tpu.memory_space<vmem>>, vector<142x64xbf16>
    %c3 = arith.constant 3 : index
    %c0_15 = arith.constant 0 : index
    %c0_16 = arith.constant 0 : index
    %17 = vector.load %arg1[%c3, %c0_15, %c0_16] : memref<4x64x128xbf16, #tpu.memory_space<vmem>>, vector<1x64x128xbf16>
    %18 = vector.shape_cast %17 : vector<1x64x128xbf16> to vector<64x128xbf16>
    %cst_17 = arith.constant dense<0.000000e+00> : vector<142x128xf32>
    %19 = tpu.matmul %16, %18, %cst_17 {dimension_numbers = #tpu.dot_dimension_numbers<[1], [0], [0], [1], [0, 0, 1, 1], [], []>} : vector<142x64xbf16>, vector<64x128xbf16>, vector<142x128xf32> -> vector<142x128xf32>
    %20 = arith.addf %15, %19 : vector<142x128xf32>
    %21 = vector.extract_strided_slice %20 {offsets = [0, 0], sizes = [16, 128], strides = [1, 1]} : vector<142x128xf32> to vector<16x128xf32>
    %c0_18 = arith.constant 0 : index
    %c0_19 = arith.constant 0 : index
    %22 = vector.load %arg2[%c0_18, %c0_19] : memref<1x128xf32, #tpu.memory_space<vmem>>, vector<1x128xf32>
    %23 = vector.broadcast %22 : vector<1x128xf32> to vector<16x128xf32>
    %24 = arith.addf %21, %23 : vector<16x128xf32>
    %cst_20 = arith.constant 0.000000e+00 : f32
    %25 = vector.broadcast %cst_20 : f32 to vector<16x128xf32>
    %26 = arith.maximumf %24, %25 : vector<16x128xf32>
    %27 = arith.truncf %26 : vector<16x128xf32> to vector<16x128xbf16>
    %c0_21 = arith.constant 0 : index
    %c0_22 = arith.constant 0 : index
    %28 = vector.load %arg12[%c0_21, %c0_22] : memref<128x128xbf16, #tpu.memory_space<vmem>>, vector<16x128xbf16>
    tpu.vector_store %arg12[%c0_21, %c0_22], %27 {strides = array<i32>} : memref<128x128xbf16, #tpu.memory_space<vmem>>, vector<16x128xbf16>,
    %29 = vector.extract_strided_slice %20 {offsets = [18, 0], sizes = [16, 128], strides = [1, 1]} : vector<142x128xf32> to vector<16x128xf32>
    %c0_23 = arith.constant 0 : index
    %c0_24 = arith.constant 0 : index
    %30 = vector.load %arg2[%c0_23, %c0_24] : memref<1x128xf32, #tpu.memory_space<vmem>>, vector<1x128xf32>
    %31 = vector.broadcast %30 : vector<1x128xf32> to vector<16x128xf32>
    %32 = arith.addf %29, %31 : vector<16x128xf32>
    %cst_25 = arith.constant 0.000000e+00 : f32
    %33 = vector.broadcast %cst_25 : f32 to vector<16x128xf32>
    %34 = arith.maximumf %32, %33 : vector<16x128xf32>
    %35 = arith.truncf %34 : vector<16x128xf32> to vector<16x128xbf16>
    %c16 = arith.constant 16 : index
    %c0_26 = arith.constant 0 : index
    %36 = vector.load %arg12[%c16, %c0_26] : memref<128x128xbf16, #tpu.memory_space<vmem>>, vector<16x128xbf16>
    tpu.vector_store %arg12[%c16, %c0_26], %35 {strides = array<i32>} : memref<128x128xbf16, #tpu.memory_space<vmem>>, vector<16x128xbf16>,
    %37 = vector.extract_strided_slice %20 {offsets = [36, 0], sizes = [16, 128], strides = [1, 1]} : vector<142x128xf32> to vector<16x128xf32>
    %c0_27 = arith.constant 0 : index
    %c0_28 = arith.constant 0 : index
    %38 = vector.load %arg2[%c0_27, %c0_28] : memref<1x128xf32, #tpu.memory_space<vmem>>, vector<1x128xf32>
    %39 = vector.broadcast %38 : vector<1x128xf32> to vector<16x128xf32>
    %40 = arith.addf %37, %39 : vector<16x128xf32>
    %cst_29 = arith.constant 0.000000e+00 : f32
    %41 = vector.broadcast %cst_29 : f32 to vector<16x128xf32>
    %42 = arith.maximumf %40, %41 : vector<16x128xf32>
    %43 = arith.truncf %42 : vector<16x128xf32> to vector<16x128xbf16>
    %c32 = arith.constant 32 : index
    %c0_30 = arith.constant 0 : index
    %44 = vector.load %arg12[%c32, %c0_30] : memref<128x128xbf16, #tpu.memory_space<vmem>>, vector<16x128xbf16>
    tpu.vector_store %arg12[%c32, %c0_30], %43 {strides = array<i32>} : memref<128x128xbf16, #tpu.memory_space<vmem>>, vector<16x128xbf16>,
    %45 = vector.extract_strided_slice %20 {offsets = [54, 0], sizes = [16, 128], strides = [1, 1]} : vector<142x128xf32> to vector<16x128xf32>
    %c0_31 = arith.constant 0 : index
    %c0_32 = arith.constant 0 : index
    %46 = vector.load %arg2[%c0_31, %c0_32] : memref<1x128xf32, #tpu.memory_space<vmem>>, vector<1x128xf32>
    %47 = vector.broadcast %46 : vector<1x128xf32> to vector<16x128xf32>
    %48 = arith.addf %45, %47 : vector<16x128xf32>
    %cst_33 = arith.constant 0.000000e+00 : f32
    %49 = vector.broadcast %cst_33 : f32 to vector<16x128xf32>
    %50 = arith.maximumf %48, %49 : vector<16x128xf32>
    %51 = arith.truncf %50 : vector<16x128xf32> to vector<16x128xbf16>
    %c48 = arith.constant 48 : index
    %c0_34 = arith.constant 0 : index
    %52 = vector.load %arg12[%c48, %c0_34] : memref<128x128xbf16, #tpu.memory_space<vmem>>, vector<16x128xbf16>
    tpu.vector_store %arg12[%c48, %c0_34], %51 {strides = array<i32>} : memref<128x128xbf16, #tpu.memory_space<vmem>>, vector<16x128xbf16>,
    %53 = vector.extract_strided_slice %20 {offsets = [72, 0], sizes = [16, 128], strides = [1, 1]} : vector<142x128xf32> to vector<16x128xf32>
    %c0_35 = arith.constant 0 : index
    %c0_36 = arith.constant 0 : index
    %54 = vector.load %arg2[%c0_35, %c0_36] : memref<1x128xf32, #tpu.memory_space<vmem>>, vector<1x128xf32>
    %55 = vector.broadcast %54 : vector<1x128xf32> to vector<16x128xf32>
    %56 = arith.addf %53, %55 : vector<16x128xf32>
    %cst_37 = arith.constant 0.000000e+00 : f32
    %57 = vector.broadcast %cst_37 : f32 to vector<16x128xf32>
    %58 = arith.maximumf %56, %57 : vector<16x128xf32>
    %59 = arith.truncf %58 : vector<16x128xf32> to vector<16x128xbf16>
    %c64 = arith.constant 64 : index
    %c0_38 = arith.constant 0 : index
    %60 = vector.load %arg12[%c64, %c0_38] : memref<128x128xbf16, #tpu.memory_space<vmem>>, vector<16x128xbf16>
    tpu.vector_store %arg12[%c64, %c0_38], %59 {strides = array<i32>} : memref<128x128xbf16, #tpu.memory_space<vmem>>, vector<16x128xbf16>,
    %61 = vector.extract_strided_slice %20 {offsets = [90, 0], sizes = [16, 128], strides = [1, 1]} : vector<142x128xf32> to vector<16x128xf32>
    %c0_39 = arith.constant 0 : index
    %c0_40 = arith.constant 0 : index
    %62 = vector.load %arg2[%c0_39, %c0_40] : memref<1x128xf32, #tpu.memory_space<vmem>>, vector<1x128xf32>
    %63 = vector.broadcast %62 : vector<1x128xf32> to vector<16x128xf32>
    %64 = arith.addf %61, %63 : vector<16x128xf32>
    %cst_41 = arith.constant 0.000000e+00 : f32
    %65 = vector.broadcast %cst_41 : f32 to vector<16x128xf32>
    %66 = arith.maximumf %64, %65 : vector<16x128xf32>
    %67 = arith.truncf %66 : vector<16x128xf32> to vector<16x128xbf16>
    %c80 = arith.constant 80 : index
    %c0_42 = arith.constant 0 : index
    %68 = vector.load %arg12[%c80, %c0_42] : memref<128x128xbf16, #tpu.memory_space<vmem>>, vector<16x128xbf16>
    tpu.vector_store %arg12[%c80, %c0_42], %67 {strides = array<i32>} : memref<128x128xbf16, #tpu.memory_space<vmem>>, vector<16x128xbf16>,
    %69 = vector.extract_strided_slice %20 {offsets = [108, 0], sizes = [16, 128], strides = [1, 1]} : vector<142x128xf32> to vector<16x128xf32>
    %c0_43 = arith.constant 0 : index
    %c0_44 = arith.constant 0 : index
    %70 = vector.load %arg2[%c0_43, %c0_44] : memref<1x128xf32, #tpu.memory_space<vmem>>, vector<1x128xf32>
    %71 = vector.broadcast %70 : vector<1x128xf32> to vector<16x128xf32>
    %72 = arith.addf %69, %71 : vector<16x128xf32>
    %cst_45 = arith.constant 0.000000e+00 : f32
    %73 = vector.broadcast %cst_45 : f32 to vector<16x128xf32>
    %74 = arith.maximumf %72, %73 : vector<16x128xf32>
    %75 = arith.truncf %74 : vector<16x128xf32> to vector<16x128xbf16>
    %c96 = arith.constant 96 : index
    %c0_46 = arith.constant 0 : index
    %76 = vector.load %arg12[%c96, %c0_46] : memref<128x128xbf16, #tpu.memory_space<vmem>>, vector<16x128xbf16>
    tpu.vector_store %arg12[%c96, %c0_46], %75 {strides = array<i32>} : memref<128x128xbf16, #tpu.memory_space<vmem>>, vector<16x128xbf16>,
    %77 = vector.extract_strided_slice %20 {offsets = [126, 0], sizes = [16, 128], strides = [1, 1]} : vector<142x128xf32> to vector<16x128xf32>
    %c0_47 = arith.constant 0 : index
    %c0_48 = arith.constant 0 : index
    %78 = vector.load %arg2[%c0_47, %c0_48] : memref<1x128xf32, #tpu.memory_space<vmem>>, vector<1x128xf32>
    %79 = vector.broadcast %78 : vector<1x128xf32> to vector<16x128xf32>
    %80 = arith.addf %77, %79 : vector<16x128xf32>
    %cst_49 = arith.constant 0.000000e+00 : f32
    %81 = vector.broadcast %cst_49 : f32 to vector<16x128xf32>
    %82 = arith.maximumf %80, %81 : vector<16x128xf32>
    %83 = arith.truncf %82 : vector<16x128xf32> to vector<16x128xbf16>
    %c112 = arith.constant 112 : index
    %c0_50 = arith.constant 0 : index
    %84 = vector.load %arg12[%c112, %c0_50] : memref<128x128xbf16, #tpu.memory_space<vmem>>, vector<16x128xbf16>
    tpu.vector_store %arg12[%c112, %c0_50], %83 {strides = array<i32>} : memref<128x128xbf16, #tpu.memory_space<vmem>>, vector<16x128xbf16>,
    %cst_51 = arith.constant 0.000000e+00 : f32
    %85 = vector.broadcast %cst_51 : f32 to vector<74x128xf32>
    %c0_52 = arith.constant 0 : index
    %c0_53 = arith.constant 0 : index
    %86 = vector.load %arg12[%c0_52, %c0_53] : memref<128x128xbf16, #tpu.memory_space<vmem>>, vector<74x128xbf16>
    %c0_54 = arith.constant 0 : index
    %c0_55 = arith.constant 0 : index
    %c0_56 = arith.constant 0 : index
    %87 = vector.load %arg3[%c0_54, %c0_55, %c0_56] : memref<16x128x128xbf16, #tpu.memory_space<vmem>>, vector<1x128x128xbf16>
    %88 = vector.shape_cast %87 : vector<1x128x128xbf16> to vector<128x128xbf16>
    %cst_57 = arith.constant dense<0.000000e+00> : vector<74x128xf32>
    %89 = tpu.matmul %86, %88, %cst_57 {dimension_numbers = #tpu.dot_dimension_numbers<[1], [0], [0], [1], [0, 0, 1, 1], [], []>} : vector<74x128xbf16>, vector<128x128xbf16>, vector<74x128xf32> -> vector<74x128xf32>
    %90 = arith.addf %85, %89 : vector<74x128xf32>
    %c2_58 = arith.constant 2 : index
    %c0_59 = arith.constant 0 : index
    %91 = vector.load %arg12[%c2_58, %c0_59] : memref<128x128xbf16, #tpu.memory_space<vmem>>, vector<74x128xbf16>
    %c1_60 = arith.constant 1 : index
    %c0_61 = arith.constant 0 : index
    %c0_62 = arith.constant 0 : index
    %92 = vector.load %arg3[%c1_60, %c0_61, %c0_62] : memref<16x128x128xbf16, #tpu.memory_space<vmem>>, vector<1x128x128xbf16>
    %93 = vector.shape_cast %92 : vector<1x128x128xbf16> to vector<128x128xbf16>
    %cst_63 = arith.constant dense<0.000000e+00> : vector<74x128xf32>
    %94 = tpu.matmul %91, %93, %cst_63 {dimension_numbers = #tpu.dot_dimension_numbers<[1], [0], [0], [1], [0, 0, 1, 1], [], []>} : vector<74x128xbf16>, vector<128x128xbf16>, vector<74x128xf32> -> vector<74x128xf32>
    %95 = arith.addf %90, %94 : vector<74x128xf32>
    %c4 = arith.constant 4 : index
    %c0_64 = arith.constant 0 : index
    %96 = vector.load %arg12[%c4, %c0_64] : memref<128x128xbf16, #tpu.memory_space<vmem>>, vector<74x128xbf16>
    %c2_65 = arith.constant 2 : index
    %c0_66 = arith.constant 0 : index
    %c0_67 = arith.constant 0 : index
    %97 = vector.load %arg3[%c2_65, %c0_66, %c0_67] : memref<16x128x128xbf16, #tpu.memory_space<vmem>>, vector<1x128x128xbf16>
    %98 = vector.shape_cast %97 : vector<1x128x128xbf16> to vector<128x128xbf16>
    %cst_68 = arith.constant dense<0.000000e+00> : vector<74x128xf32>
    %99 = tpu.matmul %96, %98, %cst_68 {dimension_numbers = #tpu.dot_dimension_numbers<[1], [0], [0], [1], [0, 0, 1, 1], [], []>} : vector<74x128xbf16>, vector<128x128xbf16>, vector<74x128xf32> -> vector<74x128xf32>
    %100 = arith.addf %95, %99 : vector<74x128xf32>
    %c6 = arith.constant 6 : index
    %c0_69 = arith.constant 0 : index
    %101 = vector.load %arg12[%c6, %c0_69] : memref<128x128xbf16, #tpu.memory_space<vmem>>, vector<74x128xbf16>
    %c3_70 = arith.constant 3 : index
    %c0_71 = arith.constant 0 : index
    %c0_72 = arith.constant 0 : index
    %102 = vector.load %arg3[%c3_70, %c0_71, %c0_72] : memref<16x128x128xbf16, #tpu.memory_space<vmem>>, vector<1x128x128xbf16>
    %103 = vector.shape_cast %102 : vector<1x128x128xbf16> to vector<128x128xbf16>
    %cst_73 = arith.constant dense<0.000000e+00> : vector<74x128xf32>
    %104 = tpu.matmul %101, %103, %cst_73 {dimension_numbers = #tpu.dot_dimension_numbers<[1], [0], [0], [1], [0, 0, 1, 1], [], []>} : vector<74x128xbf16>, vector<128x128xbf16>, vector<74x128xf32> -> vector<74x128xf32>
    %105 = arith.addf %100, %104 : vector<74x128xf32>
    %c16_74 = arith.constant 16 : index
    %c0_75 = arith.constant 0 : index
    %106 = vector.load %arg12[%c16_74, %c0_75] : memref<128x128xbf16, #tpu.memory_space<vmem>>, vector<74x128xbf16>
    %c4_76 = arith.constant 4 : index
    %c0_77 = arith.constant 0 : index
    %c0_78 = arith.constant 0 : index
    %107 = vector.load %arg3[%c4_76, %c0_77, %c0_78] : memref<16x128x128xbf16, #tpu.memory_space<vmem>>, vector<1x128x128xbf16>
    %108 = vector.shape_cast %107 : vector<1x128x128xbf16> to vector<128x128xbf16>
    %cst_79 = arith.constant dense<0.000000e+00> : vector<74x128xf32>
    %109 = tpu.matmul %106, %108, %cst_79 {dimension_numbers = #tpu.dot_dimension_numbers<[1], [0], [0], [1], [0, 0, 1, 1], [], []>} : vector<74x128xbf16>, vector<128x128xbf16>, vector<74x128xf32> -> vector<74x128xf32>
    %110 = arith.addf %105, %109 : vector<74x128xf32>
    %c18_80 = arith.constant 18 : index
    %c0_81 = arith.constant 0 : index
    %111 = vector.load %arg12[%c18_80, %c0_81] : memref<128x128xbf16, #tpu.memory_space<vmem>>, vector<74x128xbf16>
    %c5 = arith.constant 5 : index
    %c0_82 = arith.constant 0 : index
    %c0_83 = arith.constant 0 : index
    %112 = vector.load %arg3[%c5, %c0_82, %c0_83] : memref<16x128x128xbf16, #tpu.memory_space<vmem>>, vector<1x128x128xbf16>
    %113 = vector.shape_cast %112 : vector<1x128x128xbf16> to vector<128x128xbf16>
    %cst_84 = arith.constant dense<0.000000e+00> : vector<74x128xf32>
    %114 = tpu.matmul %111, %113, %cst_84 {dimension_numbers = #tpu.dot_dimension_numbers<[1], [0], [0], [1], [0, 0, 1, 1], [], []>} : vector<74x128xbf16>, vector<128x128xbf16>, vector<74x128xf32> -> vector<74x128xf32>
    %115 = arith.addf %110, %114 : vector<74x128xf32>
    %c20_85 = arith.constant 20 : index
    %c0_86 = arith.constant 0 : index
    %116 = vector.load %arg12[%c20_85, %c0_86] : memref<128x128xbf16, #tpu.memory_space<vmem>>, vector<74x128xbf16>
    %c6_87 = arith.constant 6 : index
    %c0_88 = arith.constant 0 : index
    %c0_89 = arith.constant 0 : index
    %117 = vector.load %arg3[%c6_87, %c0_88, %c0_89] : memref<16x128x128xbf16, #tpu.memory_space<vmem>>, vector<1x128x128xbf16>
    %118 = vector.shape_cast %117 : vector<1x128x128xbf16> to vector<128x128xbf16>
    %cst_90 = arith.constant dense<0.000000e+00> : vector<74x128xf32>
    %119 = tpu.matmul %116, %118, %cst_90 {dimension_numbers = #tpu.dot_dimension_numbers<[1], [0], [0], [1], [0, 0, 1, 1], [], []>} : vector<74x128xbf16>, vector<128x128xbf16>, vector<74x128xf32> -> vector<74x128xf32>
    %120 = arith.addf %115, %119 : vector<74x128xf32>
    %c22 = arith.constant 22 : index
    %c0_91 = arith.constant 0 : index
    %121 = vector.load %arg12[%c22, %c0_91] : memref<128x128xbf16, #tpu.memory_space<vmem>>, vector<74x128xbf16>
    %c7 = arith.constant 7 : index
    %c0_92 = arith.constant 0 : index
    %c0_93 = arith.constant 0 : index
    %122 = vector.load %arg3[%c7, %c0_92, %c0_93] : memref<16x128x128xbf16, #tpu.memory_space<vmem>>, vector<1x128x128xbf16>
    %123 = vector.shape_cast %122 : vector<1x128x128xbf16> to vector<128x128xbf16>
    %cst_94 = arith.constant dense<0.000000e+00> : vector<74x128xf32>
    %124 = tpu.matmul %121, %123, %cst_94 {dimension_numbers = #tpu.dot_dimension_numbers<[1], [0], [0], [1], [0, 0, 1, 1], [], []>} : vector<74x128xbf16>, vector<128x128xbf16>, vector<74x128xf32> -> vector<74x128xf32>
    %125 = arith.addf %120, %124 : vector<74x128xf32>
    %c32_95 = arith.constant 32 : index
    %c0_96 = arith.constant 0 : index
    %126 = vector.load %arg12[%c32_95, %c0_96] : memref<128x128xbf16, #tpu.memory_space<vmem>>, vector<74x128xbf16>
    %c8 = arith.constant 8 : index
    %c0_97 = arith.constant 0 : index
    %c0_98 = arith.constant 0 : index
    %127 = vector.load %arg3[%c8, %c0_97, %c0_98] : memref<16x128x128xbf16, #tpu.memory_space<vmem>>, vector<1x128x128xbf16>
    %128 = vector.shape_cast %127 : vector<1x128x128xbf16> to vector<128x128xbf16>
    %cst_99 = arith.constant dense<0.000000e+00> : vector<74x128xf32>
    %129 = tpu.matmul %126, %128, %cst_99 {dimension_numbers = #tpu.dot_dimension_numbers<[1], [0], [0], [1], [0, 0, 1, 1], [], []>} : vector<74x128xbf16>, vector<128x128xbf16>, vector<74x128xf32> -> vector<74x128xf32>
    %130 = arith.addf %125, %129 : vector<74x128xf32>
    %c34 = arith.constant 34 : index
    %c0_100 = arith.constant 0 : index
    %131 = vector.load %arg12[%c34, %c0_100] : memref<128x128xbf16, #tpu.memory_space<vmem>>, vector<74x128xbf16>
    %c9 = arith.constant 9 : index
    %c0_101 = arith.constant 0 : index
    %c0_102 = arith.constant 0 : index
    %132 = vector.load %arg3[%c9, %c0_101, %c0_102] : memref<16x128x128xbf16, #tpu.memory_space<vmem>>, vector<1x128x128xbf16>
    %133 = vector.shape_cast %132 : vector<1x128x128xbf16> to vector<128x128xbf16>
    %cst_103 = arith.constant dense<0.000000e+00> : vector<74x128xf32>
    %134 = tpu.matmul %131, %133, %cst_103 {dimension_numbers = #tpu.dot_dimension_numbers<[1], [0], [0], [1], [0, 0, 1, 1], [], []>} : vector<74x128xbf16>, vector<128x128xbf16>, vector<74x128xf32> -> vector<74x128xf32>
    %135 = arith.addf %130, %134 : vector<74x128xf32>
    %c36 = arith.constant 36 : index
    %c0_104 = arith.constant 0 : index
    %136 = vector.load %arg12[%c36, %c0_104] : memref<128x128xbf16, #tpu.memory_space<vmem>>, vector<74x128xbf16>
    %c10 = arith.constant 10 : index
    %c0_105 = arith.constant 0 : index
    %c0_106 = arith.constant 0 : index
    %137 = vector.load %arg3[%c10, %c0_105, %c0_106] : memref<16x128x128xbf16, #tpu.memory_space<vmem>>, vector<1x128x128xbf16>
    %138 = vector.shape_cast %137 : vector<1x128x128xbf16> to vector<128x128xbf16>
    %cst_107 = arith.constant dense<0.000000e+00> : vector<74x128xf32>
    %139 = tpu.matmul %136, %138, %cst_107 {dimension_numbers = #tpu.dot_dimension_numbers<[1], [0], [0], [1], [0, 0, 1, 1], [], []>} : vector<74x128xbf16>, vector<128x128xbf16>, vector<74x128xf32> -> vector<74x128xf32>
    %140 = arith.addf %135, %139 : vector<74x128xf32>
    %c38 = arith.constant 38 : index
    %c0_108 = arith.constant 0 : index
    %141 = vector.load %arg12[%c38, %c0_108] : memref<128x128xbf16, #tpu.memory_space<vmem>>, vector<74x128xbf16>
    %c11 = arith.constant 11 : index
    %c0_109 = arith.constant 0 : index
    %c0_110 = arith.constant 0 : index
    %142 = vector.load %arg3[%c11, %c0_109, %c0_110] : memref<16x128x128xbf16, #tpu.memory_space<vmem>>, vector<1x128x128xbf16>
    %143 = vector.shape_cast %142 : vector<1x128x128xbf16> to vector<128x128xbf16>
    %cst_111 = arith.constant dense<0.000000e+00> : vector<74x128xf32>
    %144 = tpu.matmul %141, %143, %cst_111 {dimension_numbers = #tpu.dot_dimension_numbers<[1], [0], [0], [1], [0, 0, 1, 1], [], []>} : vector<74x128xbf16>, vector<128x128xbf16>, vector<74x128xf32> -> vector<74x128xf32>
    %145 = arith.addf %140, %144 : vector<74x128xf32>
    %c48_112 = arith.constant 48 : index
    %c0_113 = arith.constant 0 : index
    %146 = vector.load %arg12[%c48_112, %c0_113] : memref<128x128xbf16, #tpu.memory_space<vmem>>, vector<74x128xbf16>
    %c12 = arith.constant 12 : index
    %c0_114 = arith.constant 0 : index
    %c0_115 = arith.constant 0 : index
    %147 = vector.load %arg3[%c12, %c0_114, %c0_115] : memref<16x128x128xbf16, #tpu.memory_space<vmem>>, vector<1x128x128xbf16>
    %148 = vector.shape_cast %147 : vector<1x128x128xbf16> to vector<128x128xbf16>
    %cst_116 = arith.constant dense<0.000000e+00> : vector<74x128xf32>
    %149 = tpu.matmul %146, %148, %cst_116 {dimension_numbers = #tpu.dot_dimension_numbers<[1], [0], [0], [1], [0, 0, 1, 1], [], []>} : vector<74x128xbf16>, vector<128x128xbf16>, vector<74x128xf32> -> vector<74x128xf32>
    %150 = arith.addf %145, %149 : vector<74x128xf32>
    %c50 = arith.constant 50 : index
    %c0_117 = arith.constant 0 : index
    %151 = vector.load %arg12[%c50, %c0_117] : memref<128x128xbf16, #tpu.memory_space<vmem>>, vector<74x128xbf16>
    %c13 = arith.constant 13 : index
    %c0_118 = arith.constant 0 : index
    %c0_119 = arith.constant 0 : index
    %152 = vector.load %arg3[%c13, %c0_118, %c0_119] : memref<16x128x128xbf16, #tpu.memory_space<vmem>>, vector<1x128x128xbf16>
    %153 = vector.shape_cast %152 : vector<1x128x128xbf16> to vector<128x128xbf16>
    %cst_120 = arith.constant dense<0.000000e+00> : vector<74x128xf32>
    %154 = tpu.matmul %151, %153, %cst_120 {dimension_numbers = #tpu.dot_dimension_numbers<[1], [0], [0], [1], [0, 0, 1, 1], [], []>} : vector<74x128xbf16>, vector<128x128xbf16>, vector<74x128xf32> -> vector<74x128xf32>
    %155 = arith.addf %150, %154 : vector<74x128xf32>
    %c52 = arith.constant 52 : index
    %c0_121 = arith.constant 0 : index
    %156 = vector.load %arg12[%c52, %c0_121] : memref<128x128xbf16, #tpu.memory_space<vmem>>, vector<74x128xbf16>
    %c14 = arith.constant 14 : index
    %c0_122 = arith.constant 0 : index
    %c0_123 = arith.constant 0 : index
    %157 = vector.load %arg3[%c14, %c0_122, %c0_123] : memref<16x128x128xbf16, #tpu.memory_space<vmem>>, vector<1x128x128xbf16>
    %158 = vector.shape_cast %157 : vector<1x128x128xbf16> to vector<128x128xbf16>
    %cst_124 = arith.constant dense<0.000000e+00> : vector<74x128xf32>
    %159 = tpu.matmul %156, %158, %cst_124 {dimension_numbers = #tpu.dot_dimension_numbers<[1], [0], [0], [1], [0, 0, 1, 1], [], []>} : vector<74x128xbf16>, vector<128x128xbf16>, vector<74x128xf32> -> vector<74x128xf32>
    %160 = arith.addf %155, %159 : vector<74x128xf32>
    %c54 = arith.constant 54 : index
    %c0_125 = arith.constant 0 : index
    %161 = vector.load %arg12[%c54, %c0_125] : memref<128x128xbf16, #tpu.memory_space<vmem>>, vector<74x128xbf16>
    %c15 = arith.constant 15 : index
    %c0_126 = arith.constant 0 : index
    %c0_127 = arith.constant 0 : index
    %162 = vector.load %arg3[%c15, %c0_126, %c0_127] : memref<16x128x128xbf16, #tpu.memory_space<vmem>>, vector<1x128x128xbf16>
    %163 = vector.shape_cast %162 : vector<1x128x128xbf16> to vector<128x128xbf16>
    %cst_128 = arith.constant dense<0.000000e+00> : vector<74x128xf32>
    %164 = tpu.matmul %161, %163, %cst_128 {dimension_numbers = #tpu.dot_dimension_numbers<[1], [0], [0], [1], [0, 0, 1, 1], [], []>} : vector<74x128xbf16>, vector<128x128xbf16>, vector<74x128xf32> -> vector<74x128xf32>
    %165 = arith.addf %160, %164 : vector<74x128xf32>
    %166 = vector.extract_strided_slice %165 {offsets = [0, 0], sizes = [2, 128], strides = [1, 1]} : vector<74x128xf32> to vector<2x128xf32>
    %c0_129 = arith.constant 0 : index
    %c0_130 = arith.constant 0 : index
    %167 = vector.load %arg4[%c0_129, %c0_130] : memref<1x128xf32, #tpu.memory_space<vmem>>, vector<1x128xf32>
    %168 = vector.broadcast %167 : vector<1x128xf32> to vector<2x128xf32>
    %169 = arith.addf %166, %168 : vector<2x128xf32>
    %cst_131 = arith.constant 0.000000e+00 : f32
    %170 = vector.broadcast %cst_131 : f32 to vector<2x128xf32>
    %171 = arith.maximumf %169, %170 : vector<2x128xf32>
    %172 = arith.truncf %171 : vector<2x128xf32> to vector<2x128xbf16>
    %c0_132 = arith.constant 0 : index
    %c0_133 = arith.constant 0 : index
    %173 = vector.load %arg13[%c0_132, %c0_133] : memref<18x128xbf16, #tpu.memory_space<vmem>>, vector<2x128xbf16>
    tpu.vector_store %arg13[%c0_132, %c0_133], %172 {strides = array<i32>} : memref<18x128xbf16, #tpu.memory_space<vmem>>, vector<2x128xbf16>,
    %174 = vector.extract_strided_slice %165 {offsets = [4, 0], sizes = [2, 128], strides = [1, 1]} : vector<74x128xf32> to vector<2x128xf32>
    %c0_134 = arith.constant 0 : index
    %c0_135 = arith.constant 0 : index
    %175 = vector.load %arg4[%c0_134, %c0_135] : memref<1x128xf32, #tpu.memory_space<vmem>>, vector<1x128xf32>
    %176 = vector.broadcast %175 : vector<1x128xf32> to vector<2x128xf32>
    %177 = arith.addf %174, %176 : vector<2x128xf32>
    %cst_136 = arith.constant 0.000000e+00 : f32
    %178 = vector.broadcast %cst_136 : f32 to vector<2x128xf32>
    %179 = arith.maximumf %177, %178 : vector<2x128xf32>
    %180 = arith.truncf %179 : vector<2x128xf32> to vector<2x128xbf16>
    %c2_137 = arith.constant 2 : index
    %c0_138 = arith.constant 0 : index
    %181 = vector.load %arg13[%c2_137, %c0_138] : memref<18x128xbf16, #tpu.memory_space<vmem>>, vector<2x128xbf16>
    tpu.vector_store %arg13[%c2_137, %c0_138], %180 {strides = array<i32>} : memref<18x128xbf16, #tpu.memory_space<vmem>>, vector<2x128xbf16>,
    %182 = vector.extract_strided_slice %165 {offsets = [8, 0], sizes = [2, 128], strides = [1, 1]} : vector<74x128xf32> to vector<2x128xf32>
    %c0_139 = arith.constant 0 : index
    %c0_140 = arith.constant 0 : index
    %183 = vector.load %arg4[%c0_139, %c0_140] : memref<1x128xf32, #tpu.memory_space<vmem>>, vector<1x128xf32>
    %184 = vector.broadcast %183 : vector<1x128xf32> to vector<2x128xf32>
    %185 = arith.addf %182, %184 : vector<2x128xf32>
    %cst_141 = arith.constant 0.000000e+00 : f32
    %186 = vector.broadcast %cst_141 : f32 to vector<2x128xf32>
    %187 = arith.maximumf %185, %186 : vector<2x128xf32>
    %188 = arith.truncf %187 : vector<2x128xf32> to vector<2x128xbf16>
    %c4_142 = arith.constant 4 : index
    %c0_143 = arith.constant 0 : index
    %189 = vector.load %arg13[%c4_142, %c0_143] : memref<18x128xbf16, #tpu.memory_space<vmem>>, vector<2x128xbf16>
    tpu.vector_store %arg13[%c4_142, %c0_143], %188 {strides = array<i32>} : memref<18x128xbf16, #tpu.memory_space<vmem>>, vector<2x128xbf16>,
    %190 = vector.extract_strided_slice %165 {offsets = [32, 0], sizes = [2, 128], strides = [1, 1]} : vector<74x128xf32> to vector<2x128xf32>
    %c0_144 = arith.constant 0 : index
    %c0_145 = arith.constant 0 : index
    %191 = vector.load %arg4[%c0_144, %c0_145] : memref<1x128xf32, #tpu.memory_space<vmem>>, vector<1x128xf32>
    %192 = vector.broadcast %191 : vector<1x128xf32> to vector<2x128xf32>
    %193 = arith.addf %190, %192 : vector<2x128xf32>
    %cst_146 = arith.constant 0.000000e+00 : f32
    %194 = vector.broadcast %cst_146 : f32 to vector<2x128xf32>
    %195 = arith.maximumf %193, %194 : vector<2x128xf32>
    %196 = arith.truncf %195 : vector<2x128xf32> to vector<2x128xbf16>
    %c6_147 = arith.constant 6 : index
    %c0_148 = arith.constant 0 : index
    %197 = vector.load %arg13[%c6_147, %c0_148] : memref<18x128xbf16, #tpu.memory_space<vmem>>, vector<2x128xbf16>
    tpu.vector_store %arg13[%c6_147, %c0_148], %196 {strides = array<i32>} : memref<18x128xbf16, #tpu.memory_space<vmem>>, vector<2x128xbf16>,
    %198 = vector.extract_strided_slice %165 {offsets = [36, 0], sizes = [2, 128], strides = [1, 1]} : vector<74x128xf32> to vector<2x128xf32>
    %c0_149 = arith.constant 0 : index
    %c0_150 = arith.constant 0 : index
    %199 = vector.load %arg4[%c0_149, %c0_150] : memref<1x128xf32, #tpu.memory_space<vmem>>, vector<1x128xf32>
    %200 = vector.broadcast %199 : vector<1x128xf32> to vector<2x128xf32>
    %201 = arith.addf %198, %200 : vector<2x128xf32>
    %cst_151 = arith.constant 0.000000e+00 : f32
    %202 = vector.broadcast %cst_151 : f32 to vector<2x128xf32>
    %203 = arith.maximumf %201, %202 : vector<2x128xf32>
    %204 = arith.truncf %203 : vector<2x128xf32> to vector<2x128xbf16>
    %c8_152 = arith.constant 8 : index
    %c0_153 = arith.constant 0 : index
    %205 = vector.load %arg13[%c8_152, %c0_153] : memref<18x128xbf16, #tpu.memory_space<vmem>>, vector<2x128xbf16>
    tpu.vector_store %arg13[%c8_152, %c0_153], %204 {strides = array<i32>} : memref<18x128xbf16, #tpu.memory_space<vmem>>, vector<2x128xbf16>,
    %206 = vector.extract_strided_slice %165 {offsets = [40, 0], sizes = [2, 128], strides = [1, 1]} : vector<74x128xf32> to vector<2x128xf32>
    %c0_154 = arith.constant 0 : index
    %c0_155 = arith.constant 0 : index
    %207 = vector.load %arg4[%c0_154, %c0_155] : memref<1x128xf32, #tpu.memory_space<vmem>>, vector<1x128xf32>
    %208 = vector.broadcast %207 : vector<1x128xf32> to vector<2x128xf32>
    %209 = arith.addf %206, %208 : vector<2x128xf32>
    %cst_156 = arith.constant 0.000000e+00 : f32
    %210 = vector.broadcast %cst_156 : f32 to vector<2x128xf32>
    %211 = arith.maximumf %209, %210 : vector<2x128xf32>
    %212 = arith.truncf %211 : vector<2x128xf32> to vector<2x128xbf16>
    %c10_157 = arith.constant 10 : index
    %c0_158 = arith.constant 0 : index
    %213 = vector.load %arg13[%c10_157, %c0_158] : memref<18x128xbf16, #tpu.memory_space<vmem>>, vector<2x128xbf16>
    tpu.vector_store %arg13[%c10_157, %c0_158], %212 {strides = array<i32>} : memref<18x128xbf16, #tpu.memory_space<vmem>>, vector<2x128xbf16>,
    %214 = vector.extract_strided_slice %165 {offsets = [64, 0], sizes = [2, 128], strides = [1, 1]} : vector<74x128xf32> to vector<2x128xf32>
    %c0_159 = arith.constant 0 : index
    %c0_160 = arith.constant 0 : index
    %215 = vector.load %arg4[%c0_159, %c0_160] : memref<1x128xf32, #tpu.memory_space<vmem>>, vector<1x128xf32>
    %216 = vector.broadcast %215 : vector<1x128xf32> to vector<2x128xf32>
    %217 = arith.addf %214, %216 : vector<2x128xf32>
    %cst_161 = arith.constant 0.000000e+00 : f32
    %218 = vector.broadcast %cst_161 : f32 to vector<2x128xf32>
    %219 = arith.maximumf %217, %218 : vector<2x128xf32>
    %220 = arith.truncf %219 : vector<2x128xf32> to vector<2x128xbf16>
    %c12_162 = arith.constant 12 : index
    %c0_163 = arith.constant 0 : index
    %221 = vector.load %arg13[%c12_162, %c0_163] : memref<18x128xbf16, #tpu.memory_space<vmem>>, vector<2x128xbf16>
    tpu.vector_store %arg13[%c12_162, %c0_163], %220 {strides = array<i32>} : memref<18x128xbf16, #tpu.memory_space<vmem>>, vector<2x128xbf16>,
    %222 = vector.extract_strided_slice %165 {offsets = [68, 0], sizes = [2, 128], strides = [1, 1]} : vector<74x128xf32> to vector<2x128xf32>
    %c0_164 = arith.constant 0 : index
    %c0_165 = arith.constant 0 : index
    %223 = vector.load %arg4[%c0_164, %c0_165] : memref<1x128xf32, #tpu.memory_space<vmem>>, vector<1x128xf32>
    %224 = vector.broadcast %223 : vector<1x128xf32> to vector<2x128xf32>
    %225 = arith.addf %222, %224 : vector<2x128xf32>
    %cst_166 = arith.constant 0.000000e+00 : f32
    %226 = vector.broadcast %cst_166 : f32 to vector<2x128xf32>
    %227 = arith.maximumf %225, %226 : vector<2x128xf32>
    %228 = arith.truncf %227 : vector<2x128xf32> to vector<2x128xbf16>
    %c14_167 = arith.constant 14 : index
    %c0_168 = arith.constant 0 : index
    %229 = vector.load %arg13[%c14_167, %c0_168] : memref<18x128xbf16, #tpu.memory_space<vmem>>, vector<2x128xbf16>
    tpu.vector_store %arg13[%c14_167, %c0_168], %228 {strides = array<i32>} : memref<18x128xbf16, #tpu.memory_space<vmem>>, vector<2x128xbf16>,
    %230 = vector.extract_strided_slice %165 {offsets = [72, 0], sizes = [2, 128], strides = [1, 1]} : vector<74x128xf32> to vector<2x128xf32>
    %c0_169 = arith.constant 0 : index
    %c0_170 = arith.constant 0 : index
    %231 = vector.load %arg4[%c0_169, %c0_170] : memref<1x128xf32, #tpu.memory_space<vmem>>, vector<1x128xf32>
    %232 = vector.broadcast %231 : vector<1x128xf32> to vector<2x128xf32>
    %233 = arith.addf %230, %232 : vector<2x128xf32>
    %cst_171 = arith.constant 0.000000e+00 : f32
    %234 = vector.broadcast %cst_171 : f32 to vector<2x128xf32>
    %235 = arith.maximumf %233, %234 : vector<2x128xf32>
    %236 = arith.truncf %235 : vector<2x128xf32> to vector<2x128xbf16>
    %c16_172 = arith.constant 16 : index
    %c0_173 = arith.constant 0 : index
    %237 = vector.load %arg13[%c16_172, %c0_173] : memref<18x128xbf16, #tpu.memory_space<vmem>>, vector<2x128xbf16>
    tpu.vector_store %arg13[%c16_172, %c0_173], %236 {strides = array<i32>} : memref<18x128xbf16, #tpu.memory_space<vmem>>, vector<2x128xbf16>,
    %cst_174 = arith.constant 0.000000e+00 : f32
    %238 = vector.broadcast %cst_174 : f32 to vector<2x128xf32>
    %c0_175 = arith.constant 0 : index
    %c0_176 = arith.constant 0 : index
    %239 = vector.load %arg13[%c0_175, %c0_176] : memref<18x128xbf16, #tpu.memory_space<vmem>>, vector<2x128xbf16>
    %c0_177 = arith.constant 0 : index
    %c0_178 = arith.constant 0 : index
    %c0_179 = arith.constant 0 : index
    %240 = vector.load %arg5[%c0_177, %c0_178, %c0_179] : memref<9x128x128xbf16, #tpu.memory_space<vmem>>, vector<1x128x128xbf16>
    %241 = vector.shape_cast %240 : vector<1x128x128xbf16> to vector<128x128xbf16>
    %cst_180 = arith.constant dense<0.000000e+00> : vector<2x128xf32>
    %242 = tpu.matmul %239, %241, %cst_180 {dimension_numbers = #tpu.dot_dimension_numbers<[1], [0], [0], [1], [0, 0, 1, 1], [], []>} : vector<2x128xbf16>, vector<128x128xbf16>, vector<2x128xf32> -> vector<2x128xf32>
    %243 = arith.addf %238, %242 : vector<2x128xf32>
    %c2_181 = arith.constant 2 : index
    %c0_182 = arith.constant 0 : index
    %244 = vector.load %arg13[%c2_181, %c0_182] : memref<18x128xbf16, #tpu.memory_space<vmem>>, vector<2x128xbf16>
    %c1_183 = arith.constant 1 : index
    %c0_184 = arith.constant 0 : index
    %c0_185 = arith.constant 0 : index
    %245 = vector.load %arg5[%c1_183, %c0_184, %c0_185] : memref<9x128x128xbf16, #tpu.memory_space<vmem>>, vector<1x128x128xbf16>
    %246 = vector.shape_cast %245 : vector<1x128x128xbf16> to vector<128x128xbf16>
    %cst_186 = arith.constant dense<0.000000e+00> : vector<2x128xf32>
    %247 = tpu.matmul %244, %246, %cst_186 {dimension_numbers = #tpu.dot_dimension_numbers<[1], [0], [0], [1], [0, 0, 1, 1], [], []>} : vector<2x128xbf16>, vector<128x128xbf16>, vector<2x128xf32> -> vector<2x128xf32>
    %248 = arith.addf %243, %247 : vector<2x128xf32>
    %c4_187 = arith.constant 4 : index
    %c0_188 = arith.constant 0 : index
    %249 = vector.load %arg13[%c4_187, %c0_188] : memref<18x128xbf16, #tpu.memory_space<vmem>>, vector<2x128xbf16>
    %c2_189 = arith.constant 2 : index
    %c0_190 = arith.constant 0 : index
    %c0_191 = arith.constant 0 : index
    %250 = vector.load %arg5[%c2_189, %c0_190, %c0_191] : memref<9x128x128xbf16, #tpu.memory_space<vmem>>, vector<1x128x128xbf16>
    %251 = vector.shape_cast %250 : vector<1x128x128xbf16> to vector<128x128xbf16>
    %cst_192 = arith.constant dense<0.000000e+00> : vector<2x128xf32>
    %252 = tpu.matmul %249, %251, %cst_192 {dimension_numbers = #tpu.dot_dimension_numbers<[1], [0], [0], [1], [0, 0, 1, 1], [], []>} : vector<2x128xbf16>, vector<128x128xbf16>, vector<2x128xf32> -> vector<2x128xf32>
    %253 = arith.addf %248, %252 : vector<2x128xf32>
    %c6_193 = arith.constant 6 : index
    %c0_194 = arith.constant 0 : index
    %254 = vector.load %arg13[%c6_193, %c0_194] : memref<18x128xbf16, #tpu.memory_space<vmem>>, vector<2x128xbf16>
    %c3_195 = arith.constant 3 : index
    %c0_196 = arith.constant 0 : index
    %c0_197 = arith.constant 0 : index
    %255 = vector.load %arg5[%c3_195, %c0_196, %c0_197] : memref<9x128x128xbf16, #tpu.memory_space<vmem>>, vector<1x128x128xbf16>
    %256 = vector.shape_cast %255 : vector<1x128x128xbf16> to vector<128x128xbf16>
    %cst_198 = arith.constant dense<0.000000e+00> : vector<2x128xf32>
    %257 = tpu.matmul %254, %256, %cst_198 {dimension_numbers = #tpu.dot_dimension_numbers<[1], [0], [0], [1], [0, 0, 1, 1], [], []>} : vector<2x128xbf16>, vector<128x128xbf16>, vector<2x128xf32> -> vector<2x128xf32>
    %258 = arith.addf %253, %257 : vector<2x128xf32>
    %c8_199 = arith.constant 8 : index
    %c0_200 = arith.constant 0 : index
    %259 = vector.load %arg13[%c8_199, %c0_200] : memref<18x128xbf16, #tpu.memory_space<vmem>>, vector<2x128xbf16>
    %c4_201 = arith.constant 4 : index
    %c0_202 = arith.constant 0 : index
    %c0_203 = arith.constant 0 : index
    %260 = vector.load %arg5[%c4_201, %c0_202, %c0_203] : memref<9x128x128xbf16, #tpu.memory_space<vmem>>, vector<1x128x128xbf16>
    %261 = vector.shape_cast %260 : vector<1x128x128xbf16> to vector<128x128xbf16>
    %cst_204 = arith.constant dense<0.000000e+00> : vector<2x128xf32>
    %262 = tpu.matmul %259, %261, %cst_204 {dimension_numbers = #tpu.dot_dimension_numbers<[1], [0], [0], [1], [0, 0, 1, 1], [], []>} : vector<2x128xbf16>, vector<128x128xbf16>, vector<2x128xf32> -> vector<2x128xf32>
    %263 = arith.addf %258, %262 : vector<2x128xf32>
    %c10_205 = arith.constant 10 : index
    %c0_206 = arith.constant 0 : index
    %264 = vector.load %arg13[%c10_205, %c0_206] : memref<18x128xbf16, #tpu.memory_space<vmem>>, vector<2x128xbf16>
    %c5_207 = arith.constant 5 : index
    %c0_208 = arith.constant 0 : index
    %c0_209 = arith.constant 0 : index
    %265 = vector.load %arg5[%c5_207, %c0_208, %c0_209] : memref<9x128x128xbf16, #tpu.memory_space<vmem>>, vector<1x128x128xbf16>
    %266 = vector.shape_cast %265 : vector<1x128x128xbf16> to vector<128x128xbf16>
    %cst_210 = arith.constant dense<0.000000e+00> : vector<2x128xf32>
    %267 = tpu.matmul %264, %266, %cst_210 {dimension_numbers = #tpu.dot_dimension_numbers<[1], [0], [0], [1], [0, 0, 1, 1], [], []>} : vector<2x128xbf16>, vector<128x128xbf16>, vector<2x128xf32> -> vector<2x128xf32>
    %268 = arith.addf %263, %267 : vector<2x128xf32>
    %c12_211 = arith.constant 12 : index
    %c0_212 = arith.constant 0 : index
    %269 = vector.load %arg13[%c12_211, %c0_212] : memref<18x128xbf16, #tpu.memory_space<vmem>>, vector<2x128xbf16>
    %c6_213 = arith.constant 6 : index
    %c0_214 = arith.constant 0 : index
    %c0_215 = arith.constant 0 : index
    %270 = vector.load %arg5[%c6_213, %c0_214, %c0_215] : memref<9x128x128xbf16, #tpu.memory_space<vmem>>, vector<1x128x128xbf16>
    %271 = vector.shape_cast %270 : vector<1x128x128xbf16> to vector<128x128xbf16>
    %cst_216 = arith.constant dense<0.000000e+00> : vector<2x128xf32>
    %272 = tpu.matmul %269, %271, %cst_216 {dimension_numbers = #tpu.dot_dimension_numbers<[1], [0], [0], [1], [0, 0, 1, 1], [], []>} : vector<2x128xbf16>, vector<128x128xbf16>, vector<2x128xf32> -> vector<2x128xf32>
    %273 = arith.addf %268, %272 : vector<2x128xf32>
    %c14_217 = arith.constant 14 : index
    %c0_218 = arith.constant 0 : index
    %274 = vector.load %arg13[%c14_217, %c0_218] : memref<18x128xbf16, #tpu.memory_space<vmem>>, vector<2x128xbf16>
    %c7_219 = arith.constant 7 : index
    %c0_220 = arith.constant 0 : index
    %c0_221 = arith.constant 0 : index
    %275 = vector.load %arg5[%c7_219, %c0_220, %c0_221] : memref<9x128x128xbf16, #tpu.memory_space<vmem>>, vector<1x128x128xbf16>
    %276 = vector.shape_cast %275 : vector<1x128x128xbf16> to vector<128x128xbf16>
    %cst_222 = arith.constant dense<0.000000e+00> : vector<2x128xf32>
    %277 = tpu.matmul %274, %276, %cst_222 {dimension_numbers = #tpu.dot_dimension_numbers<[1], [0], [0], [1], [0, 0, 1, 1], [], []>} : vector<2x128xbf16>, vector<128x128xbf16>, vector<2x128xf32> -> vector<2x128xf32>
    %278 = arith.addf %273, %277 : vector<2x128xf32>
    %c16_223 = arith.constant 16 : index
    %c0_224 = arith.constant 0 : index
    %279 = vector.load %arg13[%c16_223, %c0_224] : memref<18x128xbf16, #tpu.memory_space<vmem>>, vector<2x128xbf16>
    %c8_225 = arith.constant 8 : index
    %c0_226 = arith.constant 0 : index
    %c0_227 = arith.constant 0 : index
    %280 = vector.load %arg5[%c8_225, %c0_226, %c0_227] : memref<9x128x128xbf16, #tpu.memory_space<vmem>>, vector<1x128x128xbf16>
    %281 = vector.shape_cast %280 : vector<1x128x128xbf16> to vector<128x128xbf16>
    %cst_228 = arith.constant dense<0.000000e+00> : vector<2x128xf32>
    %282 = tpu.matmul %279, %281, %cst_228 {dimension_numbers = #tpu.dot_dimension_numbers<[1], [0], [0], [1], [0, 0, 1, 1], [], []>} : vector<2x128xbf16>, vector<128x128xbf16>, vector<2x128xf32> -> vector<2x128xf32>
    %283 = arith.addf %278, %282 : vector<2x128xf32>
    %c0_229 = arith.constant 0 : index
    %c0_230 = arith.constant 0 : index
    %284 = vector.load %arg6[%c0_229, %c0_230] : memref<1x128xf32, #tpu.memory_space<vmem>>, vector<1x128xf32>
    %285 = vector.broadcast %284 : vector<1x128xf32> to vector<2x128xf32>
    %286 = arith.addf %283, %285 : vector<2x128xf32>
    %cst_231 = arith.constant 0.000000e+00 : f32
    %287 = vector.broadcast %cst_231 : f32 to vector<2x128xf32>
    %288 = arith.maximumf %286, %287 : vector<2x128xf32>
    %289 = arith.truncf %288 : vector<2x128xf32> to vector<2x128xbf16>
    %c0_232 = arith.constant 0 : index
    %c0_233 = arith.constant 0 : index
    %290 = vector.load %arg7[%c0_232, %c0_233] : memref<128x512xbf16, #tpu.memory_space<vmem>>, vector<128x512xbf16>
    %cst_234 = arith.constant dense<0.000000e+00> : vector<2x512xf32>
    %291 = tpu.matmul %289, %290, %cst_234 {dimension_numbers = #tpu.dot_dimension_numbers<[1], [0], [0], [1], [0, 0, 1, 1], [], []>} : vector<2x128xbf16>, vector<128x512xbf16>, vector<2x512xf32> -> vector<2x512xf32>
    %c0_235 = arith.constant 0 : index
    %c0_236 = arith.constant 0 : index
    %292 = vector.load %arg8[%c0_235, %c0_236] : memref<1x512xf32, #tpu.memory_space<vmem>>, vector<1x512xf32>
    %293 = vector.broadcast %292 : vector<1x512xf32> to vector<2x512xf32>
    %294 = arith.addf %291, %293 : vector<2x512xf32>
    %cst_237 = arith.constant 0.000000e+00 : f32
    %295 = vector.broadcast %cst_237 : f32 to vector<2x512xf32>
    %296 = arith.maximumf %294, %295 : vector<2x512xf32>
    %297 = arith.truncf %296 : vector<2x512xf32> to vector<2x512xbf16>
    %c0_238 = arith.constant 0 : index
    %c0_239 = arith.constant 0 : index
    %298 = vector.load %arg9[%c0_238, %c0_239] : memref<512x128xbf16, #tpu.memory_space<vmem>>, vector<512x128xbf16>
    %cst_240 = arith.constant dense<0.000000e+00> : vector<2x128xf32>
    %299 = tpu.matmul %297, %298, %cst_240 {dimension_numbers = #tpu.dot_dimension_numbers<[1], [0], [0], [1], [0, 0, 1, 1], [], []>} : vector<2x512xbf16>, vector<512x128xbf16>, vector<2x128xf32> -> vector<2x128xf32>
    %c0_241 = arith.constant 0 : index
    %c0_242 = arith.constant 0 : index
    %300 = vector.load %arg10[%c0_241, %c0_242] : memref<1x128xf32, #tpu.memory_space<vmem>>, vector<1x128xf32>
    %301 = vector.broadcast %300 : vector<1x128xf32> to vector<2x128xf32>
    %302 = arith.addf %299, %301 : vector<2x128xf32>
    %c0_243 = arith.constant 0 : index
    %c0_244 = arith.constant 0 : index
    %303 = vector.load %arg11[%c0_243, %c0_244] : memref<2x128xf32, #tpu.memory_space<vmem>>, vector<2x128xf32>
    tpu.vector_store %arg11[%c0_243, %c0_244], %302 {strides = array<i32>} : memref<2x128xf32, #tpu.memory_space<vmem>>, vector<2x128xf32>,
    return
  }
}

</mosaic_0001>

<llo_original>
// kernel: qnetwork_forward.1
$region0: #{qnetwork_forward.1}
  #allocation0 [shape = 'u32[]', space=smem, size = 0x4, offset = 0x4, fixed_abs, tag = 'smem constant byte address 0x4 - core index']
  #allocation1 [shape = 'u32[72,128]{1,0:T(1,128)}', space=vmem, size = 0x9000, scoped, tag = 'internal scratch']
  #allocation2 [shape = 'bf16[128,128]{1,0:T(8,128)(2,1)}', space=vmem, size = 0x8000, scoped, tag = 'scratch operand']
  #allocation3 [shape = 'bf16[18,128]{1,0:T(8,128)(2,1)}', space=vmem, size = 0x1800, scoped, tag = 'scratch operand']
  %s0 = inlined_call_operand.vmem [shape: bf16[162,64], index: 0, kind: input, shape index: {}]
  %s1 = inlined_call_operand.vmem [shape: bf16[4,64,128], index: 1, kind: input, shape index: {}]
  %s2 = inlined_call_operand.vmem [shape: f32[1,128], index: 2, kind: input, shape index: {}]
  %s3 = inlined_call_operand.vmem [shape: bf16[16,128,128], index: 3, kind: input, shape index: {}]
  %s4 = inlined_call_operand.vmem [shape: f32[1,128], index: 4, kind: input, shape index: {}]
  %s5 = inlined_call_operand.vmem [shape: bf16[9,128,128], index: 5, kind: input, shape index: {}]
  %s6 = inlined_call_operand.vmem [shape: f32[1,128], index: 6, kind: input, shape index: {}]
  %s7 = inlined_call_operand.vmem [shape: bf16[128,512], index: 7, kind: input, shape index: {}]
  %s8 = inlined_call_operand.vmem [shape: f32[1,512], index: 8, kind: input, shape index: {}]
  %s9 = inlined_call_operand.vmem [shape: bf16[512,128], index: 9, kind: input, shape index: {}]
  %s10 = inlined_call_operand.vmem [shape: f32[1,128], index: 10, kind: input, shape index: {}]
  %s11 = inlined_call_operand.hbm [shape: f32[2,128], index: 11, kind: output, shape index: {}]
  %s12 = sld [smem:[#allocation0]]
  $region54: #{qnetwork_forward.1} parent=0
    _
  %s14 = ssub.s32 1, %s12
  %s15 = scalar_select 0, %s14, %s12
  $region1: #{qnetwork_forward.1} parent=0
    #allocation4 [shape = 'u8[1024]{0}', space=vmem, size = 0x400, scoped, tag = 'output window, operand 0, single buffered']
    #allocation5 [shape = 's32[1]{0}', space=sflag, size = 0x4, scoped, tag = 'scoped memory for qnetwork_forward.1']
    %16 = vsyncpa [#allocation5], 0
    // Predicated region
    $region2: #{qnetwork_forward.1} parent=1 // pred_check
      _
    $region3: #{qnetwork_forward.1} parent=1 // pred_check_branch
      %18 = sbr.rel (0) target = $region5
    $region4: #{qnetwork_forward.1} parent=1 // pred_region
      _
    $region5: #{qnetwork_forward.1} parent=1 // pred_fallthru
      _
    // Predicated region
    $region6: #{qnetwork_forward.1} parent=1 // pred_check
      _
    $region7: #{qnetwork_forward.1} parent=1 // pred_check_branch
      %20 = sbr.rel (0) target = $region9
    $region8: #{qnetwork_forward.1} parent=1 // pred_region
      _
    $region9: #{qnetwork_forward.1} parent=1 // pred_fallthru
      _
    // Predicated region
    $region10: #{qnetwork_forward.1} parent=1 // pred_check
      _
    $region11: #{qnetwork_forward.1} parent=1 // pred_check_branch
      %22 = sbr.rel (0) target = $region13
    $region12: #{qnetwork_forward.1} parent=1 // pred_region
      _
    $region13: #{qnetwork_forward.1} parent=1 // pred_fallthru
      _
    // Predicated region
    $region14: #{qnetwork_forward.1} parent=1 // pred_check
      _
    $region15: #{qnetwork_forward.1} parent=1 // pred_check_branch
      %24 = sbr.rel (0) target = $region17
    $region16: #{qnetwork_forward.1} parent=1 // pred_region
      _
    $region17: #{qnetwork_forward.1} parent=1 // pred_fallthru
      _
    // Predicated region
    $region18: #{qnetwork_forward.1} parent=1 // pred_check
      _
    $region19: #{qnetwork_forward.1} parent=1 // pred_check_branch
      %26 = sbr.rel (0) target = $region21
    $region20: #{qnetwork_forward.1} parent=1 // pred_region
      _
    $region21: #{qnetwork_forward.1} parent=1 // pred_fallthru
      _
    // Predicated region
    $region22: #{qnetwork_forward.1} parent=1 // pred_check
      _
    $region23: #{qnetwork_forward.1} parent=1 // pred_check_branch
      %28 = sbr.rel (0) target = $region25
    $region24: #{qnetwork_forward.1} parent=1 // pred_region
      _
    $region25: #{qnetwork_forward.1} parent=1 // pred_fallthru
      _
    // Predicated region
    $region26: #{qnetwork_forward.1} parent=1 // pred_check
      _
    $region27: #{qnetwork_forward.1} parent=1 // pred_check_branch
      %30 = sbr.rel (0) target = $region29
    $region28: #{qnetwork_forward.1} parent=1 // pred_region
      _
    $region29: #{qnetwork_forward.1} parent=1 // pred_fallthru
      _
    // Predicated region
    $region30: #{qnetwork_forward.1} parent=1 // pred_check
      _
    $region31: #{qnetwork_forward.1} parent=1 // pred_check_branch
      %32 = sbr.rel (0) target = $region33
    $region32: #{qnetwork_forward.1} parent=1 // pred_region
      _
    $region33: #{qnetwork_forward.1} parent=1 // pred_fallthru
      _
    // Predicated region
    $region34: #{qnetwork_forward.1} parent=1 // pred_check
      _
    $region35: #{qnetwork_forward.1} parent=1 // pred_check_branch
      %34 = sbr.rel (0) target = $region37
    $region36: #{qnetwork_forward.1} parent=1 // pred_region
      _
    $region37: #{qnetwork_forward.1} parent=1 // pred_fallthru
      _
    // Predicated region
    $region38: #{qnetwork_forward.1} parent=1 // pred_check
      _
    $region39: #{qnetwork_forward.1} parent=1 // pred_check_branch
      %36 = sbr.rel (0) target = $region41
    $region40: #{qnetwork_forward.1} parent=1 // pred_region
      _
    $region41: #{qnetwork_forward.1} parent=1 // pred_fallthru
      _
    // Predicated region
    $region42: #{qnetwork_forward.1} parent=1 // pred_check
      _
    $region43: #{qnetwork_forward.1} parent=1 // pred_check_branch
      %38 = sbr.rel (0) target = $region45
    $region44: #{qnetwork_forward.1} parent=1 // pred_region
      _
    $region45: #{qnetwork_forward.1} parent=1 // pred_fallthru
      _
    %v40 = vld [vmem:[%s0] sm:$0xf]
    %v41 = vld [vmem:[%s0 + $0x4] sm:$0xf]
    %v42 = vld [vmem:[%s0 + $0x8] sm:$0xf]
    %v43 = vld [vmem:[%s0 + $0xc] sm:$0xf]
    %v44 = vld [vmem:[%s0 + $0x10] sm:$0xf]
    %v45 = vld [vmem:[%s0 + $0x14] sm:$0xf]
    %v46 = vld [vmem:[%s0 + $0x18] sm:$0xf]
    %v47 = vld [vmem:[%s0 + $0x1c] sm:$0xf]
    %v48 = vld [vmem:[%s0 + $0x20] sm:$0xf]
    %v49 = vld [vmem:[%s0 + $0x24] sm:$0xf]
    %v50 = vld [vmem:[%s0 + $0x28] sm:$0xf]
    %v51 = vld [vmem:[%s0 + $0x2c] sm:$0xf]
    %v52 = vld [vmem:[%s0 + $0x30] sm:$0xf]
    %v53 = vld [vmem:[%s0 + $0x34] sm:$0xf]
    %v54 = vld [vmem:[%s0 + $0x38] sm:$0xf]
    %v55 = vld [vmem:[%s0 + $0x3c] sm:$0xf]
    %v56 = vld [vmem:[%s0 + $0x40] sm:$0xf]
    %v57 = vld [vmem:[%s0 + $0x44] sm:$0x7]
    %v58 = vld [vmem:[%s1] sm:$0xf]
    %v59 = vld [vmem:[%s1 + $0x4] sm:$0xf]
    %v60 = vld [vmem:[%s1 + $0x8] sm:$0xf]
    %v61 = vld [vmem:[%s1 + $0xc] sm:$0xf]
    %v62 = vld [vmem:[%s1 + $0x10] sm:$0xf]
    %v63 = vld [vmem:[%s1 + $0x14] sm:$0xf]
    %v64 = vld [vmem:[%s1 + $0x18] sm:$0xf]
    %v65 = vld [vmem:[%s1 + $0x1c] sm:$0xf]
    %v66 = vld [vmem:[%s0] sm:$0xe]
    %v67 = vld [vmem:[%s0 + $0x44] sm:$0xf]
    %s68 = scalar_lea.vmem %s1, 32
    %v69 = vld [vmem:[%s68] sm:$0xf]
    %v70 = vld [vmem:[%s68 + $0x4] sm:$0xf]
    %v71 = vld [vmem:[%s68 + $0x8] sm:$0xf]
    %v72 = vld [vmem:[%s68 + $0xc] sm:$0xf]
    %v73 = vld [vmem:[%s68 + $0x10] sm:$0xf]
    %v74 = vld [vmem:[%s68 + $0x14] sm:$0xf]
    %v75 = vld [vmem:[%s68 + $0x18] sm:$0xf]
    %v76 = vld [vmem:[%s68 + $0x1c] sm:$0xf]
    %v95 = vunpack.c.l.b16 %v66
    %v96 = vunpack.c.l.b16 %v41
    %v97 = vunpack.c.l.b16 %v42
    %v98 = vunpack.c.l.b16 %v43
    %v99 = vunpack.c.l.b16 %v44
    %v100 = vunpack.c.l.b16 %v45
    %v101 = vunpack.c.l.b16 %v46
    %v102 = vunpack.c.l.b16 %v47
    %v103 = vunpack.c.l.b16 %v48
    %v104 = vunpack.c.l.b16 %v49
    %v105 = vunpack.c.l.b16 %v50
    %v106 = vunpack.c.l.b16 %v51
    %v107 = vunpack.c.l.b16 %v52
    %v108 = vunpack.c.l.b16 %v53
    %v109 = vunpack.c.l.b16 %v54
    %v110 = vunpack.c.l.b16 %v55
    %v111 = vunpack.c.l.b16 %v56
    %v112 = vunpack.c.l.b16 %v67
    %v113 = vpack.c.b16 %v96, %v95
    %v114 = vpack.c.b16 %v98, %v97
    %v115 = vpack.c.b16 %v100, %v99
    %v116 = vpack.c.b16 %v102, %v101
    %v117 = vpack.c.b16 %v104, %v103
    %v118 = vpack.c.b16 %v106, %v105
    %v119 = vpack.c.b16 %v108, %v107
    %v120 = vpack.c.b16 %v110, %v109
    %v121 = vpack.c.b16 %v112, %v111
    %vm122 = vcmask 1046528
    %v123 = vrot.slane %v113, 1
    %v124 = vrot.slane %v114, 1
    %v125 = vsel %vm122, %v123, %v124
    %v126 = vrot.slane %v115, 1
    %v127 = vsel %vm122, %v124, %v126
    %v128 = vrot.slane %v116, 1
    %v129 = vsel %vm122, %v126, %v128
    %v130 = vrot.slane %v117, 1
    %v131 = vsel %vm122, %v128, %v130
    %v132 = vrot.slane %v118, 1
    %v133 = vsel %vm122, %v130, %v132
    %v134 = vrot.slane %v119, 1
    %v135 = vsel %vm122, %v132, %v134
    %v136 = vrot.slane %v120, 1
    %v137 = vsel %vm122, %v134, %v136
    %v138 = vrot.slane %v121, 1
    %v139 = vsel %vm122, %v136, %v138
    %v148 = vunpack.c.l.b16 %v69
    %v149 = vunpack.c.l.b16 %v70
    %v150 = vunpack.c.l.b16 %v71
    %v151 = vunpack.c.l.b16 %v72
    %v152 = vunpack.c.l.b16 %v73
    %v153 = vunpack.c.l.b16 %v74
    %v154 = vunpack.c.l.b16 %v75
    %v155 = vunpack.c.l.b16 %v76
    %v156 = vpack.c.b16 %v149, %v148
    %v157 = vpack.c.b16 %v151, %v150
    %v158 = vpack.c.b16 %v153, %v152
    %v159 = vpack.c.b16 %v155, %v154
    %vm164 = vcmask 523264
    %v166 = vsel %vm164, %v125, 0
    %v169 = vsel %vm164, %v127, 0
    %v172 = vsel %vm164, %v129, 0
    %v175 = vsel %vm164, %v131, 0
    %v178 = vsel %vm164, %v133, 0
    %v181 = vsel %vm164, %v135, 0
    %v184 = vsel %vm164, %v137, 0
    %v187 = vsel %vm164, %v139, 0
    %v190 = vsel %vm164, %v138, 0
    %192 = vmatpush.bf16.msra.mxu0 0
    %193 = vmatpush.bf16.msra.mxu0 0
    %194 = vmatpush.bf16.msra.mxu0 0
    %195 = vmatpush.bf16.msra.mxu0 0
    %196 = vmatpush.bf16.msra.mxu0 %v159
    %197 = vmatpush.bf16.msra.mxu0 %v158
    %198 = vmatpush.bf16.msra.mxu0 %v157
    %199 = vmatpush.bf16.msra.mxu0 %v156
    %200 = vmatmul.bf16.gmra.mxu0 %v166
    %v201 = vpop.f32.mrf.mxu0
    %v202 = vadd.f32 0.0, %v201
    %v203 = vpop.f32.mrf.mxu0
    %v204 = vadd.f32 0.0, %v203
    %205 = vmatmul.bf16.gmra.mxu0 %v169
    %v206 = vpop.f32.mrf.mxu0
    %v207 = vadd.f32 0.0, %v206
    %v208 = vpop.f32.mrf.mxu0
    %v209 = vadd.f32 0.0, %v208
    %210 = vmatmul.bf16.gmra.mxu0 %v172
    %v211 = vpop.f32.mrf.mxu0
    %v212 = vadd.f32 0.0, %v211
    %v213 = vpop.f32.mrf.mxu0
    %v214 = vadd.f32 0.0, %v213
    %215 = vmatmul.bf16.gmra.mxu0 %v175
    %v216 = vpop.f32.mrf.mxu0
    %v217 = vadd.f32 0.0, %v216
    %v218 = vpop.f32.mrf.mxu0
    %v219 = vadd.f32 0.0, %v218
    %220 = vmatmul.bf16.gmra.mxu0 %v178
    %v221 = vpop.f32.mrf.mxu0
    %v222 = vadd.f32 0.0, %v221
    %v223 = vpop.f32.mrf.mxu0
    %v224 = vadd.f32 0.0, %v223
    %225 = vmatmul.bf16.gmra.mxu0 %v181
    %v226 = vpop.f32.mrf.mxu0
    %v227 = vadd.f32 0.0, %v226
    %v228 = vpop.f32.mrf.mxu0
    %v229 = vadd.f32 0.0, %v228
    %230 = vmatmul.bf16.gmra.mxu0 %v184
    %v231 = vpop.f32.mrf.mxu0
    %v232 = vadd.f32 0.0, %v231
    %v233 = vpop.f32.mrf.mxu0
    %v234 = vadd.f32 0.0, %v233
    %235 = vmatmul.bf16.gmra.mxu0 %v187
    %v236 = vpop.f32.mrf.mxu0
    %v237 = vadd.f32 0.0, %v236
    %v238 = vpop.f32.mrf.mxu0
    %v239 = vadd.f32 0.0, %v238
    %240 = vmatmul.bf16.gmra.mxu0 %v190
    %v241 = vpop.f32.mrf.mxu0
    %v242 = vadd.f32 0.0, %v241
    %v243 = vpop.f32.mrf.mxu0
    %v244 = vadd.f32 0.0, %v243
    %245 = vdwg.mxu0
    %v248 = vunpack.c.l.b16 %v40
    %v249 = vunpack.c.l.b16 %v57
    %v250 = vpack.c.b16 %v96, %v248
    %v251 = vpack.c.b16 %v249, %v111
    %v260 = vunpack.c.l.b16 %v58
    %v261 = vunpack.c.l.b16 %v59
    %v262 = vunpack.c.l.b16 %v60
    %v263 = vunpack.c.l.b16 %v61
    %v264 = vunpack.c.l.b16 %v62
    %v265 = vunpack.c.l.b16 %v63
    %v266 = vunpack.c.l.b16 %v64
    %v267 = vunpack.c.l.b16 %v65
    %v268 = vpack.c.b16 %v261, %v260
    %v269 = vpack.c.b16 %v263, %v262
    %v270 = vpack.c.b16 %v265, %v264
    %v271 = vpack.c.b16 %v267, %v266
    %v277 = vsel %vm164, %v250, 0
    %v280 = vsel %vm164, %v114, 0
    %v283 = vsel %vm164, %v115, 0
    %v286 = vsel %vm164, %v116, 0
    %v289 = vsel %vm164, %v117, 0
    %v292 = vsel %vm164, %v118, 0
    %v295 = vsel %vm164, %v119, 0
    %v298 = vsel %vm164, %v120, 0
    %v301 = vsel %vm164, %v251, 0
    %303 = vmatpush.bf16.msra.mxu0 0
    %304 = vmatpush.bf16.msra.mxu0 0
    %305 = vmatpush.bf16.msra.mxu0 0
    %306 = vmatpush.bf16.msra.mxu0 0
    %307 = vmatpush.bf16.msra.mxu0 %v271
    %308 = vmatpush.bf16.msra.mxu0 %v270
    %309 = vmatpush.bf16.msra.mxu0 %v269
    %310 = vmatpush.bf16.msra.mxu0 %v268
    %311 = vmatmul.bf16.gmra.mxu0 %v277
    %v312 = vpop.f32.mrf.mxu0
    %v313 = vadd.f32 %v202, %v312
    %v314 = vpop.f32.mrf.mxu0
    %v315 = vadd.f32 %v204, %v314
    %316 = vmatmul.bf16.gmra.mxu0 %v280
    %v317 = vpop.f32.mrf.mxu0
    %v318 = vadd.f32 %v207, %v317
    %v319 = vpop.f32.mrf.mxu0
    %v320 = vadd.f32 %v209, %v319
    %321 = vmatmul.bf16.gmra.mxu0 %v283
    %v322 = vpop.f32.mrf.mxu0
    %v323 = vadd.f32 %v212, %v322
    %v324 = vpop.f32.mrf.mxu0
    %v325 = vadd.f32 %v214, %v324
    %326 = vmatmul.bf16.gmra.mxu0 %v286
    %v327 = vpop.f32.mrf.mxu0
    %v328 = vadd.f32 %v217, %v327
    %v329 = vpop.f32.mrf.mxu0
    %v330 = vadd.f32 %v219, %v329
    %331 = vmatmul.bf16.gmra.mxu0 %v289
    %v332 = vpop.f32.mrf.mxu0
    %v333 = vadd.f32 %v222, %v332
    %v334 = vpop.f32.mrf.mxu0
    %v335 = vadd.f32 %v224, %v334
    %336 = vmatmul.bf16.gmra.mxu0 %v292
    %v337 = vpop.f32.mrf.mxu0
    %v338 = vadd.f32 %v227, %v337
    %v339 = vpop.f32.mrf.mxu0
    %v340 = vadd.f32 %v229, %v339
    %341 = vmatmul.bf16.gmra.mxu0 %v295
    %v342 = vpop.f32.mrf.mxu0
    %v343 = vadd.f32 %v232, %v342
    %v344 = vpop.f32.mrf.mxu0
    %v345 = vadd.f32 %v234, %v344
    %346 = vmatmul.bf16.gmra.mxu0 %v298
    %v347 = vpop.f32.mrf.mxu0
    %v348 = vadd.f32 %v237, %v347
    %v349 = vpop.f32.mrf.mxu0
    %v350 = vadd.f32 %v239, %v349
    %351 = vmatmul.bf16.gmra.mxu0 %v301
    %v352 = vpop.f32.mrf.mxu0
    %v353 = vadd.f32 %v242, %v352
    %v354 = vpop.f32.mrf.mxu0
    %v355 = vadd.f32 %v244, %v354
    %356 = vdwg.mxu0
    %v357 = vld [vmem:[%s0 + $0x8] sm:$0xe]
    %v358 = vld [vmem:[%s0 + $0xc] sm:$0xf]
    %v359 = vld [vmem:[%s0 + $0x10] sm:$0xf]
    %v360 = vld [vmem:[%s0 + $0x14] sm:$0xf]
    %v361 = vld [vmem:[%s0 + $0x18] sm:$0xf]
    %v362 = vld [vmem:[%s0 + $0x1c] sm:$0xf]
    %v363 = vld [vmem:[%s0 + $0x20] sm:$0xf]
    %v364 = vld [vmem:[%s0 + $0x24] sm:$0xf]
    %v365 = vld [vmem:[%s0 + $0x28] sm:$0xf]
    %v366 = vld [vmem:[%s0 + $0x2c] sm:$0xf]
    %v367 = vld [vmem:[%s0 + $0x30] sm:$0xf]
    %v368 = vld [vmem:[%s0 + $0x34] sm:$0xf]
    %v369 = vld [vmem:[%s0 + $0x38] sm:$0xf]
    %v370 = vld [vmem:[%s0 + $0x3c] sm:$0xf]
    %v371 = vld [vmem:[%s0 + $0x40] sm:$0xf]
    %v372 = vld [vmem:[%s0 + $0x44] sm:$0xf]
    %v373 = vld [vmem:[%s0 + $0x48] sm:$0xf]
    %v374 = vld [vmem:[%s0 + $0x4c] sm:$0xf]
    %s375 = scalar_lea.vmem %s1, 64
    %v376 = vld [vmem:[%s375] sm:$0xf]
    %v377 = vld [vmem:[%s375 + $0x4] sm:$0xf]
    %v378 = vld [vmem:[%s375 + $0x8] sm:$0xf]
    %v379 = vld [vmem:[%s375 + $0xc] sm:$0xf]
    %v380 = vld [vmem:[%s375 + $0x10] sm:$0xf]
    %v381 = vld [vmem:[%s375 + $0x14] sm:$0xf]
    %v382 = vld [vmem:[%s375 + $0x18] sm:$0xf]
    %v383 = vld [vmem:[%s375 + $0x1c] sm:$0xf]
    %v402 = vunpack.c.l.b16 %v357
    %v403 = vunpack.c.l.b16 %v358
    %v404 = vunpack.c.l.b16 %v359
    %v405 = vunpack.c.l.b16 %v360
    %v406 = vunpack.c.l.b16 %v361
    %v407 = vunpack.c.l.b16 %v362
    %v408 = vunpack.c.l.b16 %v363
    %v409 = vunpack.c.l.b16 %v364
    %v410 = vunpack.c.l.b16 %v365
    %v411 = vunpack.c.l.b16 %v366
    %v412 = vunpack.c.l.b16 %v367
    %v413 = vunpack.c.l.b16 %v368
    %v414 = vunpack.c.l.b16 %v369
    %v415 = vunpack.c.l.b16 %v370
    %v416 = vunpack.c.l.b16 %v371
    %v417 = vunpack.c.l.b16 %v372
    %v418 = vunpack.c.l.b16 %v373
    %v419 = vunpack.c.l.b16 %v374
    %v420 = vpack.c.b16 %v403, %v402
    %v421 = vpack.c.b16 %v405, %v404
    %v422 = vpack.c.b16 %v407, %v406
    %v423 = vpack.c.b16 %v409, %v408
    %v424 = vpack.c.b16 %v411, %v410
    %v425 = vpack.c.b16 %v413, %v412
    %v426 = vpack.c.b16 %v415, %v414
    %v427 = vpack.c.b16 %v417, %v416
    %v428 = vpack.c.b16 %v419, %v418
    %v429 = vrot.slane %v420, 1
    %v430 = vrot.slane %v421, 1
    %v431 = vsel %vm122, %v429, %v430
    %v432 = vrot.slane %v422, 1
    %v433 = vsel %vm122, %v430, %v432
    %v434 = vrot.slane %v423, 1
    %v435 = vsel %vm122, %v432, %v434
    %v436 = vrot.slane %v424, 1
    %v437 = vsel %vm122, %v434, %v436
    %v438 = vrot.slane %v425, 1
    %v439 = vsel %vm122, %v436, %v438
    %v440 = vrot.slane %v426, 1
    %v441 = vsel %vm122, %v438, %v440
    %v442 = vrot.slane %v427, 1
    %v443 = vsel %vm122, %v440, %v442
    %v444 = vrot.slane %v428, 1
    %v445 = vsel %vm122, %v442, %v444
    %v454 = vunpack.c.l.b16 %v376
    %v455 = vunpack.c.l.b16 %v377
    %v456 = vunpack.c.l.b16 %v378
    %v457 = vunpack.c.l.b16 %v379
    %v458 = vunpack.c.l.b16 %v380
    %v459 = vunpack.c.l.b16 %v381
    %v460 = vunpack.c.l.b16 %v382
    %v461 = vunpack.c.l.b16 %v383
    %v462 = vpack.c.b16 %v455, %v454
    %v463 = vpack.c.b16 %v457, %v456
    %v464 = vpack.c.b16 %v459, %v458
    %v465 = vpack.c.b16 %v461, %v460
    %v471 = vsel %vm164, %v431, 0
    %v474 = vsel %vm164, %v433, 0
    %v477 = vsel %vm164, %v435, 0
    %v480 = vsel %vm164, %v437, 0
    %v483 = vsel %vm164, %v439, 0
    %v486 = vsel %vm164, %v441, 0
    %v489 = vsel %vm164, %v443, 0
    %v492 = vsel %vm164, %v445, 0
    %v495 = vsel %vm164, %v444, 0
    %497 = vmatpush.bf16.msra.mxu0 0
    %498 = vmatpush.bf16.msra.mxu0 0
    %499 = vmatpush.bf16.msra.mxu0 0
    %500 = vmatpush.bf16.msra.mxu0 0
    %501 = vmatpush.bf16.msra.mxu0 %v465
    %502 = vmatpush.bf16.msra.mxu0 %v464
    %503 = vmatpush.bf16.msra.mxu0 %v463
    %504 = vmatpush.bf16.msra.mxu0 %v462
    %505 = vmatmul.bf16.gmra.mxu0 %v471
    %v506 = vpop.f32.mrf.mxu0
    %v507 = vadd.f32 0.0, %v506
    %v508 = vpop.f32.mrf.mxu0
    %v509 = vadd.f32 0.0, %v508
    %510 = vmatmul.bf16.gmra.mxu0 %v474
    %v511 = vpop.f32.mrf.mxu0
    %v512 = vadd.f32 0.0, %v511
    %v513 = vpop.f32.mrf.mxu0
    %v514 = vadd.f32 0.0, %v513
    %515 = vmatmul.bf16.gmra.mxu0 %v477
    %v516 = vpop.f32.mrf.mxu0
    %v517 = vadd.f32 0.0, %v516
    %v518 = vpop.f32.mrf.mxu0
    %v519 = vadd.f32 0.0, %v518
    %520 = vmatmul.bf16.gmra.mxu0 %v480
    %v521 = vpop.f32.mrf.mxu0
    %v522 = vadd.f32 0.0, %v521
    %v523 = vpop.f32.mrf.mxu0
    %v524 = vadd.f32 0.0, %v523
    %525 = vmatmul.bf16.gmra.mxu0 %v483
    %v526 = vpop.f32.mrf.mxu0
    %v527 = vadd.f32 0.0, %v526
    %v528 = vpop.f32.mrf.mxu0
    %v529 = vadd.f32 0.0, %v528
    %530 = vmatmul.bf16.gmra.mxu0 %v486
    %v531 = vpop.f32.mrf.mxu0
    %v532 = vadd.f32 0.0, %v531
    %v533 = vpop.f32.mrf.mxu0
    %v534 = vadd.f32 0.0, %v533
    %535 = vmatmul.bf16.gmra.mxu0 %v489
    %v536 = vpop.f32.mrf.mxu0
    %v537 = vadd.f32 0.0, %v536
    %v538 = vpop.f32.mrf.mxu0
    %v539 = vadd.f32 0.0, %v538
    %540 = vmatmul.bf16.gmra.mxu0 %v492
    %v541 = vpop.f32.mrf.mxu0
    %v542 = vadd.f32 0.0, %v541
    %v543 = vpop.f32.mrf.mxu0
    %v544 = vadd.f32 0.0, %v543
    %545 = vmatmul.bf16.gmra.mxu0 %v495
    %v546 = vpop.f32.mrf.mxu0
    %v547 = vadd.f32 0.0, %v546
    %v548 = vpop.f32.mrf.mxu0
    %v549 = vadd.f32 0.0, %v548
    %550 = vdwg.mxu0
    %v551 = vadd.f32 %v313, %v507
    %v552 = vadd.f32 %v315, %v509
    %v553 = vadd.f32 %v318, %v512
    %v554 = vadd.f32 %v320, %v514
    %v555 = vadd.f32 %v323, %v517
    %v556 = vadd.f32 %v325, %v519
    %v557 = vadd.f32 %v328, %v522
    %v558 = vadd.f32 %v330, %v524
    %v559 = vadd.f32 %v333, %v527
    %v560 = vadd.f32 %v335, %v529
    %v561 = vadd.f32 %v338, %v532
    %v562 = vadd.f32 %v340, %v534
    %v563 = vadd.f32 %v343, %v537
    %v564 = vadd.f32 %v345, %v539
    %v565 = vadd.f32 %v348, %v542
    %v566 = vadd.f32 %v350, %v544
    %v567 = vadd.f32 %v353, %v547
    %v568 = vadd.f32 %v355, %v549
    %v569 = vld [vmem:[%s0 + $0x8] sm:$0xc]
    %v570 = vld [vmem:[%s0 + $0xc] sm:$0xf]
    %v571 = vld [vmem:[%s0 + $0x10] sm:$0xf]
    %v572 = vld [vmem:[%s0 + $0x14] sm:$0xf]
    %v573 = vld [vmem:[%s0 + $0x18] sm:$0xf]
    %v574 = vld [vmem:[%s0 + $0x1c] sm:$0xf]
    %v575 = vld [vmem:[%s0 + $0x20] sm:$0xf]
    %v576 = vld [vmem:[%s0 + $0x24] sm:$0xf]
    %v577 = vld [vmem:[%s0 + $0x28] sm:$0xf]
    %v578 = vld [vmem:[%s0 + $0x2c] sm:$0xf]
    %v579 = vld [vmem:[%s0 + $0x30] sm:$0xf]
    %v580 = vld [vmem:[%s0 + $0x34] sm:$0xf]
    %v581 = vld [vmem:[%s0 + $0x38] sm:$0xf]
    %v582 = vld [vmem:[%s0 + $0x3c] sm:$0xf]
    %v583 = vld [vmem:[%s0 + $0x40] sm:$0xf]
    %v584 = vld [vmem:[%s0 + $0x44] sm:$0xf]
    %v585 = vld [vmem:[%s0 + $0x48] sm:$0xf]
    %v586 = vld [vmem:[%s0 + $0x4c] sm:$0xf]
    %v587 = vld [vmem:[%s0 + $0x50] sm:$0x1]
    %s588 = scalar_lea.vmem %s1, 96
    %v589 = vld [vmem:[%s588] sm:$0xf]
    %v590 = vld [vmem:[%s588 + $0x4] sm:$0xf]
    %v591 = vld [vmem:[%s588 + $0x8] sm:$0xf]
    %v592 = vld [vmem:[%s588 + $0xc] sm:$0xf]
    %v593 = vld [vmem:[%s588 + $0x10] sm:$0xf]
    %v594 = vld [vmem:[%s588 + $0x14] sm:$0xf]
    %v595 = vld [vmem:[%s588 + $0x18] sm:$0xf]
    %v596 = vld [vmem:[%s588 + $0x1c] sm:$0xf]
    %v616 = vunpack.c.l.b16 %v569
    %v617 = vunpack.c.l.b16 %v570
    %v618 = vunpack.c.l.b16 %v571
    %v619 = vunpack.c.l.b16 %v572
    %v620 = vunpack.c.l.b16 %v573
    %v621 = vunpack.c.l.b16 %v574
    %v622 = vunpack.c.l.b16 %v575
    %v623 = vunpack.c.l.b16 %v576
    %v624 = vunpack.c.l.b16 %v577
    %v625 = vunpack.c.l.b16 %v578
    %v626 = vunpack.c.l.b16 %v579
    %v627 = vunpack.c.l.b16 %v580
    %v628 = vunpack.c.l.b16 %v581
    %v629 = vunpack.c.l.b16 %v582
    %v630 = vunpack.c.l.b16 %v583
    %v631 = vunpack.c.l.b16 %v584
    %v632 = vunpack.c.l.b16 %v585
    %v633 = vunpack.c.l.b16 %v586
    %v634 = vunpack.c.l.b16 %v587
    %v635 = vpack.c.b16 %v617, %v616
    %v636 = vpack.c.b16 %v619, %v618
    %v637 = vpack.c.b16 %v621, %v620
    %v638 = vpack.c.b16 %v623, %v622
    %v639 = vpack.c.b16 %v625, %v624
    %v640 = vpack.c.b16 %v627, %v626
    %v641 = vpack.c.b16 %v629, %v628
    %v642 = vpack.c.b16 %v631, %v630
    %v643 = vpack.c.b16 %v633, %v632
    %v644 = vpack.c.b16 %v634, %v634
    %vm645 = vcmask 1045504
    %v646 = vrot.slane %v635, 2
    %v647 = vrot.slane %v636, 2
    %v648 = vsel %vm645, %v646, %v647
    %v649 = vrot.slane %v637, 2
    %v650 = vsel %vm645, %v647, %v649
    %v651 = vrot.slane %v638, 2
    %v652 = vsel %vm645, %v649, %v651
    %v653 = vrot.slane %v639, 2
    %v654 = vsel %vm645, %v651, %v653
    %v655 = vrot.slane %v640, 2
    %v656 = vsel %vm645, %v653, %v655
    %v657 = vrot.slane %v641, 2
    %v658 = vsel %vm645, %v655, %v657
    %v659 = vrot.slane %v642, 2
    %v660 = vsel %vm645, %v657, %v659
    %v661 = vrot.slane %v643, 2
    %v662 = vsel %vm645, %v659, %v661
    %v663 = vrot.slane %v644, 2
    %v664 = vsel %vm645, %v661, %v663
    %v673 = vunpack.c.l.b16 %v589
    %v674 = vunpack.c.l.b16 %v590
    %v675 = vunpack.c.l.b16 %v591
    %v676 = vunpack.c.l.b16 %v592
    %v677 = vunpack.c.l.b16 %v593
    %v678 = vunpack.c.l.b16 %v594
    %v679 = vunpack.c.l.b16 %v595
    %v680 = vunpack.c.l.b16 %v596
    %v681 = vpack.c.b16 %v674, %v673
    %v682 = vpack.c.b16 %v676, %v675
    %v683 = vpack.c.b16 %v678, %v677
    %v684 = vpack.c.b16 %v680, %v679
    %v690 = vsel %vm164, %v648, 0
    %v693 = vsel %vm164, %v650, 0
    %v696 = vsel %vm164, %v652, 0
    %v699 = vsel %vm164, %v654, 0
    %v702 = vsel %vm164, %v656, 0
    %v705 = vsel %vm164, %v658, 0
    %v708 = vsel %vm164, %v660, 0
    %v711 = vsel %vm164, %v662, 0
    %v714 = vsel %vm164, %v664, 0
    %716 = vmatpush.bf16.msra.mxu0 0
    %717 = vmatpush.bf16.msra.mxu0 0
    %718 = vmatpush.bf16.msra.mxu0 0
    %719 = vmatpush.bf16.msra.mxu0 0
    %720 = vmatpush.bf16.msra.mxu0 %v684
    %721 = vmatpush.bf16.msra.mxu0 %v683
    %722 = vmatpush.bf16.msra.mxu0 %v682
    %723 = vmatpush.bf16.msra.mxu0 %v681
    %724 = vmatmul.bf16.gmra.mxu0 %v690
    %v725 = vpop.f32.mrf.mxu0
    %v726 = vadd.f32 0.0, %v725
    %v727 = vpop.f32.mrf.mxu0
    %v728 = vadd.f32 0.0, %v727
    %729 = vmatmul.bf16.gmra.mxu0 %v693
    %v730 = vpop.f32.mrf.mxu0
    %v731 = vadd.f32 0.0, %v730
    %v732 = vpop.f32.mrf.mxu0
    %v733 = vadd.f32 0.0, %v732
    %734 = vmatmul.bf16.gmra.mxu0 %v696
    %v735 = vpop.f32.mrf.mxu0
    %v736 = vadd.f32 0.0, %v735
    %v737 = vpop.f32.mrf.mxu0
    %v738 = vadd.f32 0.0, %v737
    %739 = vmatmul.bf16.gmra.mxu0 %v699
    %v740 = vpop.f32.mrf.mxu0
    %v741 = vadd.f32 0.0, %v740
    %v742 = vpop.f32.mrf.mxu0
    %v743 = vadd.f32 0.0, %v742
    %744 = vmatmul.bf16.gmra.mxu0 %v702
    %v745 = vpop.f32.mrf.mxu0
    %v746 = vadd.f32 0.0, %v745
    %v747 = vpop.f32.mrf.mxu0
    %v748 = vadd.f32 0.0, %v747
    %749 = vmatmul.bf16.gmra.mxu0 %v705
    %v750 = vpop.f32.mrf.mxu0
    %v751 = vadd.f32 0.0, %v750
    %v752 = vpop.f32.mrf.mxu0
    %v753 = vadd.f32 0.0, %v752
    %754 = vmatmul.bf16.gmra.mxu0 %v708
    %v755 = vpop.f32.mrf.mxu0
    %v756 = vadd.f32 0.0, %v755
    %v757 = vpop.f32.mrf.mxu0
    %v758 = vadd.f32 0.0, %v757
    %759 = vmatmul.bf16.gmra.mxu0 %v711
    %v760 = vpop.f32.mrf.mxu0
    %v761 = vadd.f32 0.0, %v760
    %v762 = vpop.f32.mrf.mxu0
    %v763 = vadd.f32 0.0, %v762
    %764 = vmatmul.bf16.gmra.mxu0 %v714
    %v765 = vpop.f32.mrf.mxu0
    %v766 = vadd.f32 0.0, %v765
    %v767 = vpop.f32.mrf.mxu0
    %v768 = vadd.f32 0.0, %v767
    %769 = vdwg.mxu0
    %v770 = vadd.f32 %v551, %v726
    %v771 = vadd.f32 %v552, %v728
    %v772 = vadd.f32 %v553, %v731
    %v773 = vadd.f32 %v554, %v733
    %v774 = vadd.f32 %v555, %v736
    %v775 = vadd.f32 %v556, %v738
    %v776 = vadd.f32 %v557, %v741
    %v777 = vadd.f32 %v558, %v743
    %v778 = vadd.f32 %v559, %v746
    %v779 = vadd.f32 %v560, %v748
    %v780 = vadd.f32 %v561, %v751
    %v781 = vadd.f32 %v562, %v753
    %v782 = vadd.f32 %v563, %v756
    %v783 = vadd.f32 %v564, %v758
    %v784 = vadd.f32 %v565, %v761
    %v785 = vadd.f32 %v566, %v763
    %v786 = vadd.f32 %v567, %v766
    %v787 = vadd.f32 %v568, %v768
    %v788 = vld [vmem:[%s2] sm:$0x1]
    %v790 = vperm.slane %v788, 0
    %v792 = vadd.f32 %v770, %v790
    %v793 = vadd.f32 %v771, %v790
    %v794 = vmax.f32 %v792, 0.0
    %v795 = vmax.f32 %v793, 0.0
    %v796 = vpack.c.bf16 %v794, %v794
    %v797 = vpack.c.bf16 %v795, %v795
    %798 = vst [vmem:[#allocation2] sm:$0xf] %v796
    %799 = vst [vmem:[#allocation2 + $0x4] sm:$0xf] %v797
    %v800 = vld [vmem:[%s2] sm:$0x1]
    %v802 = vperm.slane %v800, 0
    %v804 = vadd.f32 %v772, %v802
    %v805 = vadd.f32 %v773, %v802
    %v806 = vadd.f32 %v774, %v802
    %v807 = vmax.f32 %v804, 0.0
    %v808 = vmax.f32 %v805, 0.0
    %v809 = vmax.f32 %v806, 0.0
    %v810 = vpack.c.bf16 %v807, %v807
    %v811 = vpack.c.bf16 %v808, %v808
    %v812 = vpack.c.bf16 %v809, %v809
    %vm816 = vcmask 1042432
    %vm817 = vcmask 1046532
    %vm818 = vmor %vm816, %vm817
    %v819 = vrot.slane %v810, 5
    %v820 = vrot.slane %v819, 4
    %v821 = vrot.slane %v811, 5
    %v822 = vsel %vm818, %v820, %v821
    %v823 = vrot.slane %v821, 4
    %v824 = vrot.slane %v812, 5
    %v825 = vsel %vm818, %v823, %v824
    %828 = vst [vmem:[#allocation2 + $0x8] sm:$0xf] %v822
    %829 = vst [vmem:[#allocation2 + $0xc] sm:$0xf] %v825
    %v830 = vld [vmem:[%s2] sm:$0x1]
    %v832 = vperm.slane %v830, 0
    %v834 = vadd.f32 %v774, %v832
    %v835 = vadd.f32 %v775, %v832
    %v836 = vadd.f32 %v776, %v832
    %v837 = vmax.f32 %v834, 0.0
    %v838 = vmax.f32 %v835, 0.0
    %v839 = vmax.f32 %v836, 0.0
    %v840 = vpack.c.bf16 %v837, %v837
    %v841 = vpack.c.bf16 %v838, %v838
    %v842 = vpack.c.bf16 %v839, %v839
    %vm846 = vcmask 1041408
    %vm847 = vcmask 1045508
    %vm848 = vmor %vm846, %vm847
    %v849 = vrot.slane %v840, 6
    %v850 = vrot.slane %v849, 4
    %v851 = vrot.slane %v841, 6
    %v852 = vsel %vm848, %v850, %v851
    %v853 = vrot.slane %v851, 4
    %v854 = vrot.slane %v842, 6
    %v855 = vsel %vm848, %v853, %v854
    %858 = vst [vmem:[#allocation2 + $0x10] sm:$0xf] %v852
    %859 = vst [vmem:[#allocation2 + $0x14] sm:$0xf] %v855
    %v860 = vld [vmem:[%s2] sm:$0x1]
    %v862 = vperm.slane %v860, 0
    %v864 = vadd.f32 %v776, %v862
    %v865 = vadd.f32 %v777, %v862
    %v866 = vadd.f32 %v778, %v862
    %v867 = vmax.f32 %v864, 0.0
    %v868 = vmax.f32 %v865, 0.0
    %v869 = vmax.f32 %v866, 0.0
    %v870 = vpack.c.bf16 %v867, %v867
    %v871 = vpack.c.bf16 %v868, %v868
    %v872 = vpack.c.bf16 %v869, %v869
    %vm876 = vcmask 1040384
    %vm877 = vcmask 1044484
    %vm878 = vmor %vm876, %vm877
    %v879 = vrot.slane %v870, 7
    %v880 = vrot.slane %v879, 4
    %v881 = vrot.slane %v871, 7
    %v882 = vsel %vm878, %v880, %v881
    %v883 = vrot.slane %v881, 4
    %v884 = vrot.slane %v872, 7
    %v885 = vsel %vm878, %v883, %v884
    %888 = vst [vmem:[#allocation2 + $0x18] sm:$0xf] %v882
    %889 = vst [vmem:[#allocation2 + $0x1c] sm:$0xf] %v885
    %v890 = vld [vmem:[%s2] sm:$0x1]
    %v892 = vperm.slane %v890, 0
    %v894 = vadd.f32 %v779, %v892
    %v895 = vadd.f32 %v780, %v892
    %v896 = vmax.f32 %v894, 0.0
    %v897 = vmax.f32 %v895, 0.0
    %v898 = vpack.c.bf16 %v896, %v896
    %v899 = vpack.c.bf16 %v897, %v897
    %900 = vst [vmem:[#allocation2 + $0x20] sm:$0xf] %v898
    %901 = vst [vmem:[#allocation2 + $0x24] sm:$0xf] %v899
    %v902 = vld [vmem:[%s2] sm:$0x1]
    %v904 = vperm.slane %v902, 0
    %v906 = vadd.f32 %v781, %v904
    %v907 = vadd.f32 %v782, %v904
    %v908 = vadd.f32 %v783, %v904
    %v909 = vmax.f32 %v906, 0.0
    %v910 = vmax.f32 %v907, 0.0
    %v911 = vmax.f32 %v908, 0.0
    %v912 = vpack.c.bf16 %v909, %v909
    %v913 = vpack.c.bf16 %v910, %v910
    %v914 = vpack.c.bf16 %v911, %v911
    %v918 = vrot.slane %v912, 5
    %v919 = vrot.slane %v918, 4
    %v920 = vrot.slane %v913, 5
    %v921 = vsel %vm818, %v919, %v920
    %v922 = vrot.slane %v920, 4
    %v923 = vrot.slane %v914, 5
    %v924 = vsel %vm818, %v922, %v923
    %927 = vst [vmem:[#allocation2 + $0x28] sm:$0xf] %v921
    %928 = vst [vmem:[#allocation2 + $0x2c] sm:$0xf] %v924
    %v929 = vld [vmem:[%s2] sm:$0x1]
    %v931 = vperm.slane %v929, 0
    %v933 = vadd.f32 %v783, %v931
    %v934 = vadd.f32 %v784, %v931
    %v935 = vadd.f32 %v785, %v931
    %v936 = vmax.f32 %v933, 0.0
    %v937 = vmax.f32 %v934, 0.0
    %v938 = vmax.f32 %v935, 0.0
    %v939 = vpack.c.bf16 %v936, %v936
    %v940 = vpack.c.bf16 %v937, %v937
    %v941 = vpack.c.bf16 %v938, %v938
    %v945 = vrot.slane %v939, 6
    %v946 = vrot.slane %v945, 4
    %v947 = vrot.slane %v940, 6
    %v948 = vsel %vm848, %v946, %v947
    %v949 = vrot.slane %v947, 4
    %v950 = vrot.slane %v941, 6
    %v951 = vsel %vm848, %v949, %v950
    %954 = vst [vmem:[#allocation2 + $0x30] sm:$0xf] %v948
    %955 = vst [vmem:[#allocation2 + $0x34] sm:$0xf] %v951
    %v956 = vld [vmem:[%s2] sm:$0x1]
    %v958 = vperm.slane %v956, 0
    %v960 = vadd.f32 %v785, %v958
    %v961 = vadd.f32 %v786, %v958
    %v962 = vadd.f32 %v787, %v958
    %v963 = vmax.f32 %v960, 0.0
    %v964 = vmax.f32 %v961, 0.0
    %v965 = vmax.f32 %v962, 0.0
    %v966 = vpack.c.bf16 %v963, %v963
    %v967 = vpack.c.bf16 %v964, %v964
    %v968 = vpack.c.bf16 %v965, %v965
    %v972 = vrot.slane %v966, 7
    %v973 = vrot.slane %v972, 4
    %v974 = vrot.slane %v967, 7
    %v975 = vsel %vm878, %v973, %v974
    %v976 = vrot.slane %v974, 4
    %v977 = vrot.slane %v968, 7
    %v978 = vsel %vm878, %v976, %v977
    %981 = vst [vmem:[#allocation2 + $0x38] sm:$0xf] %v975
    %982 = vst [vmem:[#allocation2 + $0x3c] sm:$0xf] %v978
    %v983 = vld [vmem:[#allocation2] sm:$0xf]
    %v984 = vld [vmem:[#allocation2 + $0x4] sm:$0xf]
    %v985 = vld [vmem:[#allocation2 + $0x8] sm:$0xf]
    %v986 = vld [vmem:[#allocation2 + $0xc] sm:$0xf]
    %v987 = vld [vmem:[#allocation2 + $0x10] sm:$0xf]
    %v988 = vld [vmem:[#allocation2 + $0x14] sm:$0xf]
    %v989 = vld [vmem:[#allocation2 + $0x18] sm:$0xf]
    %v990 = vld [vmem:[#allocation2 + $0x1c] sm:$0xf]
    %v991 = vld [vmem:[#allocation2 + $0x20] sm:$0xf]
    %v992 = vld [vmem:[#allocation2 + $0x24] sm:$0x1]
    %v993 = vld [vmem:[%s3] sm:$0xf]
    %v994 = vld [vmem:[%s3 + $0x4] sm:$0xf]
    %v995 = vld [vmem:[%s3 + $0x8] sm:$0xf]
    %v996 = vld [vmem:[%s3 + $0xc] sm:$0xf]
    %v997 = vld [vmem:[%s3 + $0x10] sm:$0xf]
    %v998 = vld [vmem:[%s3 + $0x14] sm:$0xf]
    %v999 = vld [vmem:[%s3 + $0x18] sm:$0xf]
    %v1000 = vld [vmem:[%s3 + $0x1c] sm:$0xf]
    %v1001 = vld [vmem:[%s3 + $0x20] sm:$0xf]
    %v1002 = vld [vmem:[%s3 + $0x24] sm:$0xf]
    %v1003 = vld [vmem:[%s3 + $0x28] sm:$0xf]
    %v1004 = vld [vmem:[%s3 + $0x2c] sm:$0xf]
    %v1005 = vld [vmem:[%s3 + $0x30] sm:$0xf]
    %v1006 = vld [vmem:[%s3 + $0x34] sm:$0xf]
    %v1007 = vld [vmem:[%s3 + $0x38] sm:$0xf]
    %v1008 = vld [vmem:[%s3 + $0x3c] sm:$0xf]
    %v1009 = vld [vmem:[#allocation2] sm:$0xe]
    %v1010 = vld [vmem:[#allocation2 + $0x24] sm:$0x3]
    %s1011 = scalar_lea.vmem %s3, 64
    %v1012 = vld [vmem:[%s1011] sm:$0xf]
    %v1013 = vld [vmem:[%s1011 + $0x4] sm:$0xf]
    %v1014 = vld [vmem:[%s1011 + $0x8] sm:$0xf]
    %v1015 = vld [vmem:[%s1011 + $0xc] sm:$0xf]
    %v1016 = vld [vmem:[%s1011 + $0x10] sm:$0xf]
    %v1017 = vld [vmem:[%s1011 + $0x14] sm:$0xf]
    %v1018 = vld [vmem:[%s1011 + $0x18] sm:$0xf]
    %v1019 = vld [vmem:[%s1011 + $0x1c] sm:$0xf]
    %v1020 = vld [vmem:[%s1011 + $0x20] sm:$0xf]
    %v1021 = vld [vmem:[%s1011 + $0x24] sm:$0xf]
    %v1022 = vld [vmem:[%s1011 + $0x28] sm:$0xf]
    %v1023 = vld [vmem:[%s1011 + $0x2c] sm:$0xf]
    %v1024 = vld [vmem:[%s1011 + $0x30] sm:$0xf]
    %v1025 = vld [vmem:[%s1011 + $0x34] sm:$0xf]
    %v1026 = vld [vmem:[%s1011 + $0x38] sm:$0xf]
    %v1027 = vld [vmem:[%s1011 + $0x3c] sm:$0xf]
    %v1038 = vunpack.c.l.b16 %v1009
    %v1039 = vunpack.c.l.b16 %v984
    %v1040 = vunpack.c.l.b16 %v985
    %v1041 = vunpack.c.l.b16 %v986
    %v1042 = vunpack.c.l.b16 %v987
    %v1043 = vunpack.c.l.b16 %v988
    %v1044 = vunpack.c.l.b16 %v989
    %v1045 = vunpack.c.l.b16 %v990
    %v1046 = vunpack.c.l.b16 %v991
    %v1047 = vunpack.c.l.b16 %v1010
    %v1048 = vpack.c.b16 %v1039, %v1038
    %v1049 = vpack.c.b16 %v1041, %v1040
    %v1050 = vpack.c.b16 %v1043, %v1042
    %v1051 = vpack.c.b16 %v1045, %v1044
    %v1052 = vpack.c.b16 %v1047, %v1046
    %v1053 = vrot.slane %v1048, 1
    %v1054 = vrot.slane %v1049, 1
    %v1055 = vsel %vm122, %v1053, %v1054
    %v1056 = vrot.slane %v1050, 1
    %v1057 = vsel %vm122, %v1054, %v1056
    %v1058 = vrot.slane %v1051, 1
    %v1059 = vsel %vm122, %v1056, %v1058
    %v1060 = vrot.slane %v1052, 1
    %v1061 = vsel %vm122, %v1058, %v1060
    %v1083 = vunpack.c.l.b16 %v1012
    %v1084 = vunpack.c.l.b16 %v1013
    %v1085 = vunpack.c.l.b16 %v1014
    %v1086 = vunpack.c.l.b16 %v1015
    %v1087 = vunpack.c.l.b16 %v1016
    %v1088 = vunpack.c.l.b16 %v1017
    %v1089 = vunpack.c.l.b16 %v1018
    %v1090 = vunpack.c.l.b16 %v1019
    %v1091 = vunpack.c.l.b16 %v1020
    %v1092 = vunpack.c.l.b16 %v1021
    %v1093 = vunpack.c.l.b16 %v1022
    %v1094 = vunpack.c.l.b16 %v1023
    %v1095 = vunpack.c.l.b16 %v1024
    %v1096 = vunpack.c.l.b16 %v1025
    %v1097 = vunpack.c.l.b16 %v1026
    %v1098 = vunpack.c.l.b16 %v1027
    %v1099 = vpack.c.b16 %v1084, %v1083
    %v1100 = vpack.c.b16 %v1086, %v1085
    %v1101 = vpack.c.b16 %v1088, %v1087
    %v1102 = vpack.c.b16 %v1090, %v1089
    %v1103 = vpack.c.b16 %v1092, %v1091
    %v1104 = vpack.c.b16 %v1094, %v1093
    %v1105 = vpack.c.b16 %v1096, %v1095
    %v1106 = vpack.c.b16 %v1098, %v1097
    %1115 = vmatpush.bf16.msra.mxu0 %v1106
    %1116 = vmatpush.bf16.msra.mxu0 %v1105
    %1117 = vmatpush.bf16.msra.mxu0 %v1104
    %1118 = vmatpush.bf16.msra.mxu0 %v1103
    %1119 = vmatpush.bf16.msra.mxu0 %v1102
    %1120 = vmatpush.bf16.msra.mxu0 %v1101
    %1121 = vmatpush.bf16.msra.mxu0 %v1100
    %1122 = vmatpush.bf16.msra.mxu0 %v1099
    %1123 = vmatmul.bf16.gmra.mxu0 %v1055
    %v1124 = vpop.f32.mrf.mxu0
    %v1125 = vadd.f32 0.0, %v1124
    %v1126 = vpop.f32.mrf.mxu0
    %v1127 = vadd.f32 0.0, %v1126
    %1128 = vmatmul.bf16.gmra.mxu0 %v1057
    %v1129 = vpop.f32.mrf.mxu0
    %v1130 = vpop.f32.mrf.mxu0
    %1131 = vmatmul.bf16.gmra.mxu0 %v1059
    %v1132 = vpop.f32.mrf.mxu0
    %v1133 = vadd.f32 0.0, %v1132
    %v1134 = vpop.f32.mrf.mxu0
    %v1135 = vadd.f32 0.0, %v1134
    %1136 = vmatmul.bf16.gmra.mxu0 %v1061
    %v1137 = vpop.f32.mrf.mxu0
    %v1138 = vpop.f32.mrf.mxu0
    %1139 = vmatmul.bf16.gmra.mxu0 %v1060
    %v1140 = vpop.f32.mrf.mxu0
    %v1141 = vadd.f32 0.0, %v1140
    %v1142 = vpop.f32.mrf.mxu0
    %v1143 = vadd.f32 0.0, %v1142
    %1144 = vdwg.mxu0
    %v1147 = vunpack.c.l.b16 %v983
    %v1148 = vunpack.c.l.b16 %v992
    %v1149 = vpack.c.b16 %v1039, %v1147
    %v1150 = vpack.c.b16 %v1148, %v1046
    %v1172 = vunpack.c.l.b16 %v993
    %v1173 = vunpack.c.l.b16 %v994
    %v1174 = vunpack.c.l.b16 %v995
    %v1175 = vunpack.c.l.b16 %v996
    %v1176 = vunpack.c.l.b16 %v997
    %v1177 = vunpack.c.l.b16 %v998
    %v1178 = vunpack.c.l.b16 %v999
    %v1179 = vunpack.c.l.b16 %v1000
    %v1180 = vunpack.c.l.b16 %v1001
    %v1181 = vunpack.c.l.b16 %v1002
    %v1182 = vunpack.c.l.b16 %v1003
    %v1183 = vunpack.c.l.b16 %v1004
    %v1184 = vunpack.c.l.b16 %v1005
    %v1185 = vunpack.c.l.b16 %v1006
    %v1186 = vunpack.c.l.b16 %v1007
    %v1187 = vunpack.c.l.b16 %v1008
    %v1188 = vpack.c.b16 %v1173, %v1172
    %v1189 = vpack.c.b16 %v1175, %v1174
    %v1190 = vpack.c.b16 %v1177, %v1176
    %v1191 = vpack.c.b16 %v1179, %v1178
    %v1192 = vpack.c.b16 %v1181, %v1180
    %v1193 = vpack.c.b16 %v1183, %v1182
    %v1194 = vpack.c.b16 %v1185, %v1184
    %v1195 = vpack.c.b16 %v1187, %v1186
    %1204 = vmatpush.bf16.msra.mxu0 %v1195
    %1205 = vmatpush.bf16.msra.mxu0 %v1194
    %1206 = vmatpush.bf16.msra.mxu0 %v1193
    %1207 = vmatpush.bf16.msra.mxu0 %v1192
    %1208 = vmatpush.bf16.msra.mxu0 %v1191
    %1209 = vmatpush.bf16.msra.mxu0 %v1190
    %1210 = vmatpush.bf16.msra.mxu0 %v1189
    %1211 = vmatpush.bf16.msra.mxu0 %v1188
    %1212 = vmatmul.bf16.gmra.mxu0 %v1149
    %v1213 = vpop.f32.mrf.mxu0
    %v1214 = vadd.f32 %v1125, %v1213
    %v1215 = vpop.f32.mrf.mxu0
    %v1216 = vadd.f32 %v1127, %v1215
    %1217 = vmatmul.bf16.gmra.mxu0 %v1049
    %v1218 = vpop.f32.mrf.mxu0
    %v1219 = vpop.f32.mrf.mxu0
    %1220 = vmatmul.bf16.gmra.mxu0 %v1050
    %v1221 = vpop.f32.mrf.mxu0
    %v1222 = vadd.f32 %v1133, %v1221
    %v1223 = vpop.f32.mrf.mxu0
    %v1224 = vadd.f32 %v1135, %v1223
    %1225 = vmatmul.bf16.gmra.mxu0 %v1051
    %v1226 = vpop.f32.mrf.mxu0
    %v1227 = vpop.f32.mrf.mxu0
    %1228 = vmatmul.bf16.gmra.mxu0 %v1150
    %v1229 = vpop.f32.mrf.mxu0
    %v1230 = vadd.f32 %v1141, %v1229
    %v1231 = vpop.f32.mrf.mxu0
    %v1232 = vadd.f32 %v1143, %v1231
    %1233 = vdwg.mxu0
    %v1234 = vld [vmem:[#allocation2] sm:$0xc]
    %v1235 = vld [vmem:[#allocation2 + $0x24] sm:$0x7]
    %s1236 = scalar_lea.vmem %s3, 128
    %v1237 = vld [vmem:[%s1236] sm:$0xf]
    %v1238 = vld [vmem:[%s1236 + $0x4] sm:$0xf]
    %v1239 = vld [vmem:[%s1236 + $0x8] sm:$0xf]
    %v1240 = vld [vmem:[%s1236 + $0xc] sm:$0xf]
    %v1241 = vld [vmem:[%s1236 + $0x10] sm:$0xf]
    %v1242 = vld [vmem:[%s1236 + $0x14] sm:$0xf]
    %v1243 = vld [vmem:[%s1236 + $0x18] sm:$0xf]
    %v1244 = vld [vmem:[%s1236 + $0x1c] sm:$0xf]
    %v1245 = vld [vmem:[%s1236 + $0x20] sm:$0xf]
    %v1246 = vld [vmem:[%s1236 + $0x24] sm:$0xf]
    %v1247 = vld [vmem:[%s1236 + $0x28] sm:$0xf]
    %v1248 = vld [vmem:[%s1236 + $0x2c] sm:$0xf]
    %v1249 = vld [vmem:[%s1236 + $0x30] sm:$0xf]
    %v1250 = vld [vmem:[%s1236 + $0x34] sm:$0xf]
    %v1251 = vld [vmem:[%s1236 + $0x38] sm:$0xf]
    %v1252 = vld [vmem:[%s1236 + $0x3c] sm:$0xf]
    %v1255 = vunpack.c.l.b16 %v1234
    %v1256 = vunpack.c.l.b16 %v1235
    %v1257 = vpack.c.b16 %v1039, %v1255
    %v1258 = vpack.c.b16 %v1256, %v1046
    %v1259 = vrot.slane %v1257, 2
    %v1260 = vrot.slane %v1049, 2
    %v1261 = vsel %vm645, %v1259, %v1260
    %v1262 = vrot.slane %v1050, 2
    %v1263 = vsel %vm645, %v1260, %v1262
    %v1264 = vrot.slane %v1051, 2
    %v1265 = vsel %vm645, %v1262, %v1264
    %v1266 = vrot.slane %v1258, 2
    %v1267 = vsel %vm645, %v1264, %v1266
    %v1289 = vunpack.c.l.b16 %v1237
    %v1290 = vunpack.c.l.b16 %v1238
    %v1291 = vunpack.c.l.b16 %v1239
    %v1292 = vunpack.c.l.b16 %v1240
    %v1293 = vunpack.c.l.b16 %v1241
    %v1294 = vunpack.c.l.b16 %v1242
    %v1295 = vunpack.c.l.b16 %v1243
    %v1296 = vunpack.c.l.b16 %v1244
    %v1297 = vunpack.c.l.b16 %v1245
    %v1298 = vunpack.c.l.b16 %v1246
    %v1299 = vunpack.c.l.b16 %v1247
    %v1300 = vunpack.c.l.b16 %v1248
    %v1301 = vunpack.c.l.b16 %v1249
    %v1302 = vunpack.c.l.b16 %v1250
    %v1303 = vunpack.c.l.b16 %v1251
    %v1304 = vunpack.c.l.b16 %v1252
    %v1305 = vpack.c.b16 %v1290, %v1289
    %v1306 = vpack.c.b16 %v1292, %v1291
    %v1307 = vpack.c.b16 %v1294, %v1293
    %v1308 = vpack.c.b16 %v1296, %v1295
    %v1309 = vpack.c.b16 %v1298, %v1297
    %v1310 = vpack.c.b16 %v1300, %v1299
    %v1311 = vpack.c.b16 %v1302, %v1301
    %v1312 = vpack.c.b16 %v1304, %v1303
    %1321 = vmatpush.bf16.msra.mxu0 %v1312
    %1322 = vmatpush.bf16.msra.mxu0 %v1311
    %1323 = vmatpush.bf16.msra.mxu0 %v1310
    %1324 = vmatpush.bf16.msra.mxu0 %v1309
    %1325 = vmatpush.bf16.msra.mxu0 %v1308
    %1326 = vmatpush.bf16.msra.mxu0 %v1307
    %1327 = vmatpush.bf16.msra.mxu0 %v1306
    %1328 = vmatpush.bf16.msra.mxu0 %v1305
    %1329 = vmatmul.bf16.gmra.mxu0 %v1261
    %v1330 = vpop.f32.mrf.mxu0
    %v1331 = vadd.f32 0.0, %v1330
    %v1332 = vpop.f32.mrf.mxu0
    %v1333 = vadd.f32 0.0, %v1332
    %1334 = vmatmul.bf16.gmra.mxu0 %v1263
    %v1335 = vpop.f32.mrf.mxu0
    %v1336 = vpop.f32.mrf.mxu0
    %1337 = vmatmul.bf16.gmra.mxu0 %v1265
    %v1338 = vpop.f32.mrf.mxu0
    %v1339 = vadd.f32 0.0, %v1338
    %v1340 = vpop.f32.mrf.mxu0
    %v1341 = vadd.f32 0.0, %v1340
    %1342 = vmatmul.bf16.gmra.mxu0 %v1267
    %v1343 = vpop.f32.mrf.mxu0
    %v1344 = vpop.f32.mrf.mxu0
    %1345 = vmatmul.bf16.gmra.mxu0 %v1266
    %v1346 = vpop.f32.mrf.mxu0
    %v1347 = vadd.f32 0.0, %v1346
    %v1348 = vpop.f32.mrf.mxu0
    %v1349 = vadd.f32 0.0, %v1348
    %1350 = vdwg.mxu0
    %v1351 = vadd.f32 %v1214, %v1331
    %v1352 = vadd.f32 %v1216, %v1333
    %v1353 = vadd.f32 %v1222, %v1339
    %v1354 = vadd.f32 %v1224, %v1341
    %v1355 = vadd.f32 %v1230, %v1347
    %v1356 = vadd.f32 %v1232, %v1349
    %v1357 = vld [vmem:[#allocation2] sm:$0x8]
    %v1358 = vld [vmem:[#allocation2 + $0x24] sm:$0xf]
    %s1359 = scalar_lea.vmem %s3, 192
    %v1360 = vld [vmem:[%s1359] sm:$0xf]
    %v1361 = vld [vmem:[%s1359 + $0x4] sm:$0xf]
    %v1362 = vld [vmem:[%s1359 + $0x8] sm:$0xf]
    %v1363 = vld [vmem:[%s1359 + $0xc] sm:$0xf]
    %v1364 = vld [vmem:[%s1359 + $0x10] sm:$0xf]
    %v1365 = vld [vmem:[%s1359 + $0x14] sm:$0xf]
    %v1366 = vld [vmem:[%s1359 + $0x18] sm:$0xf]
    %v1367 = vld [vmem:[%s1359 + $0x1c] sm:$0xf]
    %v1368 = vld [vmem:[%s1359 + $0x20] sm:$0xf]
    %v1369 = vld [vmem:[%s1359 + $0x24] sm:$0xf]
    %v1370 = vld [vmem:[%s1359 + $0x28] sm:$0xf]
    %v1371 = vld [vmem:[%s1359 + $0x2c] sm:$0xf]
    %v1372 = vld [vmem:[%s1359 + $0x30] sm:$0xf]
    %v1373 = vld [vmem:[%s1359 + $0x34] sm:$0xf]
    %v1374 = vld [vmem:[%s1359 + $0x38] sm:$0xf]
    %v1375 = vld [vmem:[%s1359 + $0x3c] sm:$0xf]
    %v1378 = vunpack.c.l.b16 %v1357
    %v1379 = vunpack.c.l.b16 %v1358
    %v1380 = vpack.c.b16 %v1039, %v1378
    %v1381 = vpack.c.b16 %v1379, %v1046
    %vm1382 = vcmask 1044480
    %v1383 = vrot.slane %v1380, 3
    %v1384 = vrot.slane %v1049, 3
    %v1385 = vsel %vm1382, %v1383, %v1384
    %v1386 = vrot.slane %v1050, 3
    %v1387 = vsel %vm1382, %v1384, %v1386
    %v1388 = vrot.slane %v1051, 3
    %v1389 = vsel %vm1382, %v1386, %v1388
    %v1390 = vrot.slane %v1381, 3
    %v1391 = vsel %vm1382, %v1388, %v1390
    %v1413 = vunpack.c.l.b16 %v1360
    %v1414 = vunpack.c.l.b16 %v1361
    %v1415 = vunpack.c.l.b16 %v1362
    %v1416 = vunpack.c.l.b16 %v1363
    %v1417 = vunpack.c.l.b16 %v1364
    %v1418 = vunpack.c.l.b16 %v1365
    %v1419 = vunpack.c.l.b16 %v1366
    %v1420 = vunpack.c.l.b16 %v1367
    %v1421 = vunpack.c.l.b16 %v1368
    %v1422 = vunpack.c.l.b16 %v1369
    %v1423 = vunpack.c.l.b16 %v1370
    %v1424 = vunpack.c.l.b16 %v1371
    %v1425 = vunpack.c.l.b16 %v1372
    %v1426 = vunpack.c.l.b16 %v1373
    %v1427 = vunpack.c.l.b16 %v1374
    %v1428 = vunpack.c.l.b16 %v1375
    %v1429 = vpack.c.b16 %v1414, %v1413
    %v1430 = vpack.c.b16 %v1416, %v1415
    %v1431 = vpack.c.b16 %v1418, %v1417
    %v1432 = vpack.c.b16 %v1420, %v1419
    %v1433 = vpack.c.b16 %v1422, %v1421
    %v1434 = vpack.c.b16 %v1424, %v1423
    %v1435 = vpack.c.b16 %v1426, %v1425
    %v1436 = vpack.c.b16 %v1428, %v1427
    %1445 = vmatpush.bf16.msra.mxu0 %v1436
    %1446 = vmatpush.bf16.msra.mxu0 %v1435
    %1447 = vmatpush.bf16.msra.mxu0 %v1434
    %1448 = vmatpush.bf16.msra.mxu0 %v1433
    %1449 = vmatpush.bf16.msra.mxu0 %v1432
    %1450 = vmatpush.bf16.msra.mxu0 %v1431
    %1451 = vmatpush.bf16.msra.mxu0 %v1430
    %1452 = vmatpush.bf16.msra.mxu0 %v1429
    %1453 = vmatmul.bf16.gmra.mxu0 %v1385
    %v1454 = vpop.f32.mrf.mxu0
    %v1455 = vadd.f32 0.0, %v1454
    %v1456 = vpop.f32.mrf.mxu0
    %v1457 = vadd.f32 0.0, %v1456
    %1458 = vmatmul.bf16.gmra.mxu0 %v1387
    %v1459 = vpop.f32.mrf.mxu0
    %v1460 = vpop.f32.mrf.mxu0
    %1461 = vmatmul.bf16.gmra.mxu0 %v1389
    %v1462 = vpop.f32.mrf.mxu0
    %v1463 = vadd.f32 0.0, %v1462
    %v1464 = vpop.f32.mrf.mxu0
    %v1465 = vadd.f32 0.0, %v1464
    %1466 = vmatmul.bf16.gmra.mxu0 %v1391
    %v1467 = vpop.f32.mrf.mxu0
    %v1468 = vpop.f32.mrf.mxu0
    %1469 = vmatmul.bf16.gmra.mxu0 %v1390
    %v1470 = vpop.f32.mrf.mxu0
    %v1471 = vadd.f32 0.0, %v1470
    %v1472 = vpop.f32.mrf.mxu0
    %v1473 = vadd.f32 0.0, %v1472
    %1474 = vdwg.mxu0
    %v1475 = vadd.f32 %v1351, %v1455
    %v1476 = vadd.f32 %v1352, %v1457
    %v1477 = vadd.f32 %v1353, %v1463
    %v1478 = vadd.f32 %v1354, %v1465
    %v1479 = vadd.f32 %v1355, %v1471
    %v1480 = vadd.f32 %v1356, %v1473
    %v1481 = vld [vmem:[#allocation2 + $0x8] sm:$0xf]
    %v1482 = vld [vmem:[#allocation2 + $0xc] sm:$0xf]
    %v1483 = vld [vmem:[#allocation2 + $0x10] sm:$0xf]
    %v1484 = vld [vmem:[#allocation2 + $0x14] sm:$0xf]
    %v1485 = vld [vmem:[#allocation2 + $0x18] sm:$0xf]
    %v1486 = vld [vmem:[#allocation2 + $0x1c] sm:$0xf]
    %v1487 = vld [vmem:[#allocation2 + $0x20] sm:$0xf]
    %v1488 = vld [vmem:[#allocation2 + $0x24] sm:$0xf]
    %v1489 = vld [vmem:[#allocation2 + $0x28] sm:$0xf]
    %v1490 = vld [vmem:[#allocation2 + $0x2c] sm:$0x1]
    %s1491 = scalar_lea.vmem %s3, 256
    %v1492 = vld [vmem:[%s1491] sm:$0xf]
    %v1493 = vld [vmem:[%s1491 + $0x4] sm:$0xf]
    %v1494 = vld [vmem:[%s1491 + $0x8] sm:$0xf]
    %v1495 = vld [vmem:[%s1491 + $0xc] sm:$0xf]
    %v1496 = vld [vmem:[%s1491 + $0x10] sm:$0xf]
    %v1497 = vld [vmem:[%s1491 + $0x14] sm:$0xf]
    %v1498 = vld [vmem:[%s1491 + $0x18] sm:$0xf]
    %v1499 = vld [vmem:[%s1491 + $0x1c] sm:$0xf]
    %v1500 = vld [vmem:[%s1491 + $0x20] sm:$0xf]
    %v1501 = vld [vmem:[%s1491 + $0x24] sm:$0xf]
    %v1502 = vld [vmem:[%s1491 + $0x28] sm:$0xf]
    %v1503 = vld [vmem:[%s1491 + $0x2c] sm:$0xf]
    %v1504 = vld [vmem:[%s1491 + $0x30] sm:$0xf]
    %v1505 = vld [vmem:[%s1491 + $0x34] sm:$0xf]
    %v1506 = vld [vmem:[%s1491 + $0x38] sm:$0xf]
    %v1507 = vld [vmem:[%s1491 + $0x3c] sm:$0xf]
    %v1518 = vunpack.c.l.b16 %v1481
    %v1519 = vunpack.c.l.b16 %v1482
    %v1520 = vunpack.c.l.b16 %v1483
    %v1521 = vunpack.c.l.b16 %v1484
    %v1522 = vunpack.c.l.b16 %v1485
    %v1523 = vunpack.c.l.b16 %v1486
    %v1524 = vunpack.c.l.b16 %v1487
    %v1525 = vunpack.c.l.b16 %v1488
    %v1526 = vunpack.c.l.b16 %v1489
    %v1527 = vunpack.c.l.b16 %v1490
    %v1528 = vpack.c.b16 %v1519, %v1518
    %v1529 = vpack.c.b16 %v1521, %v1520
    %v1530 = vpack.c.b16 %v1523, %v1522
    %v1531 = vpack.c.b16 %v1525, %v1524
    %v1532 = vpack.c.b16 %v1527, %v1526
    %v1554 = vunpack.c.l.b16 %v1492
    %v1555 = vunpack.c.l.b16 %v1493
    %v1556 = vunpack.c.l.b16 %v1494
    %v1557 = vunpack.c.l.b16 %v1495
    %v1558 = vunpack.c.l.b16 %v1496
    %v1559 = vunpack.c.l.b16 %v1497
    %v1560 = vunpack.c.l.b16 %v1498
    %v1561 = vunpack.c.l.b16 %v1499
    %v1562 = vunpack.c.l.b16 %v1500
    %v1563 = vunpack.c.l.b16 %v1501
    %v1564 = vunpack.c.l.b16 %v1502
    %v1565 = vunpack.c.l.b16 %v1503
    %v1566 = vunpack.c.l.b16 %v1504
    %v1567 = vunpack.c.l.b16 %v1505
    %v1568 = vunpack.c.l.b16 %v1506
    %v1569 = vunpack.c.l.b16 %v1507
    %v1570 = vpack.c.b16 %v1555, %v1554
    %v1571 = vpack.c.b16 %v1557, %v1556
    %v1572 = vpack.c.b16 %v1559, %v1558
    %v1573 = vpack.c.b16 %v1561, %v1560
    %v1574 = vpack.c.b16 %v1563, %v1562
    %v1575 = vpack.c.b16 %v1565, %v1564
    %v1576 = vpack.c.b16 %v1567, %v1566
    %v1577 = vpack.c.b16 %v1569, %v1568
    %1586 = vmatpush.bf16.msra.mxu0 %v1577
    %1587 = vmatpush.bf16.msra.mxu0 %v1576
    %1588 = vmatpush.bf16.msra.mxu0 %v1575
    %1589 = vmatpush.bf16.msra.mxu0 %v1574
    %1590 = vmatpush.bf16.msra.mxu0 %v1573
    %1591 = vmatpush.bf16.msra.mxu0 %v1572
    %1592 = vmatpush.bf16.msra.mxu0 %v1571
    %1593 = vmatpush.bf16.msra.mxu0 %v1570
    %1594 = vmatmul.bf16.gmra.mxu0 %v1528
    %v1595 = vpop.f32.mrf.mxu0
    %v1596 = vadd.f32 0.0, %v1595
    %v1597 = vpop.f32.mrf.mxu0
    %v1598 = vadd.f32 0.0, %v1597
    %1599 = vmatmul.bf16.gmra.mxu0 %v1529
    %v1600 = vpop.f32.mrf.mxu0
    %v1601 = vpop.f32.mrf.mxu0
    %1602 = vmatmul.bf16.gmra.mxu0 %v1530
    %v1603 = vpop.f32.mrf.mxu0
    %v1604 = vadd.f32 0.0, %v1603
    %v1605 = vpop.f32.mrf.mxu0
    %v1606 = vadd.f32 0.0, %v1605
    %1607 = vmatmul.bf16.gmra.mxu0 %v1531
    %v1608 = vpop.f32.mrf.mxu0
    %v1609 = vpop.f32.mrf.mxu0
    %1610 = vmatmul.bf16.gmra.mxu0 %v1532
    %v1611 = vpop.f32.mrf.mxu0
    %v1612 = vadd.f32 0.0, %v1611
    %v1613 = vpop.f32.mrf.mxu0
    %v1614 = vadd.f32 0.0, %v1613
    %1615 = vdwg.mxu0
    %v1616 = vadd.f32 %v1475, %v1596
    %v1617 = vadd.f32 %v1476, %v1598
    %v1618 = vadd.f32 %v1477, %v1604
    %v1619 = vadd.f32 %v1478, %v1606
    %v1620 = vadd.f32 %v1479, %v1612
    %v1621 = vadd.f32 %v1480, %v1614
    %v1622 = vld [vmem:[#allocation2 + $0x8] sm:$0xe]
    %v1623 = vld [vmem:[#allocation2 + $0x2c] sm:$0x3]
    %s1624 = scalar_lea.vmem %s3, 320
    %v1625 = vld [vmem:[%s1624] sm:$0xf]
    %v1626 = vld [vmem:[%s1624 + $0x4] sm:$0xf]
    %v1627 = vld [vmem:[%s1624 + $0x8] sm:$0xf]
    %v1628 = vld [vmem:[%s1624 + $0xc] sm:$0xf]
    %v1629 = vld [vmem:[%s1624 + $0x10] sm:$0xf]
    %v1630 = vld [vmem:[%s1624 + $0x14] sm:$0xf]
    %v1631 = vld [vmem:[%s1624 + $0x18] sm:$0xf]
    %v1632 = vld [vmem:[%s1624 + $0x1c] sm:$0xf]
    %v1633 = vld [vmem:[%s1624 + $0x20] sm:$0xf]
    %v1634 = vld [vmem:[%s1624 + $0x24] sm:$0xf]
    %v1635 = vld [vmem:[%s1624 + $0x28] sm:$0xf]
    %v1636 = vld [vmem:[%s1624 + $0x2c] sm:$0xf]
    %v1637 = vld [vmem:[%s1624 + $0x30] sm:$0xf]
    %v1638 = vld [vmem:[%s1624 + $0x34] sm:$0xf]
    %v1639 = vld [vmem:[%s1624 + $0x38] sm:$0xf]
    %v1640 = vld [vmem:[%s1624 + $0x3c] sm:$0xf]
    %v1643 = vunpack.c.l.b16 %v1622
    %v1644 = vunpack.c.l.b16 %v1623
    %v1645 = vpack.c.b16 %v1519, %v1643
    %v1646 = vpack.c.b16 %v1644, %v1526
    %v1647 = vrot.slane %v1645, 1
    %v1648 = vrot.slane %v1529, 1
    %v1649 = vsel %vm122, %v1647, %v1648
    %v1650 = vrot.slane %v1530, 1
    %v1651 = vsel %vm122, %v1648, %v1650
    %v1652 = vrot.slane %v1531, 1
    %v1653 = vsel %vm122, %v1650, %v1652
    %v1654 = vrot.slane %v1646, 1
    %v1655 = vsel %vm122, %v1652, %v1654
    %v1677 = vunpack.c.l.b16 %v1625
    %v1678 = vunpack.c.l.b16 %v1626
    %v1679 = vunpack.c.l.b16 %v1627
    %v1680 = vunpack.c.l.b16 %v1628
    %v1681 = vunpack.c.l.b16 %v1629
    %v1682 = vunpack.c.l.b16 %v1630
    %v1683 = vunpack.c.l.b16 %v1631
    %v1684 = vunpack.c.l.b16 %v1632
    %v1685 = vunpack.c.l.b16 %v1633
    %v1686 = vunpack.c.l.b16 %v1634
    %v1687 = vunpack.c.l.b16 %v1635
    %v1688 = vunpack.c.l.b16 %v1636
    %v1689 = vunpack.c.l.b16 %v1637
    %v1690 = vunpack.c.l.b16 %v1638
    %v1691 = vunpack.c.l.b16 %v1639
    %v1692 = vunpack.c.l.b16 %v1640
    %v1693 = vpack.c.b16 %v1678, %v1677
    %v1694 = vpack.c.b16 %v1680, %v1679
    %v1695 = vpack.c.b16 %v1682, %v1681
    %v1696 = vpack.c.b16 %v1684, %v1683
    %v1697 = vpack.c.b16 %v1686, %v1685
    %v1698 = vpack.c.b16 %v1688, %v1687
    %v1699 = vpack.c.b16 %v1690, %v1689
    %v1700 = vpack.c.b16 %v1692, %v1691
    %1709 = vmatpush.bf16.msra.mxu0 %v1700
    %1710 = vmatpush.bf16.msra.mxu0 %v1699
    %1711 = vmatpush.bf16.msra.mxu0 %v1698
    %1712 = vmatpush.bf16.msra.mxu0 %v1697
    %1713 = vmatpush.bf16.msra.mxu0 %v1696
    %1714 = vmatpush.bf16.msra.mxu0 %v1695
    %1715 = vmatpush.bf16.msra.mxu0 %v1694
    %1716 = vmatpush.bf16.msra.mxu0 %v1693
    %1717 = vmatmul.bf16.gmra.mxu0 %v1649
    %v1718 = vpop.f32.mrf.mxu0
    %v1719 = vadd.f32 0.0, %v1718
    %v1720 = vpop.f32.mrf.mxu0
    %v1721 = vadd.f32 0.0, %v1720
    %1722 = vmatmul.bf16.gmra.mxu0 %v1651
    %v1723 = vpop.f32.mrf.mxu0
    %v1724 = vpop.f32.mrf.mxu0
    %1725 = vmatmul.bf16.gmra.mxu0 %v1653
    %v1726 = vpop.f32.mrf.mxu0
    %v1727 = vadd.f32 0.0, %v1726
    %v1728 = vpop.f32.mrf.mxu0
    %v1729 = vadd.f32 0.0, %v1728
    %1730 = vmatmul.bf16.gmra.mxu0 %v1655
    %v1731 = vpop.f32.mrf.mxu0
    %v1732 = vpop.f32.mrf.mxu0
    %1733 = vmatmul.bf16.gmra.mxu0 %v1654
    %v1734 = vpop.f32.mrf.mxu0
    %v1735 = vadd.f32 0.0, %v1734
    %v1736 = vpop.f32.mrf.mxu0
    %v1737 = vadd.f32 0.0, %v1736
    %1738 = vdwg.mxu0
    %v1739 = vadd.f32 %v1616, %v1719
    %v1740 = vadd.f32 %v1617, %v1721
    %v1741 = vadd.f32 %v1618, %v1727
    %v1742 = vadd.f32 %v1619, %v1729
    %v1743 = vadd.f32 %v1620, %v1735
    %v1744 = vadd.f32 %v1621, %v1737
    %v1745 = vld [vmem:[#allocation2 + $0x8] sm:$0xc]
    %v1746 = vld [vmem:[#allocation2 + $0x2c] sm:$0x7]
    %s1747 = scalar_lea.vmem %s3, 384
    %v1748 = vld [vmem:[%s1747] sm:$0xf]
    %v1749 = vld [vmem:[%s1747 + $0x4] sm:$0xf]
    %v1750 = vld [vmem:[%s1747 + $0x8] sm:$0xf]
    %v1751 = vld [vmem:[%s1747 + $0xc] sm:$0xf]
    %v1752 = vld [vmem:[%s1747 + $0x10] sm:$0xf]
    %v1753 = vld [vmem:[%s1747 + $0x14] sm:$0xf]
    %v1754 = vld [vmem:[%s1747 + $0x18] sm:$0xf]
    %v1755 = vld [vmem:[%s1747 + $0x1c] sm:$0xf]
    %v1756 = vld [vmem:[%s1747 + $0x20] sm:$0xf]
    %v1757 = vld [vmem:[%s1747 + $0x24] sm:$0xf]
    %v1758 = vld [vmem:[%s1747 + $0x28] sm:$0xf]
    %v1759 = vld [vmem:[%s1747 + $0x2c] sm:$0xf]
    %v1760 = vld [vmem:[%s1747 + $0x30] sm:$0xf]
    %v1761 = vld [vmem:[%s1747 + $0x34] sm:$0xf]
    %v1762 = vld [vmem:[%s1747 + $0x38] sm:$0xf]
    %v1763 = vld [vmem:[%s1747 + $0x3c] sm:$0xf]
    %v1766 = vunpack.c.l.b16 %v1745
    %v1767 = vunpack.c.l.b16 %v1746
    %v1768 = vpack.c.b16 %v1519, %v1766
    %v1769 = vpack.c.b16 %v1767, %v1526
    %v1770 = vrot.slane %v1768, 2
    %v1771 = vrot.slane %v1529, 2
    %v1772 = vsel %vm645, %v1770, %v1771
    %v1773 = vrot.slane %v1530, 2
    %v1774 = vsel %vm645, %v1771, %v1773
    %v1775 = vrot.slane %v1531, 2
    %v1776 = vsel %vm645, %v1773, %v1775
    %v1777 = vrot.slane %v1769, 2
    %v1778 = vsel %vm645, %v1775, %v1777
    %v1800 = vunpack.c.l.b16 %v1748
    %v1801 = vunpack.c.l.b16 %v1749
    %v1802 = vunpack.c.l.b16 %v1750
    %v1803 = vunpack.c.l.b16 %v1751
    %v1804 = vunpack.c.l.b16 %v1752
    %v1805 = vunpack.c.l.b16 %v1753
    %v1806 = vunpack.c.l.b16 %v1754
    %v1807 = vunpack.c.l.b16 %v1755
    %v1808 = vunpack.c.l.b16 %v1756
    %v1809 = vunpack.c.l.b16 %v1757
    %v1810 = vunpack.c.l.b16 %v1758
    %v1811 = vunpack.c.l.b16 %v1759
    %v1812 = vunpack.c.l.b16 %v1760
    %v1813 = vunpack.c.l.b16 %v1761
    %v1814 = vunpack.c.l.b16 %v1762
    %v1815 = vunpack.c.l.b16 %v1763
    %v1816 = vpack.c.b16 %v1801, %v1800
    %v1817 = vpack.c.b16 %v1803, %v1802
    %v1818 = vpack.c.b16 %v1805, %v1804
    %v1819 = vpack.c.b16 %v1807, %v1806
    %v1820 = vpack.c.b16 %v1809, %v1808
    %v1821 = vpack.c.b16 %v1811, %v1810
    %v1822 = vpack.c.b16 %v1813, %v1812
    %v1823 = vpack.c.b16 %v1815, %v1814
    %1832 = vmatpush.bf16.msra.mxu0 %v1823
    %1833 = vmatpush.bf16.msra.mxu0 %v1822
    %1834 = vmatpush.bf16.msra.mxu0 %v1821
    %1835 = vmatpush.bf16.msra.mxu0 %v1820
    %1836 = vmatpush.bf16.msra.mxu0 %v1819
    %1837 = vmatpush.bf16.msra.mxu0 %v1818
    %1838 = vmatpush.bf16.msra.mxu0 %v1817
    %1839 = vmatpush.bf16.msra.mxu0 %v1816
    %1840 = vmatmul.bf16.gmra.mxu0 %v1772
    %v1841 = vpop.f32.mrf.mxu0
    %v1842 = vadd.f32 0.0, %v1841
    %v1843 = vpop.f32.mrf.mxu0
    %v1844 = vadd.f32 0.0, %v1843
    %1845 = vmatmul.bf16.gmra.mxu0 %v1774
    %v1846 = vpop.f32.mrf.mxu0
    %v1847 = vpop.f32.mrf.mxu0
    %1848 = vmatmul.bf16.gmra.mxu0 %v1776
    %v1849 = vpop.f32.mrf.mxu0
    %v1850 = vadd.f32 0.0, %v1849
    %v1851 = vpop.f32.mrf.mxu0
    %v1852 = vadd.f32 0.0, %v1851
    %1853 = vmatmul.bf16.gmra.mxu0 %v1778
    %v1854 = vpop.f32.mrf.mxu0
    %v1855 = vpop.f32.mrf.mxu0
    %1856 = vmatmul.bf16.gmra.mxu0 %v1777
    %v1857 = vpop.f32.mrf.mxu0
    %v1858 = vadd.f32 0.0, %v1857
    %v1859 = vpop.f32.mrf.mxu0
    %v1860 = vadd.f32 0.0, %v1859
    %1861 = vdwg.mxu0
    %v1862 = vadd.f32 %v1739, %v1842
    %v1863 = vadd.f32 %v1740, %v1844
    %v1864 = vadd.f32 %v1741, %v1850
    %v1865 = vadd.f32 %v1742, %v1852
    %v1866 = vadd.f32 %v1743, %v1858
    %v1867 = vadd.f32 %v1744, %v1860
    %v1868 = vld [vmem:[#allocation2 + $0x8] sm:$0x8]
    %v1869 = vld [vmem:[#allocation2 + $0x2c] sm:$0xf]
    %s1870 = scalar_lea.vmem %s3, 448
    %v1871 = vld [vmem:[%s1870] sm:$0xf]
    %v1872 = vld [vmem:[%s1870 + $0x4] sm:$0xf]
    %v1873 = vld [vmem:[%s1870 + $0x8] sm:$0xf]
    %v1874 = vld [vmem:[%s1870 + $0xc] sm:$0xf]
    %v1875 = vld [vmem:[%s1870 + $0x10] sm:$0xf]
    %v1876 = vld [vmem:[%s1870 + $0x14] sm:$0xf]
    %v1877 = vld [vmem:[%s1870 + $0x18] sm:$0xf]
    %v1878 = vld [vmem:[%s1870 + $0x1c] sm:$0xf]
    %v1879 = vld [vmem:[%s1870 + $0x20] sm:$0xf]
    %v1880 = vld [vmem:[%s1870 + $0x24] sm:$0xf]
    %v1881 = vld [vmem:[%s1870 + $0x28] sm:$0xf]
    %v1882 = vld [vmem:[%s1870 + $0x2c] sm:$0xf]
    %v1883 = vld [vmem:[%s1870 + $0x30] sm:$0xf]
    %v1884 = vld [vmem:[%s1870 + $0x34] sm:$0xf]
    %v1885 = vld [vmem:[%s1870 + $0x38] sm:$0xf]
    %v1886 = vld [vmem:[%s1870 + $0x3c] sm:$0xf]
    %v1889 = vunpack.c.l.b16 %v1868
    %v1890 = vunpack.c.l.b16 %v1869
    %v1891 = vpack.c.b16 %v1519, %v1889
    %v1892 = vpack.c.b16 %v1890, %v1526
    %v1893 = vrot.slane %v1891, 3
    %v1894 = vrot.slane %v1529, 3
    %v1895 = vsel %vm1382, %v1893, %v1894
    %v1896 = vrot.slane %v1530, 3
    %v1897 = vsel %vm1382, %v1894, %v1896
    %v1898 = vrot.slane %v1531, 3
    %v1899 = vsel %vm1382, %v1896, %v1898
    %v1900 = vrot.slane %v1892, 3
    %v1901 = vsel %vm1382, %v1898, %v1900
    %v1923 = vunpack.c.l.b16 %v1871
    %v1924 = vunpack.c.l.b16 %v1872
    %v1925 = vunpack.c.l.b16 %v1873
    %v1926 = vunpack.c.l.b16 %v1874
    %v1927 = vunpack.c.l.b16 %v1875
    %v1928 = vunpack.c.l.b16 %v1876
    %v1929 = vunpack.c.l.b16 %v1877
    %v1930 = vunpack.c.l.b16 %v1878
    %v1931 = vunpack.c.l.b16 %v1879
    %v1932 = vunpack.c.l.b16 %v1880
    %v1933 = vunpack.c.l.b16 %v1881
    %v1934 = vunpack.c.l.b16 %v1882
    %v1935 = vunpack.c.l.b16 %v1883
    %v1936 = vunpack.c.l.b16 %v1884
    %v1937 = vunpack.c.l.b16 %v1885
    %v1938 = vunpack.c.l.b16 %v1886
    %v1939 = vpack.c.b16 %v1924, %v1923
    %v1940 = vpack.c.b16 %v1926, %v1925
    %v1941 = vpack.c.b16 %v1928, %v1927
    %v1942 = vpack.c.b16 %v1930, %v1929
    %v1943 = vpack.c.b16 %v1932, %v1931
    %v1944 = vpack.c.b16 %v1934, %v1933
    %v1945 = vpack.c.b16 %v1936, %v1935
    %v1946 = vpack.c.b16 %v1938, %v1937
    %1955 = vmatpush.bf16.msra.mxu0 %v1946
    %1956 = vmatpush.bf16.msra.mxu0 %v1945
    %1957 = vmatpush.bf16.msra.mxu0 %v1944
    %1958 = vmatpush.bf16.msra.mxu0 %v1943
    %1959 = vmatpush.bf16.msra.mxu0 %v1942
    %1960 = vmatpush.bf16.msra.mxu0 %v1941
    %1961 = vmatpush.bf16.msra.mxu0 %v1940
    %1962 = vmatpush.bf16.msra.mxu0 %v1939
    %1963 = vmatmul.bf16.gmra.mxu0 %v1895
    %v1964 = vpop.f32.mrf.mxu0
    %v1965 = vadd.f32 0.0, %v1964
    %v1966 = vpop.f32.mrf.mxu0
    %v1967 = vadd.f32 0.0, %v1966
    %1968 = vmatmul.bf16.gmra.mxu0 %v1897
    %v1969 = vpop.f32.mrf.mxu0
    %v1970 = vpop.f32.mrf.mxu0
    %1971 = vmatmul.bf16.gmra.mxu0 %v1899
    %v1972 = vpop.f32.mrf.mxu0
    %v1973 = vadd.f32 0.0, %v1972
    %v1974 = vpop.f32.mrf.mxu0
    %v1975 = vadd.f32 0.0, %v1974
    %1976 = vmatmul.bf16.gmra.mxu0 %v1901
    %v1977 = vpop.f32.mrf.mxu0
    %v1978 = vpop.f32.mrf.mxu0
    %1979 = vmatmul.bf16.gmra.mxu0 %v1900
    %v1980 = vpop.f32.mrf.mxu0
    %v1981 = vadd.f32 0.0, %v1980
    %v1982 = vpop.f32.mrf.mxu0
    %v1983 = vadd.f32 0.0, %v1982
    %1984 = vdwg.mxu0
    %v1985 = vadd.f32 %v1862, %v1965
    %v1986 = vadd.f32 %v1863, %v1967
    %v1987 = vadd.f32 %v1864, %v1973
    %v1988 = vadd.f32 %v1865, %v1975
    %v1989 = vadd.f32 %v1866, %v1981
    %v1990 = vadd.f32 %v1867, %v1983
    %v1991 = vld [vmem:[#allocation2 + $0x10] sm:$0xf]
    %v1992 = vld [vmem:[#allocation2 + $0x14] sm:$0xf]
    %v1993 = vld [vmem:[#allocation2 + $0x18] sm:$0xf]
    %v1994 = vld [vmem:[#allocation2 + $0x1c] sm:$0xf]
    %v1995 = vld [vmem:[#allocation2 + $0x20] sm:$0xf]
    %v1996 = vld [vmem:[#allocation2 + $0x24] sm:$0xf]
    %v1997 = vld [vmem:[#allocation2 + $0x28] sm:$0xf]
    %v1998 = vld [vmem:[#allocation2 + $0x2c] sm:$0xf]
    %v1999 = vld [vmem:[#allocation2 + $0x30] sm:$0xf]
    %v2000 = vld [vmem:[#allocation2 + $0x34] sm:$0x1]
    %s2001 = scalar_lea.vmem %s3, 512
    %v2002 = vld [vmem:[%s2001] sm:$0xf]
    %v2003 = vld [vmem:[%s2001 + $0x4] sm:$0xf]
    %v2004 = vld [vmem:[%s2001 + $0x8] sm:$0xf]
    %v2005 = vld [vmem:[%s2001 + $0xc] sm:$0xf]
    %v2006 = vld [vmem:[%s2001 + $0x10] sm:$0xf]
    %v2007 = vld [vmem:[%s2001 + $0x14] sm:$0xf]
    %v2008 = vld [vmem:[%s2001 + $0x18] sm:$0xf]
    %v2009 = vld [vmem:[%s2001 + $0x1c] sm:$0xf]
    %v2010 = vld [vmem:[%s2001 + $0x20] sm:$0xf]
    %v2011 = vld [vmem:[%s2001 + $0x24] sm:$0xf]
    %v2012 = vld [vmem:[%s2001 + $0x28] sm:$0xf]
    %v2013 = vld [vmem:[%s2001 + $0x2c] sm:$0xf]
    %v2014 = vld [vmem:[%s2001 + $0x30] sm:$0xf]
    %v2015 = vld [vmem:[%s2001 + $0x34] sm:$0xf]
    %v2016 = vld [vmem:[%s2001 + $0x38] sm:$0xf]
    %v2017 = vld [vmem:[%s2001 + $0x3c] sm:$0xf]
    %v2028 = vunpack.c.l.b16 %v1991
    %v2029 = vunpack.c.l.b16 %v1992
    %v2030 = vunpack.c.l.b16 %v1993
    %v2031 = vunpack.c.l.b16 %v1994
    %v2032 = vunpack.c.l.b16 %v1995
    %v2033 = vunpack.c.l.b16 %v1996
    %v2034 = vunpack.c.l.b16 %v1997
    %v2035 = vunpack.c.l.b16 %v1998
    %v2036 = vunpack.c.l.b16 %v1999
    %v2037 = vunpack.c.l.b16 %v2000
    %v2038 = vpack.c.b16 %v2029, %v2028
    %v2039 = vpack.c.b16 %v2031, %v2030
    %v2040 = vpack.c.b16 %v2033, %v2032
    %v2041 = vpack.c.b16 %v2035, %v2034
    %v2042 = vpack.c.b16 %v2037, %v2036
    %v2064 = vunpack.c.l.b16 %v2002
    %v2065 = vunpack.c.l.b16 %v2003
    %v2066 = vunpack.c.l.b16 %v2004
    %v2067 = vunpack.c.l.b16 %v2005
    %v2068 = vunpack.c.l.b16 %v2006
    %v2069 = vunpack.c.l.b16 %v2007
    %v2070 = vunpack.c.l.b16 %v2008
    %v2071 = vunpack.c.l.b16 %v2009
    %v2072 = vunpack.c.l.b16 %v2010
    %v2073 = vunpack.c.l.b16 %v2011
    %v2074 = vunpack.c.l.b16 %v2012
    %v2075 = vunpack.c.l.b16 %v2013
    %v2076 = vunpack.c.l.b16 %v2014
    %v2077 = vunpack.c.l.b16 %v2015
    %v2078 = vunpack.c.l.b16 %v2016
    %v2079 = vunpack.c.l.b16 %v2017
    %v2080 = vpack.c.b16 %v2065, %v2064
    %v2081 = vpack.c.b16 %v2067, %v2066
    %v2082 = vpack.c.b16 %v2069, %v2068
    %v2083 = vpack.c.b16 %v2071, %v2070
    %v2084 = vpack.c.b16 %v2073, %v2072
    %v2085 = vpack.c.b16 %v2075, %v2074
    %v2086 = vpack.c.b16 %v2077, %v2076
    %v2087 = vpack.c.b16 %v2079, %v2078
    %2096 = vmatpush.bf16.msra.mxu0 %v2087
    %2097 = vmatpush.bf16.msra.mxu0 %v2086
    %2098 = vmatpush.bf16.msra.mxu0 %v2085
    %2099 = vmatpush.bf16.msra.mxu0 %v2084
    %2100 = vmatpush.bf16.msra.mxu0 %v2083
    %2101 = vmatpush.bf16.msra.mxu0 %v2082
    %2102 = vmatpush.bf16.msra.mxu0 %v2081
    %2103 = vmatpush.bf16.msra.mxu0 %v2080
    %2104 = vmatmul.bf16.gmra.mxu0 %v2038
    %v2105 = vpop.f32.mrf.mxu0
    %v2106 = vadd.f32 0.0, %v2105
    %v2107 = vpop.f32.mrf.mxu0
    %v2108 = vadd.f32 0.0, %v2107
    %2109 = vmatmul.bf16.gmra.mxu0 %v2039
    %v2110 = vpop.f32.mrf.mxu0
    %v2111 = vpop.f32.mrf.mxu0
    %2112 = vmatmul.bf16.gmra.mxu0 %v2040
    %v2113 = vpop.f32.mrf.mxu0
    %v2114 = vadd.f32 0.0, %v2113
    %v2115 = vpop.f32.mrf.mxu0
    %v2116 = vadd.f32 0.0, %v2115
    %2117 = vmatmul.bf16.gmra.mxu0 %v2041
    %v2118 = vpop.f32.mrf.mxu0
    %v2119 = vpop.f32.mrf.mxu0
    %2120 = vmatmul.bf16.gmra.mxu0 %v2042
    %v2121 = vpop.f32.mrf.mxu0
    %v2122 = vadd.f32 0.0, %v2121
    %v2123 = vpop.f32.mrf.mxu0
    %v2124 = vadd.f32 0.0, %v2123
    %2125 = vdwg.mxu0
    %v2126 = vadd.f32 %v1985, %v2106
    %v2127 = vadd.f32 %v1986, %v2108
    %v2128 = vadd.f32 %v1987, %v2114
    %v2129 = vadd.f32 %v1988, %v2116
    %v2130 = vadd.f32 %v1989, %v2122
    %v2131 = vadd.f32 %v1990, %v2124
    %v2132 = vld [vmem:[#allocation2 + $0x10] sm:$0xe]
    %v2133 = vld [vmem:[#allocation2 + $0x34] sm:$0x3]
    %s2134 = scalar_lea.vmem %s3, 576
    %v2135 = vld [vmem:[%s2134] sm:$0xf]
    %v2136 = vld [vmem:[%s2134 + $0x4] sm:$0xf]
    %v2137 = vld [vmem:[%s2134 + $0x8] sm:$0xf]
    %v2138 = vld [vmem:[%s2134 + $0xc] sm:$0xf]
    %v2139 = vld [vmem:[%s2134 + $0x10] sm:$0xf]
    %v2140 = vld [vmem:[%s2134 + $0x14] sm:$0xf]
    %v2141 = vld [vmem:[%s2134 + $0x18] sm:$0xf]
    %v2142 = vld [vmem:[%s2134 + $0x1c] sm:$0xf]
    %v2143 = vld [vmem:[%s2134 + $0x20] sm:$0xf]
    %v2144 = vld [vmem:[%s2134 + $0x24] sm:$0xf]
    %v2145 = vld [vmem:[%s2134 + $0x28] sm:$0xf]
    %v2146 = vld [vmem:[%s2134 + $0x2c] sm:$0xf]
    %v2147 = vld [vmem:[%s2134 + $0x30] sm:$0xf]
    %v2148 = vld [vmem:[%s2134 + $0x34] sm:$0xf]
    %v2149 = vld [vmem:[%s2134 + $0x38] sm:$0xf]
    %v2150 = vld [vmem:[%s2134 + $0x3c] sm:$0xf]
    %v2153 = vunpack.c.l.b16 %v2132
    %v2154 = vunpack.c.l.b16 %v2133
    %v2155 = vpack.c.b16 %v2029, %v2153
    %v2156 = vpack.c.b16 %v2154, %v2036
    %v2157 = vrot.slane %v2155, 1
    %v2158 = vrot.slane %v2039, 1
    %v2159 = vsel %vm122, %v2157, %v2158
    %v2160 = vrot.slane %v2040, 1
    %v2161 = vsel %vm122, %v2158, %v2160
    %v2162 = vrot.slane %v2041, 1
    %v2163 = vsel %vm122, %v2160, %v2162
    %v2164 = vrot.slane %v2156, 1
    %v2165 = vsel %vm122, %v2162, %v2164
    %v2187 = vunpack.c.l.b16 %v2135
    %v2188 = vunpack.c.l.b16 %v2136
    %v2189 = vunpack.c.l.b16 %v2137
    %v2190 = vunpack.c.l.b16 %v2138
    %v2191 = vunpack.c.l.b16 %v2139
    %v2192 = vunpack.c.l.b16 %v2140
    %v2193 = vunpack.c.l.b16 %v2141
    %v2194 = vunpack.c.l.b16 %v2142
    %v2195 = vunpack.c.l.b16 %v2143
    %v2196 = vunpack.c.l.b16 %v2144
    %v2197 = vunpack.c.l.b16 %v2145
    %v2198 = vunpack.c.l.b16 %v2146
    %v2199 = vunpack.c.l.b16 %v2147
    %v2200 = vunpack.c.l.b16 %v2148
    %v2201 = vunpack.c.l.b16 %v2149
    %v2202 = vunpack.c.l.b16 %v2150
    %v2203 = vpack.c.b16 %v2188, %v2187
    %v2204 = vpack.c.b16 %v2190, %v2189
    %v2205 = vpack.c.b16 %v2192, %v2191
    %v2206 = vpack.c.b16 %v2194, %v2193
    %v2207 = vpack.c.b16 %v2196, %v2195
    %v2208 = vpack.c.b16 %v2198, %v2197
    %v2209 = vpack.c.b16 %v2200, %v2199
    %v2210 = vpack.c.b16 %v2202, %v2201
    %2219 = vmatpush.bf16.msra.mxu0 %v2210
    %2220 = vmatpush.bf16.msra.mxu0 %v2209
    %2221 = vmatpush.bf16.msra.mxu0 %v2208
    %2222 = vmatpush.bf16.msra.mxu0 %v2207
    %2223 = vmatpush.bf16.msra.mxu0 %v2206
    %2224 = vmatpush.bf16.msra.mxu0 %v2205
    %2225 = vmatpush.bf16.msra.mxu0 %v2204
    %2226 = vmatpush.bf16.msra.mxu0 %v2203
    %2227 = vmatmul.bf16.gmra.mxu0 %v2159
    %v2228 = vpop.f32.mrf.mxu0
    %v2229 = vadd.f32 0.0, %v2228
    %v2230 = vpop.f32.mrf.mxu0
    %v2231 = vadd.f32 0.0, %v2230
    %2232 = vmatmul.bf16.gmra.mxu0 %v2161
    %v2233 = vpop.f32.mrf.mxu0
    %v2234 = vpop.f32.mrf.mxu0
    %2235 = vmatmul.bf16.gmra.mxu0 %v2163
    %v2236 = vpop.f32.mrf.mxu0
    %v2237 = vadd.f32 0.0, %v2236
    %v2238 = vpop.f32.mrf.mxu0
    %v2239 = vadd.f32 0.0, %v2238
    %2240 = vmatmul.bf16.gmra.mxu0 %v2165
    %v2241 = vpop.f32.mrf.mxu0
    %v2242 = vpop.f32.mrf.mxu0
    %2243 = vmatmul.bf16.gmra.mxu0 %v2164
    %v2244 = vpop.f32.mrf.mxu0
    %v2245 = vadd.f32 0.0, %v2244
    %v2246 = vpop.f32.mrf.mxu0
    %v2247 = vadd.f32 0.0, %v2246
    %2248 = vdwg.mxu0
    %v2249 = vadd.f32 %v2126, %v2229
    %v2250 = vadd.f32 %v2127, %v2231
    %v2251 = vadd.f32 %v2128, %v2237
    %v2252 = vadd.f32 %v2129, %v2239
    %v2253 = vadd.f32 %v2130, %v2245
    %v2254 = vadd.f32 %v2131, %v2247
    %v2255 = vld [vmem:[#allocation2 + $0x10] sm:$0xc]
    %v2256 = vld [vmem:[#allocation2 + $0x34] sm:$0x7]
    %s2257 = scalar_lea.vmem %s3, 640
    %v2258 = vld [vmem:[%s2257] sm:$0xf]
    %v2259 = vld [vmem:[%s2257 + $0x4] sm:$0xf]
    %v2260 = vld [vmem:[%s2257 + $0x8] sm:$0xf]
    %v2261 = vld [vmem:[%s2257 + $0xc] sm:$0xf]
    %v2262 = vld [vmem:[%s2257 + $0x10] sm:$0xf]
    %v2263 = vld [vmem:[%s2257 + $0x14] sm:$0xf]
    %v2264 = vld [vmem:[%s2257 + $0x18] sm:$0xf]
    %v2265 = vld [vmem:[%s2257 + $0x1c] sm:$0xf]
    %v2266 = vld [vmem:[%s2257 + $0x20] sm:$0xf]
    %v2267 = vld [vmem:[%s2257 + $0x24] sm:$0xf]
    %v2268 = vld [vmem:[%s2257 + $0x28] sm:$0xf]
    %v2269 = vld [vmem:[%s2257 + $0x2c] sm:$0xf]
    %v2270 = vld [vmem:[%s2257 + $0x30] sm:$0xf]
    %v2271 = vld [vmem:[%s2257 + $0x34] sm:$0xf]
    %v2272 = vld [vmem:[%s2257 + $0x38] sm:$0xf]
    %v2273 = vld [vmem:[%s2257 + $0x3c] sm:$0xf]
    %v2276 = vunpack.c.l.b16 %v2255
    %v2277 = vunpack.c.l.b16 %v2256
    %v2278 = vpack.c.b16 %v2029, %v2276
    %v2279 = vpack.c.b16 %v2277, %v2036
    %v2280 = vrot.slane %v2278, 2
    %v2281 = vrot.slane %v2039, 2
    %v2282 = vsel %vm645, %v2280, %v2281
    %v2283 = vrot.slane %v2040, 2
    %v2284 = vsel %vm645, %v2281, %v2283
    %v2285 = vrot.slane %v2041, 2
    %v2286 = vsel %vm645, %v2283, %v2285
    %v2287 = vrot.slane %v2279, 2
    %v2288 = vsel %vm645, %v2285, %v2287
    %v2310 = vunpack.c.l.b16 %v2258
    %v2311 = vunpack.c.l.b16 %v2259
    %v2312 = vunpack.c.l.b16 %v2260
    %v2313 = vunpack.c.l.b16 %v2261
    %v2314 = vunpack.c.l.b16 %v2262
    %v2315 = vunpack.c.l.b16 %v2263
    %v2316 = vunpack.c.l.b16 %v2264
    %v2317 = vunpack.c.l.b16 %v2265
    %v2318 = vunpack.c.l.b16 %v2266
    %v2319 = vunpack.c.l.b16 %v2267
    %v2320 = vunpack.c.l.b16 %v2268
    %v2321 = vunpack.c.l.b16 %v2269
    %v2322 = vunpack.c.l.b16 %v2270
    %v2323 = vunpack.c.l.b16 %v2271
    %v2324 = vunpack.c.l.b16 %v2272
    %v2325 = vunpack.c.l.b16 %v2273
    %v2326 = vpack.c.b16 %v2311, %v2310
    %v2327 = vpack.c.b16 %v2313, %v2312
    %v2328 = vpack.c.b16 %v2315, %v2314
    %v2329 = vpack.c.b16 %v2317, %v2316
    %v2330 = vpack.c.b16 %v2319, %v2318
    %v2331 = vpack.c.b16 %v2321, %v2320
    %v2332 = vpack.c.b16 %v2323, %v2322
    %v2333 = vpack.c.b16 %v2325, %v2324
    %2342 = vmatpush.bf16.msra.mxu0 %v2333
    %2343 = vmatpush.bf16.msra.mxu0 %v2332
    %2344 = vmatpush.bf16.msra.mxu0 %v2331
    %2345 = vmatpush.bf16.msra.mxu0 %v2330
    %2346 = vmatpush.bf16.msra.mxu0 %v2329
    %2347 = vmatpush.bf16.msra.mxu0 %v2328
    %2348 = vmatpush.bf16.msra.mxu0 %v2327
    %2349 = vmatpush.bf16.msra.mxu0 %v2326
    %2350 = vmatmul.bf16.gmra.mxu0 %v2282
    %v2351 = vpop.f32.mrf.mxu0
    %v2352 = vadd.f32 0.0, %v2351
    %v2353 = vpop.f32.mrf.mxu0
    %v2354 = vadd.f32 0.0, %v2353
    %2355 = vmatmul.bf16.gmra.mxu0 %v2284
    %v2356 = vpop.f32.mrf.mxu0
    %v2357 = vpop.f32.mrf.mxu0
    %2358 = vmatmul.bf16.gmra.mxu0 %v2286
    %v2359 = vpop.f32.mrf.mxu0
    %v2360 = vadd.f32 0.0, %v2359
    %v2361 = vpop.f32.mrf.mxu0
    %v2362 = vadd.f32 0.0, %v2361
    %2363 = vmatmul.bf16.gmra.mxu0 %v2288
    %v2364 = vpop.f32.mrf.mxu0
    %v2365 = vpop.f32.mrf.mxu0
    %2366 = vmatmul.bf16.gmra.mxu0 %v2287
    %v2367 = vpop.f32.mrf.mxu0
    %v2368 = vadd.f32 0.0, %v2367
    %v2369 = vpop.f32.mrf.mxu0
    %v2370 = vadd.f32 0.0, %v2369
    %2371 = vdwg.mxu0
    %v2372 = vadd.f32 %v2249, %v2352
    %v2373 = vadd.f32 %v2250, %v2354
    %v2374 = vadd.f32 %v2251, %v2360
    %v2375 = vadd.f32 %v2252, %v2362
    %v2376 = vadd.f32 %v2253, %v2368
    %v2377 = vadd.f32 %v2254, %v2370
    %v2378 = vld [vmem:[#allocation2 + $0x10] sm:$0x8]
    %v2379 = vld [vmem:[#allocation2 + $0x34] sm:$0xf]
    %s2380 = scalar_lea.vmem %s3, 704
    %v2381 = vld [vmem:[%s2380] sm:$0xf]
    %v2382 = vld [vmem:[%s2380 + $0x4] sm:$0xf]
    %v2383 = vld [vmem:[%s2380 + $0x8] sm:$0xf]
    %v2384 = vld [vmem:[%s2380 + $0xc] sm:$0xf]
    %v2385 = vld [vmem:[%s2380 + $0x10] sm:$0xf]
    %v2386 = vld [vmem:[%s2380 + $0x14] sm:$0xf]
    %v2387 = vld [vmem:[%s2380 + $0x18] sm:$0xf]
    %v2388 = vld [vmem:[%s2380 + $0x1c] sm:$0xf]
    %v2389 = vld [vmem:[%s2380 + $0x20] sm:$0xf]
    %v2390 = vld [vmem:[%s2380 + $0x24] sm:$0xf]
    %v2391 = vld [vmem:[%s2380 + $0x28] sm:$0xf]
    %v2392 = vld [vmem:[%s2380 + $0x2c] sm:$0xf]
    %v2393 = vld [vmem:[%s2380 + $0x30] sm:$0xf]
    %v2394 = vld [vmem:[%s2380 + $0x34] sm:$0xf]
    %v2395 = vld [vmem:[%s2380 + $0x38] sm:$0xf]
    %v2396 = vld [vmem:[%s2380 + $0x3c] sm:$0xf]
    %v2399 = vunpack.c.l.b16 %v2378
    %v2400 = vunpack.c.l.b16 %v2379
    %v2401 = vpack.c.b16 %v2029, %v2399
    %v2402 = vpack.c.b16 %v2400, %v2036
    %v2403 = vrot.slane %v2401, 3
    %v2404 = vrot.slane %v2039, 3
    %v2405 = vsel %vm1382, %v2403, %v2404
    %v2406 = vrot.slane %v2040, 3
    %v2407 = vsel %vm1382, %v2404, %v2406
    %v2408 = vrot.slane %v2041, 3
    %v2409 = vsel %vm1382, %v2406, %v2408
    %v2410 = vrot.slane %v2402, 3
    %v2411 = vsel %vm1382, %v2408, %v2410
    %v2433 = vunpack.c.l.b16 %v2381
    %v2434 = vunpack.c.l.b16 %v2382
    %v2435 = vunpack.c.l.b16 %v2383
    %v2436 = vunpack.c.l.b16 %v2384
    %v2437 = vunpack.c.l.b16 %v2385
    %v2438 = vunpack.c.l.b16 %v2386
    %v2439 = vunpack.c.l.b16 %v2387
    %v2440 = vunpack.c.l.b16 %v2388
    %v2441 = vunpack.c.l.b16 %v2389
    %v2442 = vunpack.c.l.b16 %v2390
    %v2443 = vunpack.c.l.b16 %v2391
    %v2444 = vunpack.c.l.b16 %v2392
    %v2445 = vunpack.c.l.b16 %v2393
    %v2446 = vunpack.c.l.b16 %v2394
    %v2447 = vunpack.c.l.b16 %v2395
    %v2448 = vunpack.c.l.b16 %v2396
    %v2449 = vpack.c.b16 %v2434, %v2433
    %v2450 = vpack.c.b16 %v2436, %v2435
    %v2451 = vpack.c.b16 %v2438, %v2437
    %v2452 = vpack.c.b16 %v2440, %v2439
    %v2453 = vpack.c.b16 %v2442, %v2441
    %v2454 = vpack.c.b16 %v2444, %v2443
    %v2455 = vpack.c.b16 %v2446, %v2445
    %v2456 = vpack.c.b16 %v2448, %v2447
    %2465 = vmatpush.bf16.msra.mxu0 %v2456
    %2466 = vmatpush.bf16.msra.mxu0 %v2455
    %2467 = vmatpush.bf16.msra.mxu0 %v2454
    %2468 = vmatpush.bf16.msra.mxu0 %v2453
    %2469 = vmatpush.bf16.msra.mxu0 %v2452
    %2470 = vmatpush.bf16.msra.mxu0 %v2451
    %2471 = vmatpush.bf16.msra.mxu0 %v2450
    %2472 = vmatpush.bf16.msra.mxu0 %v2449
    %2473 = vmatmul.bf16.gmra.mxu0 %v2405
    %v2474 = vpop.f32.mrf.mxu0
    %v2475 = vadd.f32 0.0, %v2474
    %v2476 = vpop.f32.mrf.mxu0
    %v2477 = vadd.f32 0.0, %v2476
    %2478 = vmatmul.bf16.gmra.mxu0 %v2407
    %v2479 = vpop.f32.mrf.mxu0
    %v2480 = vpop.f32.mrf.mxu0
    %2481 = vmatmul.bf16.gmra.mxu0 %v2409
    %v2482 = vpop.f32.mrf.mxu0
    %v2483 = vadd.f32 0.0, %v2482
    %v2484 = vpop.f32.mrf.mxu0
    %v2485 = vadd.f32 0.0, %v2484
    %2486 = vmatmul.bf16.gmra.mxu0 %v2411
    %v2487 = vpop.f32.mrf.mxu0
    %v2488 = vpop.f32.mrf.mxu0
    %2489 = vmatmul.bf16.gmra.mxu0 %v2410
    %v2490 = vpop.f32.mrf.mxu0
    %v2491 = vadd.f32 0.0, %v2490
    %v2492 = vpop.f32.mrf.mxu0
    %v2493 = vadd.f32 0.0, %v2492
    %2494 = vdwg.mxu0
    %v2495 = vadd.f32 %v2372, %v2475
    %v2496 = vadd.f32 %v2373, %v2477
    %v2497 = vadd.f32 %v2374, %v2483
    %v2498 = vadd.f32 %v2375, %v2485
    %v2499 = vadd.f32 %v2376, %v2491
    %v2500 = vadd.f32 %v2377, %v2493
    %v2501 = vld [vmem:[#allocation2 + $0x18] sm:$0xf]
    %v2502 = vld [vmem:[#allocation2 + $0x1c] sm:$0xf]
    %v2503 = vld [vmem:[#allocation2 + $0x20] sm:$0xf]
    %v2504 = vld [vmem:[#allocation2 + $0x24] sm:$0xf]
    %v2505 = vld [vmem:[#allocation2 + $0x28] sm:$0xf]
    %v2506 = vld [vmem:[#allocation2 + $0x2c] sm:$0xf]
    %v2507 = vld [vmem:[#allocation2 + $0x30] sm:$0xf]
    %v2508 = vld [vmem:[#allocation2 + $0x34] sm:$0xf]
    %v2509 = vld [vmem:[#allocation2 + $0x38] sm:$0xf]
    %v2510 = vld [vmem:[#allocation2 + $0x3c] sm:$0x1]
    %s2511 = scalar_lea.vmem %s3, 768
    %v2512 = vld [vmem:[%s2511] sm:$0xf]
    %v2513 = vld [vmem:[%s2511 + $0x4] sm:$0xf]
    %v2514 = vld [vmem:[%s2511 + $0x8] sm:$0xf]
    %v2515 = vld [vmem:[%s2511 + $0xc] sm:$0xf]
    %v2516 = vld [vmem:[%s2511 + $0x10] sm:$0xf]
    %v2517 = vld [vmem:[%s2511 + $0x14] sm:$0xf]
    %v2518 = vld [vmem:[%s2511 + $0x18] sm:$0xf]
    %v2519 = vld [vmem:[%s2511 + $0x1c] sm:$0xf]
    %v2520 = vld [vmem:[%s2511 + $0x20] sm:$0xf]
    %v2521 = vld [vmem:[%s2511 + $0x24] sm:$0xf]
    %v2522 = vld [vmem:[%s2511 + $0x28] sm:$0xf]
    %v2523 = vld [vmem:[%s2511 + $0x2c] sm:$0xf]
    %v2524 = vld [vmem:[%s2511 + $0x30] sm:$0xf]
    %v2525 = vld [vmem:[%s2511 + $0x34] sm:$0xf]
    %v2526 = vld [vmem:[%s2511 + $0x38] sm:$0xf]
    %v2527 = vld [vmem:[%s2511 + $0x3c] sm:$0xf]
    %v2538 = vunpack.c.l.b16 %v2501
    %v2539 = vunpack.c.l.b16 %v2502
    %v2540 = vunpack.c.l.b16 %v2503
    %v2541 = vunpack.c.l.b16 %v2504
    %v2542 = vunpack.c.l.b16 %v2505
    %v2543 = vunpack.c.l.b16 %v2506
    %v2544 = vunpack.c.l.b16 %v2507
    %v2545 = vunpack.c.l.b16 %v2508
    %v2546 = vunpack.c.l.b16 %v2509
    %v2547 = vunpack.c.l.b16 %v2510
    %v2548 = vpack.c.b16 %v2539, %v2538
    %v2549 = vpack.c.b16 %v2541, %v2540
    %v2550 = vpack.c.b16 %v2543, %v2542
    %v2551 = vpack.c.b16 %v2545, %v2544
    %v2552 = vpack.c.b16 %v2547, %v2546
    %v2574 = vunpack.c.l.b16 %v2512
    %v2575 = vunpack.c.l.b16 %v2513
    %v2576 = vunpack.c.l.b16 %v2514
    %v2577 = vunpack.c.l.b16 %v2515
    %v2578 = vunpack.c.l.b16 %v2516
    %v2579 = vunpack.c.l.b16 %v2517
    %v2580 = vunpack.c.l.b16 %v2518
    %v2581 = vunpack.c.l.b16 %v2519
    %v2582 = vunpack.c.l.b16 %v2520
    %v2583 = vunpack.c.l.b16 %v2521
    %v2584 = vunpack.c.l.b16 %v2522
    %v2585 = vunpack.c.l.b16 %v2523
    %v2586 = vunpack.c.l.b16 %v2524
    %v2587 = vunpack.c.l.b16 %v2525
    %v2588 = vunpack.c.l.b16 %v2526
    %v2589 = vunpack.c.l.b16 %v2527
    %v2590 = vpack.c.b16 %v2575, %v2574
    %v2591 = vpack.c.b16 %v2577, %v2576
    %v2592 = vpack.c.b16 %v2579, %v2578
    %v2593 = vpack.c.b16 %v2581, %v2580
    %v2594 = vpack.c.b16 %v2583, %v2582
    %v2595 = vpack.c.b16 %v2585, %v2584
    %v2596 = vpack.c.b16 %v2587, %v2586
    %v2597 = vpack.c.b16 %v2589, %v2588
    %2606 = vmatpush.bf16.msra.mxu0 %v2597
    %2607 = vmatpush.bf16.msra.mxu0 %v2596
    %2608 = vmatpush.bf16.msra.mxu0 %v2595
    %2609 = vmatpush.bf16.msra.mxu0 %v2594
    %2610 = vmatpush.bf16.msra.mxu0 %v2593
    %2611 = vmatpush.bf16.msra.mxu0 %v2592
    %2612 = vmatpush.bf16.msra.mxu0 %v2591
    %2613 = vmatpush.bf16.msra.mxu0 %v2590
    %2614 = vmatmul.bf16.gmra.mxu0 %v2548
    %v2615 = vpop.f32.mrf.mxu0
    %v2616 = vadd.f32 0.0, %v2615
    %v2617 = vpop.f32.mrf.mxu0
    %v2618 = vadd.f32 0.0, %v2617
    %2619 = vmatmul.bf16.gmra.mxu0 %v2549
    %v2620 = vpop.f32.mrf.mxu0
    %v2621 = vpop.f32.mrf.mxu0
    %2622 = vmatmul.bf16.gmra.mxu0 %v2550
    %v2623 = vpop.f32.mrf.mxu0
    %v2624 = vadd.f32 0.0, %v2623
    %v2625 = vpop.f32.mrf.mxu0
    %v2626 = vadd.f32 0.0, %v2625
    %2627 = vmatmul.bf16.gmra.mxu0 %v2551
    %v2628 = vpop.f32.mrf.mxu0
    %v2629 = vpop.f32.mrf.mxu0
    %2630 = vmatmul.bf16.gmra.mxu0 %v2552
    %v2631 = vpop.f32.mrf.mxu0
    %v2632 = vadd.f32 0.0, %v2631
    %v2633 = vpop.f32.mrf.mxu0
    %v2634 = vadd.f32 0.0, %v2633
    %2635 = vdwg.mxu0
    %v2636 = vadd.f32 %v2495, %v2616
    %v2637 = vadd.f32 %v2496, %v2618
    %v2638 = vadd.f32 %v2497, %v2624
    %v2639 = vadd.f32 %v2498, %v2626
    %v2640 = vadd.f32 %v2499, %v2632
    %v2641 = vadd.f32 %v2500, %v2634
    %v2642 = vld [vmem:[#allocation2 + $0x18] sm:$0xe]
    %v2643 = vld [vmem:[#allocation2 + $0x3c] sm:$0x3]
    %s2644 = scalar_lea.vmem %s3, 832
    %v2645 = vld [vmem:[%s2644] sm:$0xf]
    %v2646 = vld [vmem:[%s2644 + $0x4] sm:$0xf]
    %v2647 = vld [vmem:[%s2644 + $0x8] sm:$0xf]
    %v2648 = vld [vmem:[%s2644 + $0xc] sm:$0xf]
    %v2649 = vld [vmem:[%s2644 + $0x10] sm:$0xf]
    %v2650 = vld [vmem:[%s2644 + $0x14] sm:$0xf]
    %v2651 = vld [vmem:[%s2644 + $0x18] sm:$0xf]
    %v2652 = vld [vmem:[%s2644 + $0x1c] sm:$0xf]
    %v2653 = vld [vmem:[%s2644 + $0x20] sm:$0xf]
    %v2654 = vld [vmem:[%s2644 + $0x24] sm:$0xf]
    %v2655 = vld [vmem:[%s2644 + $0x28] sm:$0xf]
    %v2656 = vld [vmem:[%s2644 + $0x2c] sm:$0xf]
    %v2657 = vld [vmem:[%s2644 + $0x30] sm:$0xf]
    %v2658 = vld [vmem:[%s2644 + $0x34] sm:$0xf]
    %v2659 = vld [vmem:[%s2644 + $0x38] sm:$0xf]
    %v2660 = vld [vmem:[%s2644 + $0x3c] sm:$0xf]
    %v2663 = vunpack.c.l.b16 %v2642
    %v2664 = vunpack.c.l.b16 %v2643
    %v2665 = vpack.c.b16 %v2539, %v2663
    %v2666 = vpack.c.b16 %v2664, %v2546
    %v2667 = vrot.slane %v2665, 1
    %v2668 = vrot.slane %v2549, 1
    %v2669 = vsel %vm122, %v2667, %v2668
    %v2670 = vrot.slane %v2550, 1
    %v2671 = vsel %vm122, %v2668, %v2670
    %v2672 = vrot.slane %v2551, 1
    %v2673 = vsel %vm122, %v2670, %v2672
    %v2674 = vrot.slane %v2666, 1
    %v2675 = vsel %vm122, %v2672, %v2674
    %v2697 = vunpack.c.l.b16 %v2645
    %v2698 = vunpack.c.l.b16 %v2646
    %v2699 = vunpack.c.l.b16 %v2647
    %v2700 = vunpack.c.l.b16 %v2648
    %v2701 = vunpack.c.l.b16 %v2649
    %v2702 = vunpack.c.l.b16 %v2650
    %v2703 = vunpack.c.l.b16 %v2651
    %v2704 = vunpack.c.l.b16 %v2652
    %v2705 = vunpack.c.l.b16 %v2653
    %v2706 = vunpack.c.l.b16 %v2654
    %v2707 = vunpack.c.l.b16 %v2655
    %v2708 = vunpack.c.l.b16 %v2656
    %v2709 = vunpack.c.l.b16 %v2657
    %v2710 = vunpack.c.l.b16 %v2658
    %v2711 = vunpack.c.l.b16 %v2659
    %v2712 = vunpack.c.l.b16 %v2660
    %v2713 = vpack.c.b16 %v2698, %v2697
    %v2714 = vpack.c.b16 %v2700, %v2699
    %v2715 = vpack.c.b16 %v2702, %v2701
    %v2716 = vpack.c.b16 %v2704, %v2703
    %v2717 = vpack.c.b16 %v2706, %v2705
    %v2718 = vpack.c.b16 %v2708, %v2707
    %v2719 = vpack.c.b16 %v2710, %v2709
    %v2720 = vpack.c.b16 %v2712, %v2711
    %2729 = vmatpush.bf16.msra.mxu0 %v2720
    %2730 = vmatpush.bf16.msra.mxu0 %v2719
    %2731 = vmatpush.bf16.msra.mxu0 %v2718
    %2732 = vmatpush.bf16.msra.mxu0 %v2717
    %2733 = vmatpush.bf16.msra.mxu0 %v2716
    %2734 = vmatpush.bf16.msra.mxu0 %v2715
    %2735 = vmatpush.bf16.msra.mxu0 %v2714
    %2736 = vmatpush.bf16.msra.mxu0 %v2713
    %2737 = vmatmul.bf16.gmra.mxu0 %v2669
    %v2738 = vpop.f32.mrf.mxu0
    %v2739 = vadd.f32 0.0, %v2738
    %v2740 = vpop.f32.mrf.mxu0
    %v2741 = vadd.f32 0.0, %v2740
    %2742 = vmatmul.bf16.gmra.mxu0 %v2671
    %v2743 = vpop.f32.mrf.mxu0
    %v2744 = vpop.f32.mrf.mxu0
    %2745 = vmatmul.bf16.gmra.mxu0 %v2673
    %v2746 = vpop.f32.mrf.mxu0
    %v2747 = vadd.f32 0.0, %v2746
    %v2748 = vpop.f32.mrf.mxu0
    %v2749 = vadd.f32 0.0, %v2748
    %2750 = vmatmul.bf16.gmra.mxu0 %v2675
    %v2751 = vpop.f32.mrf.mxu0
    %v2752 = vpop.f32.mrf.mxu0
    %2753 = vmatmul.bf16.gmra.mxu0 %v2674
    %v2754 = vpop.f32.mrf.mxu0
    %v2755 = vadd.f32 0.0, %v2754
    %v2756 = vpop.f32.mrf.mxu0
    %v2757 = vadd.f32 0.0, %v2756
    %2758 = vdwg.mxu0
    %v2759 = vadd.f32 %v2636, %v2739
    %v2760 = vadd.f32 %v2637, %v2741
    %v2761 = vadd.f32 %v2638, %v2747
    %v2762 = vadd.f32 %v2639, %v2749
    %v2763 = vadd.f32 %v2640, %v2755
    %v2764 = vadd.f32 %v2641, %v2757
    %v2765 = vld [vmem:[#allocation2 + $0x18] sm:$0xc]
    %v2766 = vld [vmem:[#allocation2 + $0x3c] sm:$0x7]
    %s2767 = scalar_lea.vmem %s3, 896
    %v2768 = vld [vmem:[%s2767] sm:$0xf]
    %v2769 = vld [vmem:[%s2767 + $0x4] sm:$0xf]
    %v2770 = vld [vmem:[%s2767 + $0x8] sm:$0xf]
    %v2771 = vld [vmem:[%s2767 + $0xc] sm:$0xf]
    %v2772 = vld [vmem:[%s2767 + $0x10] sm:$0xf]
    %v2773 = vld [vmem:[%s2767 + $0x14] sm:$0xf]
    %v2774 = vld [vmem:[%s2767 + $0x18] sm:$0xf]
    %v2775 = vld [vmem:[%s2767 + $0x1c] sm:$0xf]
    %v2776 = vld [vmem:[%s2767 + $0x20] sm:$0xf]
    %v2777 = vld [vmem:[%s2767 + $0x24] sm:$0xf]
    %v2778 = vld [vmem:[%s2767 + $0x28] sm:$0xf]
    %v2779 = vld [vmem:[%s2767 + $0x2c] sm:$0xf]
    %v2780 = vld [vmem:[%s2767 + $0x30] sm:$0xf]
    %v2781 = vld [vmem:[%s2767 + $0x34] sm:$0xf]
    %v2782 = vld [vmem:[%s2767 + $0x38] sm:$0xf]
    %v2783 = vld [vmem:[%s2767 + $0x3c] sm:$0xf]
    %v2786 = vunpack.c.l.b16 %v2765
    %v2787 = vunpack.c.l.b16 %v2766
    %v2788 = vpack.c.b16 %v2539, %v2786
    %v2789 = vpack.c.b16 %v2787, %v2546
    %v2790 = vrot.slane %v2788, 2
    %v2791 = vrot.slane %v2549, 2
    %v2792 = vsel %vm645, %v2790, %v2791
    %v2793 = vrot.slane %v2550, 2
    %v2794 = vsel %vm645, %v2791, %v2793
    %v2795 = vrot.slane %v2551, 2
    %v2796 = vsel %vm645, %v2793, %v2795
    %v2797 = vrot.slane %v2789, 2
    %v2798 = vsel %vm645, %v2795, %v2797
    %v2820 = vunpack.c.l.b16 %v2768
    %v2821 = vunpack.c.l.b16 %v2769
    %v2822 = vunpack.c.l.b16 %v2770
    %v2823 = vunpack.c.l.b16 %v2771
    %v2824 = vunpack.c.l.b16 %v2772
    %v2825 = vunpack.c.l.b16 %v2773
    %v2826 = vunpack.c.l.b16 %v2774
    %v2827 = vunpack.c.l.b16 %v2775
    %v2828 = vunpack.c.l.b16 %v2776
    %v2829 = vunpack.c.l.b16 %v2777
    %v2830 = vunpack.c.l.b16 %v2778
    %v2831 = vunpack.c.l.b16 %v2779
    %v2832 = vunpack.c.l.b16 %v2780
    %v2833 = vunpack.c.l.b16 %v2781
    %v2834 = vunpack.c.l.b16 %v2782
    %v2835 = vunpack.c.l.b16 %v2783
    %v2836 = vpack.c.b16 %v2821, %v2820
    %v2837 = vpack.c.b16 %v2823, %v2822
    %v2838 = vpack.c.b16 %v2825, %v2824
    %v2839 = vpack.c.b16 %v2827, %v2826
    %v2840 = vpack.c.b16 %v2829, %v2828
    %v2841 = vpack.c.b16 %v2831, %v2830
    %v2842 = vpack.c.b16 %v2833, %v2832
    %v2843 = vpack.c.b16 %v2835, %v2834
    %2852 = vmatpush.bf16.msra.mxu0 %v2843
    %2853 = vmatpush.bf16.msra.mxu0 %v2842
    %2854 = vmatpush.bf16.msra.mxu0 %v2841
    %2855 = vmatpush.bf16.msra.mxu0 %v2840
    %2856 = vmatpush.bf16.msra.mxu0 %v2839
    %2857 = vmatpush.bf16.msra.mxu0 %v2838
    %2858 = vmatpush.bf16.msra.mxu0 %v2837
    %2859 = vmatpush.bf16.msra.mxu0 %v2836
    %2860 = vmatmul.bf16.gmra.mxu0 %v2792
    %v2861 = vpop.f32.mrf.mxu0
    %v2862 = vadd.f32 0.0, %v2861
    %v2863 = vpop.f32.mrf.mxu0
    %v2864 = vadd.f32 0.0, %v2863
    %2865 = vmatmul.bf16.gmra.mxu0 %v2794
    %v2866 = vpop.f32.mrf.mxu0
    %v2867 = vpop.f32.mrf.mxu0
    %2868 = vmatmul.bf16.gmra.mxu0 %v2796
    %v2869 = vpop.f32.mrf.mxu0
    %v2870 = vadd.f32 0.0, %v2869
    %v2871 = vpop.f32.mrf.mxu0
    %v2872 = vadd.f32 0.0, %v2871
    %2873 = vmatmul.bf16.gmra.mxu0 %v2798
    %v2874 = vpop.f32.mrf.mxu0
    %v2875 = vpop.f32.mrf.mxu0
    %2876 = vmatmul.bf16.gmra.mxu0 %v2797
    %v2877 = vpop.f32.mrf.mxu0
    %v2878 = vadd.f32 0.0, %v2877
    %v2879 = vpop.f32.mrf.mxu0
    %v2880 = vadd.f32 0.0, %v2879
    %2881 = vdwg.mxu0
    %v2882 = vadd.f32 %v2759, %v2862
    %v2883 = vadd.f32 %v2760, %v2864
    %v2884 = vadd.f32 %v2761, %v2870
    %v2885 = vadd.f32 %v2762, %v2872
    %v2886 = vadd.f32 %v2763, %v2878
    %v2887 = vadd.f32 %v2764, %v2880
    %v2888 = vld [vmem:[#allocation2 + $0x18] sm:$0x8]
    %v2889 = vld [vmem:[#allocation2 + $0x3c] sm:$0xf]
    %s2890 = scalar_lea.vmem %s3, 960
    %v2891 = vld [vmem:[%s2890] sm:$0xf]
    %v2892 = vld [vmem:[%s2890 + $0x4] sm:$0xf]
    %v2893 = vld [vmem:[%s2890 + $0x8] sm:$0xf]
    %v2894 = vld [vmem:[%s2890 + $0xc] sm:$0xf]
    %v2895 = vld [vmem:[%s2890 + $0x10] sm:$0xf]
    %v2896 = vld [vmem:[%s2890 + $0x14] sm:$0xf]
    %v2897 = vld [vmem:[%s2890 + $0x18] sm:$0xf]
    %v2898 = vld [vmem:[%s2890 + $0x1c] sm:$0xf]
    %v2899 = vld [vmem:[%s2890 + $0x20] sm:$0xf]
    %v2900 = vld [vmem:[%s2890 + $0x24] sm:$0xf]
    %v2901 = vld [vmem:[%s2890 + $0x28] sm:$0xf]
    %v2902 = vld [vmem:[%s2890 + $0x2c] sm:$0xf]
    %v2903 = vld [vmem:[%s2890 + $0x30] sm:$0xf]
    %v2904 = vld [vmem:[%s2890 + $0x34] sm:$0xf]
    %v2905 = vld [vmem:[%s2890 + $0x38] sm:$0xf]
    %v2906 = vld [vmem:[%s2890 + $0x3c] sm:$0xf]
    %v2909 = vunpack.c.l.b16 %v2888
    %v2910 = vunpack.c.l.b16 %v2889
    %v2911 = vpack.c.b16 %v2539, %v2909
    %v2912 = vpack.c.b16 %v2910, %v2546
    %v2913 = vrot.slane %v2911, 3
    %v2914 = vrot.slane %v2549, 3
    %v2915 = vsel %vm1382, %v2913, %v2914
    %v2916 = vrot.slane %v2550, 3
    %v2917 = vsel %vm1382, %v2914, %v2916
    %v2918 = vrot.slane %v2551, 3
    %v2919 = vsel %vm1382, %v2916, %v2918
    %v2920 = vrot.slane %v2912, 3
    %v2921 = vsel %vm1382, %v2918, %v2920
    %v2943 = vunpack.c.l.b16 %v2891
    %v2944 = vunpack.c.l.b16 %v2892
    %v2945 = vunpack.c.l.b16 %v2893
    %v2946 = vunpack.c.l.b16 %v2894
    %v2947 = vunpack.c.l.b16 %v2895
    %v2948 = vunpack.c.l.b16 %v2896
    %v2949 = vunpack.c.l.b16 %v2897
    %v2950 = vunpack.c.l.b16 %v2898
    %v2951 = vunpack.c.l.b16 %v2899
    %v2952 = vunpack.c.l.b16 %v2900
    %v2953 = vunpack.c.l.b16 %v2901
    %v2954 = vunpack.c.l.b16 %v2902
    %v2955 = vunpack.c.l.b16 %v2903
    %v2956 = vunpack.c.l.b16 %v2904
    %v2957 = vunpack.c.l.b16 %v2905
    %v2958 = vunpack.c.l.b16 %v2906
    %v2959 = vpack.c.b16 %v2944, %v2943
    %v2960 = vpack.c.b16 %v2946, %v2945
    %v2961 = vpack.c.b16 %v2948, %v2947
    %v2962 = vpack.c.b16 %v2950, %v2949
    %v2963 = vpack.c.b16 %v2952, %v2951
    %v2964 = vpack.c.b16 %v2954, %v2953
    %v2965 = vpack.c.b16 %v2956, %v2955
    %v2966 = vpack.c.b16 %v2958, %v2957
    %2975 = vmatpush.bf16.msra.mxu0 %v2966
    %2976 = vmatpush.bf16.msra.mxu0 %v2965
    %2977 = vmatpush.bf16.msra.mxu0 %v2964
    %2978 = vmatpush.bf16.msra.mxu0 %v2963
    %2979 = vmatpush.bf16.msra.mxu0 %v2962
    %2980 = vmatpush.bf16.msra.mxu0 %v2961
    %2981 = vmatpush.bf16.msra.mxu0 %v2960
    %2982 = vmatpush.bf16.msra.mxu0 %v2959
    %2983 = vmatmul.bf16.gmra.mxu0 %v2915
    %v2984 = vpop.f32.mrf.mxu0
    %v2985 = vadd.f32 0.0, %v2984
    %v2986 = vpop.f32.mrf.mxu0
    %v2987 = vadd.f32 0.0, %v2986
    %2988 = vmatmul.bf16.gmra.mxu0 %v2917
    %v2989 = vpop.f32.mrf.mxu0
    %v2990 = vpop.f32.mrf.mxu0
    %2991 = vmatmul.bf16.gmra.mxu0 %v2919
    %v2992 = vpop.f32.mrf.mxu0
    %v2993 = vadd.f32 0.0, %v2992
    %v2994 = vpop.f32.mrf.mxu0
    %v2995 = vadd.f32 0.0, %v2994
    %2996 = vmatmul.bf16.gmra.mxu0 %v2921
    %v2997 = vpop.f32.mrf.mxu0
    %v2998 = vpop.f32.mrf.mxu0
    %2999 = vmatmul.bf16.gmra.mxu0 %v2920
    %v3000 = vpop.f32.mrf.mxu0
    %v3001 = vadd.f32 0.0, %v3000
    %v3002 = vpop.f32.mrf.mxu0
    %v3003 = vadd.f32 0.0, %v3002
    %3004 = vdwg.mxu0
    %v3005 = vadd.f32 %v2882, %v2985
    %v3006 = vadd.f32 %v2883, %v2987
    %v3007 = vadd.f32 %v2884, %v2993
    %v3008 = vadd.f32 %v2885, %v2995
    %v3009 = vadd.f32 %v2886, %v3001
    %v3010 = vadd.f32 %v2887, %v3003
    %v3011 = vld [vmem:[%s4] sm:$0x1]
    %v3013 = vperm.slane %v3011, 0
    %v3015 = vadd.f32 %v3005, %v3013
    %v3016 = vmax.f32 %v3015, 0.0
    %v3017 = vpack.c.bf16 %v3016, %v3016
    %3018 = vst [vmem:[#allocation3] sm:$0x1] %v3017
    %v3019 = vld [vmem:[%s4] sm:$0x1]
    %v3021 = vperm.slane %v3019, 0
    %v3023 = vadd.f32 %v3005, %v3021
    %v3024 = vmax.f32 %v3023, 0.0
    %v3025 = vpack.c.bf16 %v3024, %v3024
    %v3027 = vrot.slane %v3025, 5
    %v3028 = vrot.slane %v3027, 4
    %3030 = vst [vmem:[#allocation3] sm:$0x2] %v3028
    %v3031 = vld [vmem:[%s4] sm:$0x1]
    %v3033 = vperm.slane %v3031, 0
    %v3035 = vadd.f32 %v3006, %v3033
    %v3036 = vmax.f32 %v3035, 0.0
    %v3037 = vpack.c.bf16 %v3036, %v3036
    %v3039 = vrot.slane %v3037, 6
    %3041 = vst [vmem:[#allocation3] sm:$0x4] %v3039
    %v3042 = vld [vmem:[%s4] sm:$0x1]
    %v3044 = vperm.slane %v3042, 0
    %v3046 = vadd.f32 %v3007, %v3044
    %v3047 = vmax.f32 %v3046, 0.0
    %v3048 = vpack.c.bf16 %v3047, %v3047
    %v3050 = vrot.slane %v3048, 5
    %3052 = vst [vmem:[#allocation3] sm:$0x8] %v3050
    %v3053 = vld [vmem:[%s4] sm:$0x1]
    %v3055 = vperm.slane %v3053, 0
    %v3057 = vadd.f32 %v3007, %v3055
    %v3058 = vmax.f32 %v3057, 0.0
    %v3059 = vpack.c.bf16 %v3058, %v3058
    %v3061 = vrot.slane %v3059, 6
    %v3062 = vrot.slane %v3061, 4
    %3064 = vst [vmem:[#allocation3 + $0x4] sm:$0x1] %v3062
    %v3065 = vld [vmem:[%s4] sm:$0x1]
    %v3067 = vperm.slane %v3065, 0
    %v3069 = vadd.f32 %v3008, %v3067
    %v3070 = vmax.f32 %v3069, 0.0
    %v3071 = vpack.c.bf16 %v3070, %v3070
    %v3073 = vrot.slane %v3071, 7
    %3075 = vst [vmem:[#allocation3 + $0x4] sm:$0x2] %v3073
    %v3076 = vld [vmem:[%s4] sm:$0x1]
    %v3078 = vperm.slane %v3076, 0
    %v3080 = vadd.f32 %v3009, %v3078
    %v3081 = vmax.f32 %v3080, 0.0
    %v3082 = vpack.c.bf16 %v3081, %v3081
    %v3084 = vrot.slane %v3082, 6
    %3086 = vst [vmem:[#allocation3 + $0x4] sm:$0x4] %v3084
    %v3087 = vld [vmem:[%s4] sm:$0x1]
    %v3089 = vperm.slane %v3087, 0
    %v3091 = vadd.f32 %v3009, %v3089
    %v3092 = vmax.f32 %v3091, 0.0
    %v3093 = vpack.c.bf16 %v3092, %v3092
    %v3095 = vrot.slane %v3093, 7
    %3097 = vst [vmem:[#allocation3 + $0x4] sm:$0x8] %v3095
    %v3098 = vld [vmem:[%s4] sm:$0x1]
    %v3100 = vperm.slane %v3098, 0
    %v3102 = vadd.f32 %v3010, %v3100
    %v3103 = vmax.f32 %v3102, 0.0
    %v3104 = vpack.c.bf16 %v3103, %v3103
    %3105 = vst [vmem:[#allocation3 + $0x8] sm:$0x1] %v3104
    %v3106 = vld [vmem:[#allocation3] sm:$0x1]
    %v3107 = vld [vmem:[%s5] sm:$0xf]
    %v3108 = vld [vmem:[%s5 + $0x4] sm:$0xf]
    %v3109 = vld [vmem:[%s5 + $0x8] sm:$0xf]
    %v3110 = vld [vmem:[%s5 + $0xc] sm:$0xf]
    %v3111 = vld [vmem:[%s5 + $0x10] sm:$0xf]
    %v3112 = vld [vmem:[%s5 + $0x14] sm:$0xf]
    %v3113 = vld [vmem:[%s5 + $0x18] sm:$0xf]
    %v3114 = vld [vmem:[%s5 + $0x1c] sm:$0xf]
    %v3115 = vld [vmem:[%s5 + $0x20] sm:$0xf]
    %v3116 = vld [vmem:[%s5 + $0x24] sm:$0xf]
    %v3117 = vld [vmem:[%s5 + $0x28] sm:$0xf]
    %v3118 = vld [vmem:[%s5 + $0x2c] sm:$0xf]
    %v3119 = vld [vmem:[%s5 + $0x30] sm:$0xf]
    %v3120 = vld [vmem:[%s5 + $0x34] sm:$0xf]
    %v3121 = vld [vmem:[%s5 + $0x38] sm:$0xf]
    %v3122 = vld [vmem:[%s5 + $0x3c] sm:$0xf]
    %v3123 = vld [vmem:[#allocation3] sm:$0x2]
    %s3124 = scalar_lea.vmem %s5, 64
    %v3125 = vld [vmem:[%s3124] sm:$0xf]
    %v3126 = vld [vmem:[%s3124 + $0x4] sm:$0xf]
    %v3127 = vld [vmem:[%s3124 + $0x8] sm:$0xf]
    %v3128 = vld [vmem:[%s3124 + $0xc] sm:$0xf]
    %v3129 = vld [vmem:[%s3124 + $0x10] sm:$0xf]
    %v3130 = vld [vmem:[%s3124 + $0x14] sm:$0xf]
    %v3131 = vld [vmem:[%s3124 + $0x18] sm:$0xf]
    %v3132 = vld [vmem:[%s3124 + $0x1c] sm:$0xf]
    %v3133 = vld [vmem:[%s3124 + $0x20] sm:$0xf]
    %v3134 = vld [vmem:[%s3124 + $0x24] sm:$0xf]
    %v3135 = vld [vmem:[%s3124 + $0x28] sm:$0xf]
    %v3136 = vld [vmem:[%s3124 + $0x2c] sm:$0xf]
    %v3137 = vld [vmem:[%s3124 + $0x30] sm:$0xf]
    %v3138 = vld [vmem:[%s3124 + $0x34] sm:$0xf]
    %v3139 = vld [vmem:[%s3124 + $0x38] sm:$0xf]
    %v3140 = vld [vmem:[%s3124 + $0x3c] sm:$0xf]
    %v3142 = vunpack.c.l.b16 %v3123
    %v3143 = vpack.c.b16 %v3142, %v3142
    %v3144 = vrot.slane %v3143, 1
    %v3162 = vunpack.c.l.b16 %v3125
    %v3163 = vunpack.c.l.b16 %v3126
    %v3164 = vunpack.c.l.b16 %v3127
    %v3165 = vunpack.c.l.b16 %v3128
    %v3166 = vunpack.c.l.b16 %v3129
    %v3167 = vunpack.c.l.b16 %v3130
    %v3168 = vunpack.c.l.b16 %v3131
    %v3169 = vunpack.c.l.b16 %v3132
    %v3170 = vunpack.c.l.b16 %v3133
    %v3171 = vunpack.c.l.b16 %v3134
    %v3172 = vunpack.c.l.b16 %v3135
    %v3173 = vunpack.c.l.b16 %v3136
    %v3174 = vunpack.c.l.b16 %v3137
    %v3175 = vunpack.c.l.b16 %v3138
    %v3176 = vunpack.c.l.b16 %v3139
    %v3177 = vunpack.c.l.b16 %v3140
    %v3178 = vpack.c.b16 %v3163, %v3162
    %v3179 = vpack.c.b16 %v3165, %v3164
    %v3180 = vpack.c.b16 %v3167, %v3166
    %v3181 = vpack.c.b16 %v3169, %v3168
    %v3182 = vpack.c.b16 %v3171, %v3170
    %v3183 = vpack.c.b16 %v3173, %v3172
    %v3184 = vpack.c.b16 %v3175, %v3174
    %v3185 = vpack.c.b16 %v3177, %v3176
    %3194 = vmatpush.bf16.msra.mxu0 %v3185
    %3195 = vmatpush.bf16.msra.mxu0 %v3184
    %3196 = vmatpush.bf16.msra.mxu0 %v3183
    %3197 = vmatpush.bf16.msra.mxu0 %v3182
    %3198 = vmatpush.bf16.msra.mxu0 %v3181
    %3199 = vmatpush.bf16.msra.mxu0 %v3180
    %3200 = vmatpush.bf16.msra.mxu0 %v3179
    %3201 = vmatpush.bf16.msra.mxu0 %v3178
    %3202 = vmatmul.bf16.gmra.mxu0 %v3144
    %v3203 = vpop.f32.mrf.mxu0
    %v3204 = vadd.f32 0.0, %v3203
    %v3205 = vpop.f32.mrf.mxu0
    %3206 = vdwg.mxu0
    %v3223 = vunpack.c.l.b16 %v3107
    %v3224 = vunpack.c.l.b16 %v3108
    %v3225 = vunpack.c.l.b16 %v3109
    %v3226 = vunpack.c.l.b16 %v3110
    %v3227 = vunpack.c.l.b16 %v3111
    %v3228 = vunpack.c.l.b16 %v3112
    %v3229 = vunpack.c.l.b16 %v3113
    %v3230 = vunpack.c.l.b16 %v3114
    %v3231 = vunpack.c.l.b16 %v3115
    %v3232 = vunpack.c.l.b16 %v3116
    %v3233 = vunpack.c.l.b16 %v3117
    %v3234 = vunpack.c.l.b16 %v3118
    %v3235 = vunpack.c.l.b16 %v3119
    %v3236 = vunpack.c.l.b16 %v3120
    %v3237 = vunpack.c.l.b16 %v3121
    %v3238 = vunpack.c.l.b16 %v3122
    %v3239 = vpack.c.b16 %v3224, %v3223
    %v3240 = vpack.c.b16 %v3226, %v3225
    %v3241 = vpack.c.b16 %v3228, %v3227
    %v3242 = vpack.c.b16 %v3230, %v3229
    %v3243 = vpack.c.b16 %v3232, %v3231
    %v3244 = vpack.c.b16 %v3234, %v3233
    %v3245 = vpack.c.b16 %v3236, %v3235
    %v3246 = vpack.c.b16 %v3238, %v3237
    %3255 = vmatpush.bf16.msra.mxu0 %v3246
    %3256 = vmatpush.bf16.msra.mxu0 %v3245
    %3257 = vmatpush.bf16.msra.mxu0 %v3244
    %3258 = vmatpush.bf16.msra.mxu0 %v3243
    %3259 = vmatpush.bf16.msra.mxu0 %v3242
    %3260 = vmatpush.bf16.msra.mxu0 %v3241
    %3261 = vmatpush.bf16.msra.mxu0 %v3240
    %3262 = vmatpush.bf16.msra.mxu0 %v3239
    %3263 = vmatmul.bf16.gmra.mxu0 %v3106
    %v3264 = vpop.f32.mrf.mxu0
    %v3265 = vadd.f32 %v3204, %v3264
    %v3266 = vpop.f32.mrf.mxu0
    %3267 = vdwg.mxu0
    %v3268 = vld [vmem:[#allocation3] sm:$0x4]
    %s3269 = scalar_lea.vmem %s5, 128
    %v3270 = vld [vmem:[%s3269] sm:$0xf]
    %v3271 = vld [vmem:[%s3269 + $0x4] sm:$0xf]
    %v3272 = vld [vmem:[%s3269 + $0x8] sm:$0xf]
    %v3273 = vld [vmem:[%s3269 + $0xc] sm:$0xf]
    %v3274 = vld [vmem:[%s3269 + $0x10] sm:$0xf]
    %v3275 = vld [vmem:[%s3269 + $0x14] sm:$0xf]
    %v3276 = vld [vmem:[%s3269 + $0x18] sm:$0xf]
    %v3277 = vld [vmem:[%s3269 + $0x1c] sm:$0xf]
    %v3278 = vld [vmem:[%s3269 + $0x20] sm:$0xf]
    %v3279 = vld [vmem:[%s3269 + $0x24] sm:$0xf]
    %v3280 = vld [vmem:[%s3269 + $0x28] sm:$0xf]
    %v3281 = vld [vmem:[%s3269 + $0x2c] sm:$0xf]
    %v3282 = vld [vmem:[%s3269 + $0x30] sm:$0xf]
    %v3283 = vld [vmem:[%s3269 + $0x34] sm:$0xf]
    %v3284 = vld [vmem:[%s3269 + $0x38] sm:$0xf]
    %v3285 = vld [vmem:[%s3269 + $0x3c] sm:$0xf]
    %v3287 = vunpack.c.l.b16 %v3268
    %v3288 = vpack.c.b16 %v3287, %v3287
    %v3289 = vrot.slane %v3288, 2
    %v3307 = vunpack.c.l.b16 %v3270
    %v3308 = vunpack.c.l.b16 %v3271
    %v3309 = vunpack.c.l.b16 %v3272
    %v3310 = vunpack.c.l.b16 %v3273
    %v3311 = vunpack.c.l.b16 %v3274
    %v3312 = vunpack.c.l.b16 %v3275
    %v3313 = vunpack.c.l.b16 %v3276
    %v3314 = vunpack.c.l.b16 %v3277
    %v3315 = vunpack.c.l.b16 %v3278
    %v3316 = vunpack.c.l.b16 %v3279
    %v3317 = vunpack.c.l.b16 %v3280
    %v3318 = vunpack.c.l.b16 %v3281
    %v3319 = vunpack.c.l.b16 %v3282
    %v3320 = vunpack.c.l.b16 %v3283
    %v3321 = vunpack.c.l.b16 %v3284
    %v3322 = vunpack.c.l.b16 %v3285
    %v3323 = vpack.c.b16 %v3308, %v3307
    %v3324 = vpack.c.b16 %v3310, %v3309
    %v3325 = vpack.c.b16 %v3312, %v3311
    %v3326 = vpack.c.b16 %v3314, %v3313
    %v3327 = vpack.c.b16 %v3316, %v3315
    %v3328 = vpack.c.b16 %v3318, %v3317
    %v3329 = vpack.c.b16 %v3320, %v3319
    %v3330 = vpack.c.b16 %v3322, %v3321
    %3339 = vmatpush.bf16.msra.mxu0 %v3330
    %3340 = vmatpush.bf16.msra.mxu0 %v3329
    %3341 = vmatpush.bf16.msra.mxu0 %v3328
    %3342 = vmatpush.bf16.msra.mxu0 %v3327
    %3343 = vmatpush.bf16.msra.mxu0 %v3326
    %3344 = vmatpush.bf16.msra.mxu0 %v3325
    %3345 = vmatpush.bf16.msra.mxu0 %v3324
    %3346 = vmatpush.bf16.msra.mxu0 %v3323
    %3347 = vmatmul.bf16.gmra.mxu0 %v3289
    %v3348 = vpop.f32.mrf.mxu0
    %v3349 = vadd.f32 0.0, %v3348
    %v3350 = vpop.f32.mrf.mxu0
    %3351 = vdwg.mxu0
    %v3352 = vadd.f32 %v3265, %v3349
    %v3353 = vld [vmem:[#allocation3] sm:$0x8]
    %s3354 = scalar_lea.vmem %s5, 192
    %v3355 = vld [vmem:[%s3354] sm:$0xf]
    %v3356 = vld [vmem:[%s3354 + $0x4] sm:$0xf]
    %v3357 = vld [vmem:[%s3354 + $0x8] sm:$0xf]
    %v3358 = vld [vmem:[%s3354 + $0xc] sm:$0xf]
    %v3359 = vld [vmem:[%s3354 + $0x10] sm:$0xf]
    %v3360 = vld [vmem:[%s3354 + $0x14] sm:$0xf]
    %v3361 = vld [vmem:[%s3354 + $0x18] sm:$0xf]
    %v3362 = vld [vmem:[%s3354 + $0x1c] sm:$0xf]
    %v3363 = vld [vmem:[%s3354 + $0x20] sm:$0xf]
    %v3364 = vld [vmem:[%s3354 + $0x24] sm:$0xf]
    %v3365 = vld [vmem:[%s3354 + $0x28] sm:$0xf]
    %v3366 = vld [vmem:[%s3354 + $0x2c] sm:$0xf]
    %v3367 = vld [vmem:[%s3354 + $0x30] sm:$0xf]
    %v3368 = vld [vmem:[%s3354 + $0x34] sm:$0xf]
    %v3369 = vld [vmem:[%s3354 + $0x38] sm:$0xf]
    %v3370 = vld [vmem:[%s3354 + $0x3c] sm:$0xf]
    %v3372 = vunpack.c.l.b16 %v3353
    %v3373 = vpack.c.b16 %v3372, %v3372
    %v3374 = vrot.slane %v3373, 3
    %v3392 = vunpack.c.l.b16 %v3355
    %v3393 = vunpack.c.l.b16 %v3356
    %v3394 = vunpack.c.l.b16 %v3357
    %v3395 = vunpack.c.l.b16 %v3358
    %v3396 = vunpack.c.l.b16 %v3359
    %v3397 = vunpack.c.l.b16 %v3360
    %v3398 = vunpack.c.l.b16 %v3361
    %v3399 = vunpack.c.l.b16 %v3362
    %v3400 = vunpack.c.l.b16 %v3363
    %v3401 = vunpack.c.l.b16 %v3364
    %v3402 = vunpack.c.l.b16 %v3365
    %v3403 = vunpack.c.l.b16 %v3366
    %v3404 = vunpack.c.l.b16 %v3367
    %v3405 = vunpack.c.l.b16 %v3368
    %v3406 = vunpack.c.l.b16 %v3369
    %v3407 = vunpack.c.l.b16 %v3370
    %v3408 = vpack.c.b16 %v3393, %v3392
    %v3409 = vpack.c.b16 %v3395, %v3394
    %v3410 = vpack.c.b16 %v3397, %v3396
    %v3411 = vpack.c.b16 %v3399, %v3398
    %v3412 = vpack.c.b16 %v3401, %v3400
    %v3413 = vpack.c.b16 %v3403, %v3402
    %v3414 = vpack.c.b16 %v3405, %v3404
    %v3415 = vpack.c.b16 %v3407, %v3406
    %3424 = vmatpush.bf16.msra.mxu0 %v3415
    %3425 = vmatpush.bf16.msra.mxu0 %v3414
    %3426 = vmatpush.bf16.msra.mxu0 %v3413
    %3427 = vmatpush.bf16.msra.mxu0 %v3412
    %3428 = vmatpush.bf16.msra.mxu0 %v3411
    %3429 = vmatpush.bf16.msra.mxu0 %v3410
    %3430 = vmatpush.bf16.msra.mxu0 %v3409
    %3431 = vmatpush.bf16.msra.mxu0 %v3408
    %3432 = vmatmul.bf16.gmra.mxu0 %v3374
    %v3433 = vpop.f32.mrf.mxu0
    %v3434 = vadd.f32 0.0, %v3433
    %v3435 = vpop.f32.mrf.mxu0
    %3436 = vdwg.mxu0
    %v3437 = vadd.f32 %v3352, %v3434
    %v3438 = vld [vmem:[#allocation3 + $0x4] sm:$0x1]
    %s3439 = scalar_lea.vmem %s5, 256
    %v3440 = vld [vmem:[%s3439] sm:$0xf]
    %v3441 = vld [vmem:[%s3439 + $0x4] sm:$0xf]
    %v3442 = vld [vmem:[%s3439 + $0x8] sm:$0xf]
    %v3443 = vld [vmem:[%s3439 + $0xc] sm:$0xf]
    %v3444 = vld [vmem:[%s3439 + $0x10] sm:$0xf]
    %v3445 = vld [vmem:[%s3439 + $0x14] sm:$0xf]
    %v3446 = vld [vmem:[%s3439 + $0x18] sm:$0xf]
    %v3447 = vld [vmem:[%s3439 + $0x1c] sm:$0xf]
    %v3448 = vld [vmem:[%s3439 + $0x20] sm:$0xf]
    %v3449 = vld [vmem:[%s3439 + $0x24] sm:$0xf]
    %v3450 = vld [vmem:[%s3439 + $0x28] sm:$0xf]
    %v3451 = vld [vmem:[%s3439 + $0x2c] sm:$0xf]
    %v3452 = vld [vmem:[%s3439 + $0x30] sm:$0xf]
    %v3453 = vld [vmem:[%s3439 + $0x34] sm:$0xf]
    %v3454 = vld [vmem:[%s3439 + $0x38] sm:$0xf]
    %v3455 = vld [vmem:[%s3439 + $0x3c] sm:$0xf]
    %v3472 = vunpack.c.l.b16 %v3440
    %v3473 = vunpack.c.l.b16 %v3441
    %v3474 = vunpack.c.l.b16 %v3442
    %v3475 = vunpack.c.l.b16 %v3443
    %v3476 = vunpack.c.l.b16 %v3444
    %v3477 = vunpack.c.l.b16 %v3445
    %v3478 = vunpack.c.l.b16 %v3446
    %v3479 = vunpack.c.l.b16 %v3447
    %v3480 = vunpack.c.l.b16 %v3448
    %v3481 = vunpack.c.l.b16 %v3449
    %v3482 = vunpack.c.l.b16 %v3450
    %v3483 = vunpack.c.l.b16 %v3451
    %v3484 = vunpack.c.l.b16 %v3452
    %v3485 = vunpack.c.l.b16 %v3453
    %v3486 = vunpack.c.l.b16 %v3454
    %v3487 = vunpack.c.l.b16 %v3455
    %v3488 = vpack.c.b16 %v3473, %v3472
    %v3489 = vpack.c.b16 %v3475, %v3474
    %v3490 = vpack.c.b16 %v3477, %v3476
    %v3491 = vpack.c.b16 %v3479, %v3478
    %v3492 = vpack.c.b16 %v3481, %v3480
    %v3493 = vpack.c.b16 %v3483, %v3482
    %v3494 = vpack.c.b16 %v3485, %v3484
    %v3495 = vpack.c.b16 %v3487, %v3486
    %3504 = vmatpush.bf16.msra.mxu0 %v3495
    %3505 = vmatpush.bf16.msra.mxu0 %v3494
    %3506 = vmatpush.bf16.msra.mxu0 %v3493
    %3507 = vmatpush.bf16.msra.mxu0 %v3492
    %3508 = vmatpush.bf16.msra.mxu0 %v3491
    %3509 = vmatpush.bf16.msra.mxu0 %v3490
    %3510 = vmatpush.bf16.msra.mxu0 %v3489
    %3511 = vmatpush.bf16.msra.mxu0 %v3488
    %3512 = vmatmul.bf16.gmra.mxu0 %v3438
    %v3513 = vpop.f32.mrf.mxu0
    %v3514 = vadd.f32 0.0, %v3513
    %v3515 = vpop.f32.mrf.mxu0
    %3516 = vdwg.mxu0
    %v3517 = vadd.f32 %v3437, %v3514
    %v3518 = vld [vmem:[#allocation3 + $0x4] sm:$0x2]
    %s3519 = scalar_lea.vmem %s5, 320
    %v3520 = vld [vmem:[%s3519] sm:$0xf]
    %v3521 = vld [vmem:[%s3519 + $0x4] sm:$0xf]
    %v3522 = vld [vmem:[%s3519 + $0x8] sm:$0xf]
    %v3523 = vld [vmem:[%s3519 + $0xc] sm:$0xf]
    %v3524 = vld [vmem:[%s3519 + $0x10] sm:$0xf]
    %v3525 = vld [vmem:[%s3519 + $0x14] sm:$0xf]
    %v3526 = vld [vmem:[%s3519 + $0x18] sm:$0xf]
    %v3527 = vld [vmem:[%s3519 + $0x1c] sm:$0xf]
    %v3528 = vld [vmem:[%s3519 + $0x20] sm:$0xf]
    %v3529 = vld [vmem:[%s3519 + $0x24] sm:$0xf]
    %v3530 = vld [vmem:[%s3519 + $0x28] sm:$0xf]
    %v3531 = vld [vmem:[%s3519 + $0x2c] sm:$0xf]
    %v3532 = vld [vmem:[%s3519 + $0x30] sm:$0xf]
    %v3533 = vld [vmem:[%s3519 + $0x34] sm:$0xf]
    %v3534 = vld [vmem:[%s3519 + $0x38] sm:$0xf]
    %v3535 = vld [vmem:[%s3519 + $0x3c] sm:$0xf]
    %v3537 = vunpack.c.l.b16 %v3518
    %v3538 = vpack.c.b16 %v3537, %v3537
    %v3539 = vrot.slane %v3538, 1
    %v3557 = vunpack.c.l.b16 %v3520
    %v3558 = vunpack.c.l.b16 %v3521
    %v3559 = vunpack.c.l.b16 %v3522
    %v3560 = vunpack.c.l.b16 %v3523
    %v3561 = vunpack.c.l.b16 %v3524
    %v3562 = vunpack.c.l.b16 %v3525
    %v3563 = vunpack.c.l.b16 %v3526
    %v3564 = vunpack.c.l.b16 %v3527
    %v3565 = vunpack.c.l.b16 %v3528
    %v3566 = vunpack.c.l.b16 %v3529
    %v3567 = vunpack.c.l.b16 %v3530
    %v3568 = vunpack.c.l.b16 %v3531
    %v3569 = vunpack.c.l.b16 %v3532
    %v3570 = vunpack.c.l.b16 %v3533
    %v3571 = vunpack.c.l.b16 %v3534
    %v3572 = vunpack.c.l.b16 %v3535
    %v3573 = vpack.c.b16 %v3558, %v3557
    %v3574 = vpack.c.b16 %v3560, %v3559
    %v3575 = vpack.c.b16 %v3562, %v3561
    %v3576 = vpack.c.b16 %v3564, %v3563
    %v3577 = vpack.c.b16 %v3566, %v3565
    %v3578 = vpack.c.b16 %v3568, %v3567
    %v3579 = vpack.c.b16 %v3570, %v3569
    %v3580 = vpack.c.b16 %v3572, %v3571
    %3589 = vmatpush.bf16.msra.mxu0 %v3580
    %3590 = vmatpush.bf16.msra.mxu0 %v3579
    %3591 = vmatpush.bf16.msra.mxu0 %v3578
    %3592 = vmatpush.bf16.msra.mxu0 %v3577
    %3593 = vmatpush.bf16.msra.mxu0 %v3576
    %3594 = vmatpush.bf16.msra.mxu0 %v3575
    %3595 = vmatpush.bf16.msra.mxu0 %v3574
    %3596 = vmatpush.bf16.msra.mxu0 %v3573
    %3597 = vmatmul.bf16.gmra.mxu0 %v3539
    %v3598 = vpop.f32.mrf.mxu0
    %v3599 = vadd.f32 0.0, %v3598
    %v3600 = vpop.f32.mrf.mxu0
    %3601 = vdwg.mxu0
    %v3602 = vadd.f32 %v3517, %v3599
    %v3603 = vld [vmem:[#allocation3 + $0x4] sm:$0x4]
    %s3604 = scalar_lea.vmem %s5, 384
    %v3605 = vld [vmem:[%s3604] sm:$0xf]
    %v3606 = vld [vmem:[%s3604 + $0x4] sm:$0xf]
    %v3607 = vld [vmem:[%s3604 + $0x8] sm:$0xf]
    %v3608 = vld [vmem:[%s3604 + $0xc] sm:$0xf]
    %v3609 = vld [vmem:[%s3604 + $0x10] sm:$0xf]
    %v3610 = vld [vmem:[%s3604 + $0x14] sm:$0xf]
    %v3611 = vld [vmem:[%s3604 + $0x18] sm:$0xf]
    %v3612 = vld [vmem:[%s3604 + $0x1c] sm:$0xf]
    %v3613 = vld [vmem:[%s3604 + $0x20] sm:$0xf]
    %v3614 = vld [vmem:[%s3604 + $0x24] sm:$0xf]
    %v3615 = vld [vmem:[%s3604 + $0x28] sm:$0xf]
    %v3616 = vld [vmem:[%s3604 + $0x2c] sm:$0xf]
    %v3617 = vld [vmem:[%s3604 + $0x30] sm:$0xf]
    %v3618 = vld [vmem:[%s3604 + $0x34] sm:$0xf]
    %v3619 = vld [vmem:[%s3604 + $0x38] sm:$0xf]
    %v3620 = vld [vmem:[%s3604 + $0x3c] sm:$0xf]
    %v3622 = vunpack.c.l.b16 %v3603
    %v3623 = vpack.c.b16 %v3622, %v3622
    %v3624 = vrot.slane %v3623, 2
    %v3642 = vunpack.c.l.b16 %v3605
    %v3643 = vunpack.c.l.b16 %v3606
    %v3644 = vunpack.c.l.b16 %v3607
    %v3645 = vunpack.c.l.b16 %v3608
    %v3646 = vunpack.c.l.b16 %v3609
    %v3647 = vunpack.c.l.b16 %v3610
    %v3648 = vunpack.c.l.b16 %v3611
    %v3649 = vunpack.c.l.b16 %v3612
    %v3650 = vunpack.c.l.b16 %v3613
    %v3651 = vunpack.c.l.b16 %v3614
    %v3652 = vunpack.c.l.b16 %v3615
    %v3653 = vunpack.c.l.b16 %v3616
    %v3654 = vunpack.c.l.b16 %v3617
    %v3655 = vunpack.c.l.b16 %v3618
    %v3656 = vunpack.c.l.b16 %v3619
    %v3657 = vunpack.c.l.b16 %v3620
    %v3658 = vpack.c.b16 %v3643, %v3642
    %v3659 = vpack.c.b16 %v3645, %v3644
    %v3660 = vpack.c.b16 %v3647, %v3646
    %v3661 = vpack.c.b16 %v3649, %v3648
    %v3662 = vpack.c.b16 %v3651, %v3650
    %v3663 = vpack.c.b16 %v3653, %v3652
    %v3664 = vpack.c.b16 %v3655, %v3654
    %v3665 = vpack.c.b16 %v3657, %v3656
    %3674 = vmatpush.bf16.msra.mxu0 %v3665
    %3675 = vmatpush.bf16.msra.mxu0 %v3664
    %3676 = vmatpush.bf16.msra.mxu0 %v3663
    %3677 = vmatpush.bf16.msra.mxu0 %v3662
    %3678 = vmatpush.bf16.msra.mxu0 %v3661
    %3679 = vmatpush.bf16.msra.mxu0 %v3660
    %3680 = vmatpush.bf16.msra.mxu0 %v3659
    %3681 = vmatpush.bf16.msra.mxu0 %v3658
    %3682 = vmatmul.bf16.gmra.mxu0 %v3624
    %v3683 = vpop.f32.mrf.mxu0
    %v3684 = vadd.f32 0.0, %v3683
    %v3685 = vpop.f32.mrf.mxu0
    %3686 = vdwg.mxu0
    %v3687 = vadd.f32 %v3602, %v3684
    %v3688 = vld [vmem:[#allocation3 + $0x4] sm:$0x8]
    %s3689 = scalar_lea.vmem %s5, 448
    %v3690 = vld [vmem:[%s3689] sm:$0xf]
    %v3691 = vld [vmem:[%s3689 + $0x4] sm:$0xf]
    %v3692 = vld [vmem:[%s3689 + $0x8] sm:$0xf]
    %v3693 = vld [vmem:[%s3689 + $0xc] sm:$0xf]
    %v3694 = vld [vmem:[%s3689 + $0x10] sm:$0xf]
    %v3695 = vld [vmem:[%s3689 + $0x14] sm:$0xf]
    %v3696 = vld [vmem:[%s3689 + $0x18] sm:$0xf]
    %v3697 = vld [vmem:[%s3689 + $0x1c] sm:$0xf]
    %v3698 = vld [vmem:[%s3689 + $0x20] sm:$0xf]
    %v3699 = vld [vmem:[%s3689 + $0x24] sm:$0xf]
    %v3700 = vld [vmem:[%s3689 + $0x28] sm:$0xf]
    %v3701 = vld [vmem:[%s3689 + $0x2c] sm:$0xf]
    %v3702 = vld [vmem:[%s3689 + $0x30] sm:$0xf]
    %v3703 = vld [vmem:[%s3689 + $0x34] sm:$0xf]
    %v3704 = vld [vmem:[%s3689 + $0x38] sm:$0xf]
    %v3705 = vld [vmem:[%s3689 + $0x3c] sm:$0xf]
    %v3707 = vunpack.c.l.b16 %v3688
    %v3708 = vpack.c.b16 %v3707, %v3707
    %v3709 = vrot.slane %v3708, 3
    %v3727 = vunpack.c.l.b16 %v3690
    %v3728 = vunpack.c.l.b16 %v3691
    %v3729 = vunpack.c.l.b16 %v3692
    %v3730 = vunpack.c.l.b16 %v3693
    %v3731 = vunpack.c.l.b16 %v3694
    %v3732 = vunpack.c.l.b16 %v3695
    %v3733 = vunpack.c.l.b16 %v3696
    %v3734 = vunpack.c.l.b16 %v3697
    %v3735 = vunpack.c.l.b16 %v3698
    %v3736 = vunpack.c.l.b16 %v3699
    %v3737 = vunpack.c.l.b16 %v3700
    %v3738 = vunpack.c.l.b16 %v3701
    %v3739 = vunpack.c.l.b16 %v3702
    %v3740 = vunpack.c.l.b16 %v3703
    %v3741 = vunpack.c.l.b16 %v3704
    %v3742 = vunpack.c.l.b16 %v3705
    %v3743 = vpack.c.b16 %v3728, %v3727
    %v3744 = vpack.c.b16 %v3730, %v3729
    %v3745 = vpack.c.b16 %v3732, %v3731
    %v3746 = vpack.c.b16 %v3734, %v3733
    %v3747 = vpack.c.b16 %v3736, %v3735
    %v3748 = vpack.c.b16 %v3738, %v3737
    %v3749 = vpack.c.b16 %v3740, %v3739
    %v3750 = vpack.c.b16 %v3742, %v3741
    %3759 = vmatpush.bf16.msra.mxu0 %v3750
    %3760 = vmatpush.bf16.msra.mxu0 %v3749
    %3761 = vmatpush.bf16.msra.mxu0 %v3748
    %3762 = vmatpush.bf16.msra.mxu0 %v3747
    %3763 = vmatpush.bf16.msra.mxu0 %v3746
    %3764 = vmatpush.bf16.msra.mxu0 %v3745
    %3765 = vmatpush.bf16.msra.mxu0 %v3744
    %3766 = vmatpush.bf16.msra.mxu0 %v3743
    %3767 = vmatmul.bf16.gmra.mxu0 %v3709
    %v3768 = vpop.f32.mrf.mxu0
    %v3769 = vadd.f32 0.0, %v3768
    %v3770 = vpop.f32.mrf.mxu0
    %3771 = vdwg.mxu0
    %v3772 = vadd.f32 %v3687, %v3769
    %v3773 = vld [vmem:[#allocation3 + $0x8] sm:$0x1]
    %s3774 = scalar_lea.vmem %s5, 512
    %v3775 = vld [vmem:[%s3774] sm:$0xf]
    %v3776 = vld [vmem:[%s3774 + $0x4] sm:$0xf]
    %v3777 = vld [vmem:[%s3774 + $0x8] sm:$0xf]
    %v3778 = vld [vmem:[%s3774 + $0xc] sm:$0xf]
    %v3779 = vld [vmem:[%s3774 + $0x10] sm:$0xf]
    %v3780 = vld [vmem:[%s3774 + $0x14] sm:$0xf]
    %v3781 = vld [vmem:[%s3774 + $0x18] sm:$0xf]
    %v3782 = vld [vmem:[%s3774 + $0x1c] sm:$0xf]
    %v3783 = vld [vmem:[%s3774 + $0x20] sm:$0xf]
    %v3784 = vld [vmem:[%s3774 + $0x24] sm:$0xf]
    %v3785 = vld [vmem:[%s3774 + $0x28] sm:$0xf]
    %v3786 = vld [vmem:[%s3774 + $0x2c] sm:$0xf]
    %v3787 = vld [vmem:[%s3774 + $0x30] sm:$0xf]
    %v3788 = vld [vmem:[%s3774 + $0x34] sm:$0xf]
    %v3789 = vld [vmem:[%s3774 + $0x38] sm:$0xf]
    %v3790 = vld [vmem:[%s3774 + $0x3c] sm:$0xf]
    %v3807 = vunpack.c.l.b16 %v3775
    %v3808 = vunpack.c.l.b16 %v3776
    %v3809 = vunpack.c.l.b16 %v3777
    %v3810 = vunpack.c.l.b16 %v3778
    %v3811 = vunpack.c.l.b16 %v3779
    %v3812 = vunpack.c.l.b16 %v3780
    %v3813 = vunpack.c.l.b16 %v3781
    %v3814 = vunpack.c.l.b16 %v3782
    %v3815 = vunpack.c.l.b16 %v3783
    %v3816 = vunpack.c.l.b16 %v3784
    %v3817 = vunpack.c.l.b16 %v3785
    %v3818 = vunpack.c.l.b16 %v3786
    %v3819 = vunpack.c.l.b16 %v3787
    %v3820 = vunpack.c.l.b16 %v3788
    %v3821 = vunpack.c.l.b16 %v3789
    %v3822 = vunpack.c.l.b16 %v3790
    %v3823 = vpack.c.b16 %v3808, %v3807
    %v3824 = vpack.c.b16 %v3810, %v3809
    %v3825 = vpack.c.b16 %v3812, %v3811
    %v3826 = vpack.c.b16 %v3814, %v3813
    %v3827 = vpack.c.b16 %v3816, %v3815
    %v3828 = vpack.c.b16 %v3818, %v3817
    %v3829 = vpack.c.b16 %v3820, %v3819
    %v3830 = vpack.c.b16 %v3822, %v3821
    %3839 = vmatpush.bf16.msra.mxu0 %v3830
    %3840 = vmatpush.bf16.msra.mxu0 %v3829
    %3841 = vmatpush.bf16.msra.mxu0 %v3828
    %3842 = vmatpush.bf16.msra.mxu0 %v3827
    %3843 = vmatpush.bf16.msra.mxu0 %v3826
    %3844 = vmatpush.bf16.msra.mxu0 %v3825
    %3845 = vmatpush.bf16.msra.mxu0 %v3824
    %3846 = vmatpush.bf16.msra.mxu0 %v3823
    %3847 = vmatmul.bf16.gmra.mxu0 %v3773
    %v3848 = vpop.f32.mrf.mxu0
    %v3849 = vadd.f32 0.0, %v3848
    %v3850 = vpop.f32.mrf.mxu0
    %3851 = vdwg.mxu0
    %v3852 = vadd.f32 %v3772, %v3849
    %v3853 = vld [vmem:[%s6] sm:$0x1]
    %v3855 = vperm.slane %v3853, 0
    %v3857 = vadd.f32 %v3852, %v3855
    %v3858 = vmax.f32 %v3857, 0.0
    %v3859 = vpack.c.bf16 %v3858, %v3858
    %v3860 = vld [vmem:[%s7] sm:$0xff]
    %v3861 = vld [vmem:[%s7 + $0x8] sm:$0xff]
    %v3862 = vld [vmem:[%s7 + $0x10] sm:$0xff]
    %v3863 = vld [vmem:[%s7 + $0x18] sm:$0xff]
    %v3864 = vld [vmem:[%s7 + $0x20] sm:$0xff]
    %v3865 = vld [vmem:[%s7 + $0x28] sm:$0xff]
    %v3866 = vld [vmem:[%s7 + $0x30] sm:$0xff]
    %v3867 = vld [vmem:[%s7 + $0x38] sm:$0xff]
    %v3868 = vld [vmem:[%s7 + $0x40] sm:$0xff]
    %v3869 = vld [vmem:[%s7 + $0x48] sm:$0xff]
    %v3870 = vld [vmem:[%s7 + $0x50] sm:$0xff]
    %v3871 = vld [vmem:[%s7 + $0x58] sm:$0xff]
    %v3872 = vld [vmem:[%s7 + $0x60] sm:$0xff]
    %v3873 = vld [vmem:[%s7 + $0x68] sm:$0xff]
    %v3874 = vld [vmem:[%s7 + $0x70] sm:$0xff]
    %v3875 = vld [vmem:[%s7 + $0x78] sm:$0xff]
    %v3876 = vld [vmem:[%s7 + $0x80] sm:$0xff]
    %v3877 = vld [vmem:[%s7 + $0x88] sm:$0xff]
    %v3878 = vld [vmem:[%s7 + $0x90] sm:$0xff]
    %v3879 = vld [vmem:[%s7 + $0x98] sm:$0xff]
    %v3880 = vld [vmem:[%s7 + $0xa0] sm:$0xff]
    %v3881 = vld [vmem:[%s7 + $0xa8] sm:$0xff]
    %v3882 = vld [vmem:[%s7 + $0xb0] sm:$0xff]
    %v3883 = vld [vmem:[%s7 + $0xb8] sm:$0xff]
    %v3884 = vld [vmem:[%s7 + $0xc0] sm:$0xff]
    %v3885 = vld [vmem:[%s7 + $0xc8] sm:$0xff]
    %v3886 = vld [vmem:[%s7 + $0xd0] sm:$0xff]
    %v3887 = vld [vmem:[%s7 + $0xd8] sm:$0xff]
    %v3888 = vld [vmem:[%s7 + $0xe0] sm:$0xff]
    %v3889 = vld [vmem:[%s7 + $0xe8] sm:$0xff]
    %v3890 = vld [vmem:[%s7 + $0xf0] sm:$0xff]
    %v3891 = vld [vmem:[%s7 + $0xf8] sm:$0xff]
    %v3892 = vld [vmem:[%s8] sm:$0xf]
    %v3894 = vperm.slane %v3892, 0
    %v3895 = vperm.slane %v3892, 1
    %v3896 = vperm.slane %v3892, 2
    %v3897 = vperm.slane %v3892, 3
    %v3934 = vunpack.c.l.b16 %v3860
    %v3935 = vunpack.c.h.b16 %v3860
    %v3936 = vunpack.c.l.b16 %v3861
    %v3937 = vunpack.c.h.b16 %v3861
    %v3938 = vunpack.c.l.b16 %v3862
    %v3939 = vunpack.c.h.b16 %v3862
    %v3940 = vunpack.c.l.b16 %v3863
    %v3941 = vunpack.c.h.b16 %v3863
    %v3942 = vunpack.c.l.b16 %v3864
    %v3943 = vunpack.c.h.b16 %v3864
    %v3944 = vunpack.c.l.b16 %v3865
    %v3945 = vunpack.c.h.b16 %v3865
    %v3946 = vunpack.c.l.b16 %v3866
    %v3947 = vunpack.c.h.b16 %v3866
    %v3948 = vunpack.c.l.b16 %v3867
    %v3949 = vunpack.c.h.b16 %v3867
    %v3950 = vunpack.c.l.b16 %v3868
    %v3951 = vunpack.c.h.b16 %v3868
    %v3952 = vunpack.c.l.b16 %v3869
    %v3953 = vunpack.c.h.b16 %v3869
    %v3954 = vunpack.c.l.b16 %v3870
    %v3955 = vunpack.c.h.b16 %v3870
    %v3956 = vunpack.c.l.b16 %v3871
    %v3957 = vunpack.c.h.b16 %v3871
    %v3958 = vunpack.c.l.b16 %v3872
    %v3959 = vunpack.c.h.b16 %v3872
    %v3960 = vunpack.c.l.b16 %v3873
    %v3961 = vunpack.c.h.b16 %v3873
    %v3962 = vunpack.c.l.b16 %v3874
    %v3963 = vunpack.c.h.b16 %v3874
    %v3964 = vunpack.c.l.b16 %v3875
    %v3965 = vunpack.c.h.b16 %v3875
    %v3966 = vunpack.c.l.b16 %v3876
    %v3967 = vunpack.c.h.b16 %v3876
    %v3968 = vunpack.c.l.b16 %v3877
    %v3969 = vunpack.c.h.b16 %v3877
    %v3970 = vunpack.c.l.b16 %v3878
    %v3971 = vunpack.c.h.b16 %v3878
    %v3972 = vunpack.c.l.b16 %v3879
    %v3973 = vunpack.c.h.b16 %v3879
    %v3974 = vunpack.c.l.b16 %v3880
    %v3975 = vunpack.c.h.b16 %v3880
    %v3976 = vunpack.c.l.b16 %v3881
    %v3977 = vunpack.c.h.b16 %v3881
    %v3978 = vunpack.c.l.b16 %v3882
    %v3979 = vunpack.c.h.b16 %v3882
    %v3980 = vunpack.c.l.b16 %v3883
    %v3981 = vunpack.c.h.b16 %v3883
    %v3982 = vunpack.c.l.b16 %v3884
    %v3983 = vunpack.c.h.b16 %v3884
    %v3984 = vunpack.c.l.b16 %v3885
    %v3985 = vunpack.c.h.b16 %v3885
    %v3986 = vunpack.c.l.b16 %v3886
    %v3987 = vunpack.c.h.b16 %v3886
    %v3988 = vunpack.c.l.b16 %v3887
    %v3989 = vunpack.c.h.b16 %v3887
    %v3990 = vunpack.c.l.b16 %v3888
    %v3991 = vunpack.c.h.b16 %v3888
    %v3992 = vunpack.c.l.b16 %v3889
    %v3993 = vunpack.c.h.b16 %v3889
    %v3994 = vunpack.c.l.b16 %v3890
    %v3995 = vunpack.c.h.b16 %v3890
    %v3996 = vunpack.c.l.b16 %v3891
    %v3997 = vunpack.c.h.b16 %v3891
    %v3998 = vpack.c.b16 %v3938, %v3934
    %v3999 = vpack.c.b16 %v3939, %v3935
    %v4000 = vpack.c.b16 %v3940, %v3936
    %v4001 = vpack.c.b16 %v3941, %v3937
    %v4002 = vpack.c.b16 %v3946, %v3942
    %v4003 = vpack.c.b16 %v3947, %v3943
    %v4004 = vpack.c.b16 %v3948, %v3944
    %v4005 = vpack.c.b16 %v3949, %v3945
    %v4006 = vpack.c.b16 %v3954, %v3950
    %v4007 = vpack.c.b16 %v3955, %v3951
    %v4008 = vpack.c.b16 %v3956, %v3952
    %v4009 = vpack.c.b16 %v3957, %v3953
    %v4010 = vpack.c.b16 %v3962, %v3958
    %v4011 = vpack.c.b16 %v3963, %v3959
    %v4012 = vpack.c.b16 %v3964, %v3960
    %v4013 = vpack.c.b16 %v3965, %v3961
    %v4014 = vpack.c.b16 %v3970, %v3966
    %v4015 = vpack.c.b16 %v3971, %v3967
    %v4016 = vpack.c.b16 %v3972, %v3968
    %v4017 = vpack.c.b16 %v3973, %v3969
    %v4018 = vpack.c.b16 %v3978, %v3974
    %v4019 = vpack.c.b16 %v3979, %v3975
    %v4020 = vpack.c.b16 %v3980, %v3976
    %v4021 = vpack.c.b16 %v3981, %v3977
    %v4022 = vpack.c.b16 %v3986, %v3982
    %v4023 = vpack.c.b16 %v3987, %v3983
    %v4024 = vpack.c.b16 %v3988, %v3984
    %v4025 = vpack.c.b16 %v3989, %v3985
    %v4026 = vpack.c.b16 %v3994, %v3990
    %v4027 = vpack.c.b16 %v3995, %v3991
    %v4028 = vpack.c.b16 %v3996, %v3992
    %v4029 = vpack.c.b16 %v3997, %v3993
    %4062 = vmatpush.bf16.msra.mxu0 %v4026
    %4063 = vmatpush.bf16.msra.mxu0 %v4022
    %4064 = vmatpush.bf16.msra.mxu0 %v4018
    %4065 = vmatpush.bf16.msra.mxu0 %v4014
    %4066 = vmatpush.bf16.msra.mxu0 %v4010
    %4067 = vmatpush.bf16.msra.mxu0 %v4006
    %4068 = vmatpush.bf16.msra.mxu0 %v4002
    %4069 = vmatpush.bf16.msra.mxu0 %v3998
    %4070 = vmatmul.bf16.gmra.mxu0 %v3859
    %v4071 = vpop.f32.mrf.mxu0
    %v4072 = vadd.f32 %v3894, %v4071
    %v4073 = vpop.f32.mrf.mxu0
    %4074 = vdwg.mxu0
    %4075 = vmatpush.bf16.msra.mxu0 %v4027
    %4076 = vmatpush.bf16.msra.mxu0 %v4023
    %4077 = vmatpush.bf16.msra.mxu0 %v4019
    %4078 = vmatpush.bf16.msra.mxu0 %v4015
    %4079 = vmatpush.bf16.msra.mxu0 %v4011
    %4080 = vmatpush.bf16.msra.mxu0 %v4007
    %4081 = vmatpush.bf16.msra.mxu0 %v4003
    %4082 = vmatpush.bf16.msra.mxu0 %v3999
    %4083 = vmatmul.bf16.gmra.mxu0 %v3859
    %v4084 = vpop.f32.mrf.mxu0
    %v4085 = vadd.f32 %v3895, %v4084
    %v4086 = vpop.f32.mrf.mxu0
    %4087 = vdwg.mxu0
    %4088 = vmatpush.bf16.msra.mxu0 %v4028
    %4089 = vmatpush.bf16.msra.mxu0 %v4024
    %4090 = vmatpush.bf16.msra.mxu0 %v4020
    %4091 = vmatpush.bf16.msra.mxu0 %v4016
    %4092 = vmatpush.bf16.msra.mxu0 %v4012
    %4093 = vmatpush.bf16.msra.mxu0 %v4008
    %4094 = vmatpush.bf16.msra.mxu0 %v4004
    %4095 = vmatpush.bf16.msra.mxu0 %v4000
    %4096 = vmatmul.bf16.gmra.mxu0 %v3859
    %v4097 = vpop.f32.mrf.mxu0
    %v4098 = vadd.f32 %v3896, %v4097
    %v4099 = vpop.f32.mrf.mxu0
    %4100 = vdwg.mxu0
    %4101 = vmatpush.bf16.msra.mxu0 %v4029
    %4102 = vmatpush.bf16.msra.mxu0 %v4025
    %4103 = vmatpush.bf16.msra.mxu0 %v4021
    %4104 = vmatpush.bf16.msra.mxu0 %v4017
    %4105 = vmatpush.bf16.msra.mxu0 %v4013
    %4106 = vmatpush.bf16.msra.mxu0 %v4009
    %4107 = vmatpush.bf16.msra.mxu0 %v4005
    %4108 = vmatpush.bf16.msra.mxu0 %v4001
    %4109 = vmatmul.bf16.gmra.mxu0 %v3859
    %v4110 = vpop.f32.mrf.mxu0
    %v4111 = vadd.f32 %v3897, %v4110
    %v4112 = vpop.f32.mrf.mxu0
    %4113 = vdwg.mxu0
    %v4114 = vmax.f32 %v4072, 0.0
    %v4115 = vmax.f32 %v4085, 0.0
    %v4116 = vmax.f32 %v4098, 0.0
    %v4117 = vmax.f32 %v4111, 0.0
    %v4118 = vpack.c.bf16 %v4114, %v4114
    %v4119 = vpack.c.bf16 %v4115, %v4115
    %v4120 = vpack.c.bf16 %v4116, %v4116
    %v4121 = vpack.c.bf16 %v4117, %v4117
    %v4122 = vld [vmem:[%s9] sm:$0xf]
    %v4123 = vld [vmem:[%s9 + $0x4] sm:$0xf]
    %v4124 = vld [vmem:[%s9 + $0x8] sm:$0xf]
    %v4125 = vld [vmem:[%s9 + $0xc] sm:$0xf]
    %v4126 = vld [vmem:[%s9 + $0x10] sm:$0xf]
    %v4127 = vld [vmem:[%s9 + $0x14] sm:$0xf]
    %v4128 = vld [vmem:[%s9 + $0x18] sm:$0xf]
    %v4129 = vld [vmem:[%s9 + $0x1c] sm:$0xf]
    %v4130 = vld [vmem:[%s9 + $0x20] sm:$0xf]
    %v4131 = vld [vmem:[%s9 + $0x24] sm:$0xf]
    %v4132 = vld [vmem:[%s9 + $0x28] sm:$0xf]
    %v4133 = vld [vmem:[%s9 + $0x2c] sm:$0xf]
    %v4134 = vld [vmem:[%s9 + $0x30] sm:$0xf]
    %v4135 = vld [vmem:[%s9 + $0x34] sm:$0xf]
    %v4136 = vld [vmem:[%s9 + $0x38] sm:$0xf]
    %v4137 = vld [vmem:[%s9 + $0x3c] sm:$0xf]
    %v4138 = vld [vmem:[%s9 + $0x40] sm:$0xf]
    %v4139 = vld [vmem:[%s9 + $0x44] sm:$0xf]
    %v4140 = vld [vmem:[%s9 + $0x48] sm:$0xf]
    %v4141 = vld [vmem:[%s9 + $0x4c] sm:$0xf]
    %v4142 = vld [vmem:[%s9 + $0x50] sm:$0xf]
    %v4143 = vld [vmem:[%s9 + $0x54] sm:$0xf]
    %v4144 = vld [vmem:[%s9 + $0x58] sm:$0xf]
    %v4145 = vld [vmem:[%s9 + $0x5c] sm:$0xf]
    %v4146 = vld [vmem:[%s9 + $0x60] sm:$0xf]
    %v4147 = vld [vmem:[%s9 + $0x64] sm:$0xf]
    %v4148 = vld [vmem:[%s9 + $0x68] sm:$0xf]
    %v4149 = vld [vmem:[%s9 + $0x6c] sm:$0xf]
    %v4150 = vld [vmem:[%s9 + $0x70] sm:$0xf]
    %v4151 = vld [vmem:[%s9 + $0x74] sm:$0xf]
    %v4152 = vld [vmem:[%s9 + $0x78] sm:$0xf]
    %v4153 = vld [vmem:[%s9 + $0x7c] sm:$0xf]
    %v4154 = vld [vmem:[%s9 + $0x80] sm:$0xf]
    %v4155 = vld [vmem:[%s9 + $0x84] sm:$0xf]
    %v4156 = vld [vmem:[%s9 + $0x88] sm:$0xf]
    %v4157 = vld [vmem:[%s9 + $0x8c] sm:$0xf]
    %v4158 = vld [vmem:[%s9 + $0x90] sm:$0xf]
    %v4159 = vld [vmem:[%s9 + $0x94] sm:$0xf]
    %v4160 = vld [vmem:[%s9 + $0x98] sm:$0xf]
    %v4161 = vld [vmem:[%s9 + $0x9c] sm:$0xf]
    %v4162 = vld [vmem:[%s9 + $0xa0] sm:$0xf]
    %v4163 = vld [vmem:[%s9 + $0xa4] sm:$0xf]
    %v4164 = vld [vmem:[%s9 + $0xa8] sm:$0xf]
    %v4165 = vld [vmem:[%s9 + $0xac] sm:$0xf]
    %v4166 = vld [vmem:[%s9 + $0xb0] sm:$0xf]
    %v4167 = vld [vmem:[%s9 + $0xb4] sm:$0xf]
    %v4168 = vld [vmem:[%s9 + $0xb8] sm:$0xf]
    %v4169 = vld [vmem:[%s9 + $0xbc] sm:$0xf]
    %v4170 = vld [vmem:[%s9 + $0xc0] sm:$0xf]
    %v4171 = vld [vmem:[%s9 + $0xc4] sm:$0xf]
    %v4172 = vld [vmem:[%s9 + $0xc8] sm:$0xf]
    %v4173 = vld [vmem:[%s9 + $0xcc] sm:$0xf]
    %v4174 = vld [vmem:[%s9 + $0xd0] sm:$0xf]
    %v4175 = vld [vmem:[%s9 + $0xd4] sm:$0xf]
    %v4176 = vld [vmem:[%s9 + $0xd8] sm:$0xf]
    %v4177 = vld [vmem:[%s9 + $0xdc] sm:$0xf]
    %v4178 = vld [vmem:[%s9 + $0xe0] sm:$0xf]
    %v4179 = vld [vmem:[%s9 + $0xe4] sm:$0xf]
    %v4180 = vld [vmem:[%s9 + $0xe8] sm:$0xf]
    %v4181 = vld [vmem:[%s9 + $0xec] sm:$0xf]
    %v4182 = vld [vmem:[%s9 + $0xf0] sm:$0xf]
    %v4183 = vld [vmem:[%s9 + $0xf4] sm:$0xf]
    %v4184 = vld [vmem:[%s9 + $0xf8] sm:$0xf]
    %v4185 = vld [vmem:[%s9 + $0xfc] sm:$0xf]
    %v4186 = vld [vmem:[%s10] sm:$0x1]
    %v4188 = vperm.slane %v4186, 0
    %v4254 = vunpack.c.l.b16 %v4122
    %v4255 = vunpack.c.l.b16 %v4123
    %v4256 = vunpack.c.l.b16 %v4124
    %v4257 = vunpack.c.l.b16 %v4125
    %v4258 = vunpack.c.l.b16 %v4126
    %v4259 = vunpack.c.l.b16 %v4127
    %v4260 = vunpack.c.l.b16 %v4128
    %v4261 = vunpack.c.l.b16 %v4129
    %v4262 = vunpack.c.l.b16 %v4130
    %v4263 = vunpack.c.l.b16 %v4131
    %v4264 = vunpack.c.l.b16 %v4132
    %v4265 = vunpack.c.l.b16 %v4133
    %v4266 = vunpack.c.l.b16 %v4134
    %v4267 = vunpack.c.l.b16 %v4135
    %v4268 = vunpack.c.l.b16 %v4136
    %v4269 = vunpack.c.l.b16 %v4137
    %v4270 = vunpack.c.l.b16 %v4138
    %v4271 = vunpack.c.l.b16 %v4139
    %v4272 = vunpack.c.l.b16 %v4140
    %v4273 = vunpack.c.l.b16 %v4141
    %v4274 = vunpack.c.l.b16 %v4142
    %v4275 = vunpack.c.l.b16 %v4143
    %v4276 = vunpack.c.l.b16 %v4144
    %v4277 = vunpack.c.l.b16 %v4145
    %v4278 = vunpack.c.l.b16 %v4146
    %v4279 = vunpack.c.l.b16 %v4147
    %v4280 = vunpack.c.l.b16 %v4148
    %v4281 = vunpack.c.l.b16 %v4149
    %v4282 = vunpack.c.l.b16 %v4150
    %v4283 = vunpack.c.l.b16 %v4151
    %v4284 = vunpack.c.l.b16 %v4152
    %v4285 = vunpack.c.l.b16 %v4153
    %v4286 = vunpack.c.l.b16 %v4154
    %v4287 = vunpack.c.l.b16 %v4155
    %v4288 = vunpack.c.l.b16 %v4156
    %v4289 = vunpack.c.l.b16 %v4157
    %v4290 = vunpack.c.l.b16 %v4158
    %v4291 = vunpack.c.l.b16 %v4159
    %v4292 = vunpack.c.l.b16 %v4160
    %v4293 = vunpack.c.l.b16 %v4161
    %v4294 = vunpack.c.l.b16 %v4162
    %v4295 = vunpack.c.l.b16 %v4163
    %v4296 = vunpack.c.l.b16 %v4164
    %v4297 = vunpack.c.l.b16 %v4165
    %v4298 = vunpack.c.l.b16 %v4166
    %v4299 = vunpack.c.l.b16 %v4167
    %v4300 = vunpack.c.l.b16 %v4168
    %v4301 = vunpack.c.l.b16 %v4169
    %v4302 = vunpack.c.l.b16 %v4170
    %v4303 = vunpack.c.l.b16 %v4171
    %v4304 = vunpack.c.l.b16 %v4172
    %v4305 = vunpack.c.l.b16 %v4173
    %v4306 = vunpack.c.l.b16 %v4174
    %v4307 = vunpack.c.l.b16 %v4175
    %v4308 = vunpack.c.l.b16 %v4176
    %v4309 = vunpack.c.l.b16 %v4177
    %v4310 = vunpack.c.l.b16 %v4178
    %v4311 = vunpack.c.l.b16 %v4179
    %v4312 = vunpack.c.l.b16 %v4180
    %v4313 = vunpack.c.l.b16 %v4181
    %v4314 = vunpack.c.l.b16 %v4182
    %v4315 = vunpack.c.l.b16 %v4183
    %v4316 = vunpack.c.l.b16 %v4184
    %v4317 = vunpack.c.l.b16 %v4185
    %v4318 = vpack.c.b16 %v4255, %v4254
    %v4319 = vpack.c.b16 %v4257, %v4256
    %v4320 = vpack.c.b16 %v4259, %v4258
    %v4321 = vpack.c.b16 %v4261, %v4260
    %v4322 = vpack.c.b16 %v4263, %v4262
    %v4323 = vpack.c.b16 %v4265, %v4264
    %v4324 = vpack.c.b16 %v4267, %v4266
    %v4325 = vpack.c.b16 %v4269, %v4268
    %v4326 = vpack.c.b16 %v4271, %v4270
    %v4327 = vpack.c.b16 %v4273, %v4272
    %v4328 = vpack.c.b16 %v4275, %v4274
    %v4329 = vpack.c.b16 %v4277, %v4276
    %v4330 = vpack.c.b16 %v4279, %v4278
    %v4331 = vpack.c.b16 %v4281, %v4280
    %v4332 = vpack.c.b16 %v4283, %v4282
    %v4333 = vpack.c.b16 %v4285, %v4284
    %v4334 = vpack.c.b16 %v4287, %v4286
    %v4335 = vpack.c.b16 %v4289, %v4288
    %v4336 = vpack.c.b16 %v4291, %v4290
    %v4337 = vpack.c.b16 %v4293, %v4292
    %v4338 = vpack.c.b16 %v4295, %v4294
    %v4339 = vpack.c.b16 %v4297, %v4296
    %v4340 = vpack.c.b16 %v4299, %v4298
    %v4341 = vpack.c.b16 %v4301, %v4300
    %v4342 = vpack.c.b16 %v4303, %v4302
    %v4343 = vpack.c.b16 %v4305, %v4304
    %v4344 = vpack.c.b16 %v4307, %v4306
    %v4345 = vpack.c.b16 %v4309, %v4308
    %v4346 = vpack.c.b16 %v4311, %v4310
    %v4347 = vpack.c.b16 %v4313, %v4312
    %v4348 = vpack.c.b16 %v4315, %v4314
    %v4349 = vpack.c.b16 %v4317, %v4316
    %4382 = vmatpush.bf16.msra.mxu0 %v4325
    %4383 = vmatpush.bf16.msra.mxu0 %v4324
    %4384 = vmatpush.bf16.msra.mxu0 %v4323
    %4385 = vmatpush.bf16.msra.mxu0 %v4322
    %4386 = vmatpush.bf16.msra.mxu0 %v4321
    %4387 = vmatpush.bf16.msra.mxu0 %v4320
    %4388 = vmatpush.bf16.msra.mxu0 %v4319
    %4389 = vmatpush.bf16.msra.mxu0 %v4318
    %4390 = vmatmul.bf16.gmra.mxu0 %v4118
    %v4391 = vpop.f32.mrf.mxu0
    %v4392 = vadd.f32 %v4188, %v4391
    %v4393 = vpop.f32.mrf.mxu0
    %4394 = vdwg.mxu0
    %4395 = vmatpush.bf16.msra.mxu0 %v4333
    %4396 = vmatpush.bf16.msra.mxu0 %v4332
    %4397 = vmatpush.bf16.msra.mxu0 %v4331
    %4398 = vmatpush.bf16.msra.mxu0 %v4330
    %4399 = vmatpush.bf16.msra.mxu0 %v4329
    %4400 = vmatpush.bf16.msra.mxu0 %v4328
    %4401 = vmatpush.bf16.msra.mxu0 %v4327
    %4402 = vmatpush.bf16.msra.mxu0 %v4326
    %4403 = vmatmul.bf16.gmra.mxu0 %v4119
    %v4404 = vpop.f32.mrf.mxu0
    %v4405 = vadd.f32 %v4392, %v4404
    %v4406 = vpop.f32.mrf.mxu0
    %4407 = vdwg.mxu0
    %4408 = vmatpush.bf16.msra.mxu0 %v4341
    %4409 = vmatpush.bf16.msra.mxu0 %v4340
    %4410 = vmatpush.bf16.msra.mxu0 %v4339
    %4411 = vmatpush.bf16.msra.mxu0 %v4338
    %4412 = vmatpush.bf16.msra.mxu0 %v4337
    %4413 = vmatpush.bf16.msra.mxu0 %v4336
    %4414 = vmatpush.bf16.msra.mxu0 %v4335
    %4415 = vmatpush.bf16.msra.mxu0 %v4334
    %4416 = vmatmul.bf16.gmra.mxu0 %v4120
    %v4417 = vpop.f32.mrf.mxu0
    %v4418 = vadd.f32 %v4405, %v4417
    %v4419 = vpop.f32.mrf.mxu0
    %4420 = vdwg.mxu0
    %4421 = vmatpush.bf16.msra.mxu0 %v4349
    %4422 = vmatpush.bf16.msra.mxu0 %v4348
    %4423 = vmatpush.bf16.msra.mxu0 %v4347
    %4424 = vmatpush.bf16.msra.mxu0 %v4346
    %4425 = vmatpush.bf16.msra.mxu0 %v4345
    %4426 = vmatpush.bf16.msra.mxu0 %v4344
    %4427 = vmatpush.bf16.msra.mxu0 %v4343
    %4428 = vmatpush.bf16.msra.mxu0 %v4342
    %4429 = vmatmul.bf16.gmra.mxu0 %v4121
    %v4430 = vpop.f32.mrf.mxu0
    %v4431 = vadd.f32 %v4418, %v4430
    %v4432 = vpop.f32.mrf.mxu0
    %4433 = vdwg.mxu0
    %4434 = vst [vmem:[#allocation4] sm:$0x3] %v4431
    // Predicated region
    $region46: #{qnetwork_forward.1} parent=1 // pred_check
      _
    $region47: #{qnetwork_forward.1} parent=1 // pred_check_branch
      %4436 = sbr.rel (0) target = $region49
    $region48: #{qnetwork_forward.1} parent=1 // pred_region
      %4438 = vsyncadd [#allocation5], 0
      %s4440 = sshll.u32 [#allocation4], 4
      %s4441 = int_to_ptr.vmem [resolvable:$true] %s4440
      %s4442 = sshll.u32 %s11, 4
      %s4443 = int_to_ptr.hbm [resolvable:$true] %s4442
      %4445 = dma.vmem_to_hbm [thread:$0]  %s4441, 32, %s4443, [#allocation5]
    $region49: #{qnetwork_forward.1} parent=1 // pred_fallthru
      _
    // Predicated region
    $region50: #{qnetwork_forward.1} parent=1 // pred_check
      _
    $region51: #{qnetwork_forward.1} parent=1 // pred_check_branch
      %4447 = sbr.rel (0) target = $region53
    $region52: #{qnetwork_forward.1} parent=1 // pred_region
      %4449 = dma.done [#allocation5], 32
    $region53: #{qnetwork_forward.1} parent=1 // pred_fallthru
      _
    %4450 = vsyncpa [#allocation5], 1

</llo_original>
